<compile_context>
chip_gen: v7x
topology: tpu7x:2x2x1
jax: 0.10.0
libtpu: 0.0.40
codegen_flags: <defaults>
</compile_context>

<pallas_src>
import functools
import math

import jax
import jax.numpy as jnp
from jax.experimental import pallas as pl
from jax.experimental.pallas import tpu as pltpu


def _make_filter_kernel(H, W, K, chans, neg_slope):
    """Builds the fused conv-stack kernel body for static (H, W, K, chans)."""
    P = K // 2
    nl = len(chans) - 1
    HW = H * W

    def conv_stack_kernel(*refs):
        # refs = (x, w0, b0, w1, b1, ..., out)
        x_ref = refs[0]                          # (1, H, W, C0)     bf16
        w_refs = refs[1:1 + 2 * nl:2]            # (K*K*cin, cout)   bf16
        b_refs = refs[2:2 * nl + 1:2]            # (1, cout)         f32
        out_ref = refs[1 + 2 * nl]               # (1, c_last, H*W)  f32

        act = x_ref[0]                           # (H, W, C0) bf16

        for li in range(nl):
            cin, cout = chans[li], chans[li + 1]
            dt = act.dtype

            # Zero padding (stride 1, padding K//2 -> "same" spatial size),
            # built as a value: no halo scratch, no per-step zero-fill stores.
            zx = jnp.zeros((H, P, cin), dt)
            xp = jnp.concatenate([zx, act, zx], axis=1)         # (H, W+2P, cin)
            zy = jnp.zeros((P, W + 2 * P, cin), dt)
            xp = jnp.concatenate([zy, xp, zy], axis=0)          # (H+2P, W+2P, cin)

            # im2col: one concatenated tap tensor -> ONE MXU matmul per layer.
            # Tap order (dy slow, dx fast, cin fastest) matches w_packed below.
            taps = [xp[dy:dy + H, dx:dx + W, :]
                    for dy in range(K) for dx in range(K)]
            cols = jnp.concatenate(taps, axis=-1).reshape(HW, K * K * cin)

            acc = jnp.dot(cols, w_refs[li][...],
                          preferred_element_type=jnp.float32)   # (HW, cout) f32
            y = acc + b_refs[li][...]                           # f32 bias add
            if li + 1 < nl:
                y = jnp.where(y >= 0.0, y, neg_slope * y)       # leaky_relu (f32 VPU)
                act = y.astype(jnp.bfloat16).reshape(H, W, cout)
            else:
                # Lane-dense store: (c_last, H*W) puts a multiple of 128 on the
                # lane axis (unmasked vst); the (HW, c_last)->(c_last, HW)
                # transpose is a tiny XLU op on a (HW, 4) tile.
                out_ref[0] = jnp.clip(jnp.transpose(y), -1.0, 1.0)

    return conv_stack_kernel


def _filter_forward(x, weights, biases, *, kernel_size, neg_slope):
    """Fused forward of the whole conv stack.  x is NCHW (PyTorch layout)."""
    N, C0, H, W = x.shape
    K = kernel_size
    P = K // 2
    nl = len(weights)
    chans = [C0] + [int(w.shape[0]) for w in weights]
    c_last = chans[-1]
    HW = H * W

    # NCHW -> NHWC once (channel contraction sits on the MXU contraction axis
    # inside the kernel); bf16 halves the input DMA bytes.
    x_nhwc = jnp.transpose(x, (0, 2, 3, 1)).astype(jnp.bfloat16)

    # Torch (cout, cin, K, K) -> im2col-packed (K*K*cin, cout) bf16; the tap
    # index (dy, dx) is slowest, cin fastest, matching the kernel's tap concat.
    w_packed = [
        jnp.transpose(w, (2, 3, 1, 0))
        .reshape(K * K * chans[i], chans[i + 1]).astype(jnp.bfloat16)
        for i, w in enumerate(weights)
    ]
    b_packed = [b.astype(jnp.float32).reshape(1, -1) for b in biases]

    kern_fn = _make_filter_kernel(H, W, K, tuple(chans), neg_slope)

    in_specs = [pl.BlockSpec((1, H, W, C0), lambda n: (n, 0, 0, 0))]
    operands = [x_nhwc]
    for i in range(nl):
        # Constant index_map: fetched once, stays resident across grid steps.
        in_specs.append(pl.BlockSpec(w_packed[i].shape, lambda n: (0, 0)))
        in_specs.append(pl.BlockSpec(b_packed[i].shape, lambda n: (0, 0)))
        operands += [w_packed[i], b_packed[i]]

    # Explicit VMEM budget (largest layer's working set + pipelined I/O +
    # resident weights), capped at 64 MiB so the budget holds on v7x.
    work = max(
        ((H + 2 * P) * (W + 2 * P) * chans[i]            # padded activation
         + 2 * HW * K * K * chans[i]                     # taps + im2col copy
         + HW * chans[i + 1]) * 4                        # f32 accumulator
        for i in range(nl))
    io = 2 * (HW * C0 * 2) + 2 * (c_last * HW * 4)
    wgt = 2 * sum(wp.size * 2 + bp.size * 4 for wp, bp in zip(w_packed, b_packed))
    vmem_limit = int(min(64 * 2 ** 20, max(16 * 2 ** 20, 2 * work + io + wgt)))

    out = pl.pallas_call(
        kern_fn,
        grid=(N,),
        in_specs=in_specs,
        out_specs=pl.BlockSpec((1, c_last, HW), lambda n: (n, 0, 0)),
        out_shape=jax.ShapeDtypeStruct((N, c_last, HW), jnp.float32),
        compiler_params=pltpu.CompilerParams(
            dimension_semantics=("parallel",),
            vmem_limit_bytes=vmem_limit),
    )(*operands)

    # Metadata-only reshape back to NCHW (no output transpose needed).
    return out.reshape(N, c_last, H, W)


class Filter:
    """Mirror of the PyTorch Filter module (Conv2d stack + leaky_relu + clamp)."""

    def __init__(self, kernel, nch, key=None, neg_slope=0.01):
        assert len(nch) >= 2, "need at least one conv layer"
        self.kernel = int(kernel)
        # PyTorch Conv2d with padding=K//2 only keeps the spatial size for odd K.
        assert self.kernel % 2 == 1, "only odd kernel sizes are supported"
        self.nch = list(nch)
        self.neg_slope = float(neg_slope)

        key = jax.random.PRNGKey(0) if key is None else key
        self.weights, self.biases = [], []
        for kl in range(len(nch) - 1):
            cin, cout = nch[kl], nch[kl + 1]
            key, wk, bk = jax.random.split(key, 3)
            fan_in = cin * self.kernel * self.kernel
            bound = 1.0 / math.sqrt(fan_in)
            self.weights.append(
                jax.random.uniform(wk, (cout, cin, self.kernel, self.kernel),
                                   jnp.float32, -bound, bound))
            self.biases.append(
                jax.random.uniform(bk, (cout,), jnp.float32, -bound, bound))

        # One jit'd call for the whole forward: no mid-forward host syncs; XLA
        # sees the input transpose + single pallas_call + reshape as one program.
        self._fwd = jax.jit(functools.partial(
            _filter_forward, kernel_size=self.kernel, neg_slope=self.neg_slope))

    def forward(self, x):
        w, b = self.weights, self.biases
        if len(w) == 1:
            # The reference forward() re-applies conv00 when len(nch) == 2
            # (only well-formed when nch[0] == nch[1], exactly as in PyTorch).
            assert self.nch[0] == self.nch[1], "len(nch)==2 requires nch[0]==nch[1]"
            w, b = [w[0], w[0]], [b[0], b[0]]
        return self._fwd(x, w, b)

    __call__ = forward


def _reference_forward(x, weights, biases, kernel_size, neg_slope):
    """Pure-JAX reference (XLA conv, all f32) used only for the correctness check."""
    K = kernel_size
    P = K // 2
    nl = len(weights)
    y = x.astype(jnp.float32)
    for i in range(nl):
        y = jax.lax.conv_general_dilated(
            y, weights[i].astype(jnp.float32),
            window_strides=(1, 1), padding=[(P, P), (P, P)],
            dimension_numbers=("NCHW", "OIHW", "NCHW"),
            precision=jax.lax.Precision.HIGHEST)
        y = y + biases[i].reshape(1, -1, 1, 1)
        if i + 1 < nl:
            y = jnp.where(y >= 0.0, y, neg_slope * y)
        else:
            y = jnp.clip(y, -1.0, 1.0)
    return y


if __name__ == "__main__":
    key = jax.random.PRNGKey(0)
    kx, kp = jax.random.split(key)

    # batch=2, in-channels=4, spatial=16x16, hidden=32, kernel=3.
    x = jax.random.uniform(kx, (2, 4, 16, 16), jnp.float32, -1.0, 1.0)
    model = Filter(kernel=3, nch=[4, 32, 32, 4], key=kp)

    out = model(x)
    jax.block_until_ready(out)

    ref = _reference_forward(x, model.weights, model.biases,
                             model.kernel, model.neg_slope)
    assert out.shape == ref.shape == (2, 4, 16, 16)
    err = float(jnp.max(jnp.abs(out - ref)))
    # bf16 MXU inputs (weights + activations) vs an all-f32 reference.
    assert err < 3e-2, f"mismatch vs reference: {err}"

    print("KERNEL_OK")
</pallas_src>

<mosaic_0001>
module attributes {stable_mosaic.version = 11 : i64} {
  func.func @conv_stack_kernel(%arg0: i32, %arg1: memref<1x16x16x4xbf16, #tpu.memory_space<vmem>>, %arg2: memref<36x32xbf16, #tpu.memory_space<vmem>>, %arg3: memref<1x32xf32, #tpu.memory_space<vmem>>, %arg4: memref<288x32xbf16, #tpu.memory_space<vmem>>, %arg5: memref<1x32xf32, #tpu.memory_space<vmem>>, %arg6: memref<288x4xbf16, #tpu.memory_space<vmem>>, %arg7: memref<1x4xf32, #tpu.memory_space<vmem>>, %arg8: memref<1x4x256xf32, #tpu.memory_space<vmem>>) attributes {dimension_semantics = [#tpu.dimension_semantics<parallel>], iteration_bounds = array<i64: 2>, scalar_prefetch = 0 : i64, scratch_operands = 0 : i64, tpu.core_type = #tpu.core_type<tc>, window_params = [{transform_indices = @transform_0, window_bounds = array<i64: 1, 16, 16, 4>}, {pipeline_mode = #tpu.pipeline_mode<synchronous>, transform_indices = @transform_1, window_bounds = array<i64: 36, 32>}, {pipeline_mode = #tpu.pipeline_mode<synchronous>, transform_indices = @transform_2, window_bounds = array<i64: 1, 32>}, {pipeline_mode = #tpu.pipeline_mode<synchronous>, transform_indices = @transform_3, window_bounds = array<i64: 288, 32>}, {pipeline_mode = #tpu.pipeline_mode<synchronous>, transform_indices = @transform_4, window_bounds = array<i64: 1, 32>}, {pipeline_mode = #tpu.pipeline_mode<synchronous>, transform_indices = @transform_5, window_bounds = array<i64: 288, 4>}, {pipeline_mode = #tpu.pipeline_mode<synchronous>, transform_indices = @transform_6, window_bounds = array<i64: 1, 4>}, {transform_indices = @transform_7, window_bounds = array<i64: 1, 4, 256>}]} {
    %c0 = arith.constant 0 : index
    %c0_0 = arith.constant 0 : index
    %c0_1 = arith.constant 0 : index
    %c0_2 = arith.constant 0 : index
    %0 = vector.load %arg1[%c0, %c0_0, %c0_1, %c0_2] : memref<1x16x16x4xbf16, #tpu.memory_space<vmem>>, vector<1x16x16x4xbf16>
    %1 = vector.shape_cast %0 : vector<1x16x16x4xbf16> to vector<16x16x4xbf16>
    %cst = arith.constant 0.000000e+00 : bf16
    %2 = vector.broadcast %cst : bf16 to vector<16x1x4xbf16>
    %3 = tpu.concatenate %2, %1, %2 in 1 : vector<16x1x4xbf16>, vector<16x16x4xbf16>, vector<16x1x4xbf16> -> vector<16x18x4xbf16>
    %cst_3 = arith.constant 0.000000e+00 : bf16
    %4 = vector.broadcast %cst_3 : bf16 to vector<1x18x4xbf16>
    %5 = tpu.concatenate %4, %3, %4 in 0 : vector<1x18x4xbf16>, vector<16x18x4xbf16>, vector<1x18x4xbf16> -> vector<18x18x4xbf16>
    %6 = vector.extract_strided_slice %5 {offsets = [0, 0, 0], sizes = [16, 16, 4], strides = [1, 1, 1]} : vector<18x18x4xbf16> to vector<16x16x4xbf16>
    %7 = vector.extract_strided_slice %5 {offsets = [0, 1, 0], sizes = [16, 16, 4], strides = [1, 1, 1]} : vector<18x18x4xbf16> to vector<16x16x4xbf16>
    %8 = vector.extract_strided_slice %5 {offsets = [0, 2, 0], sizes = [16, 16, 4], strides = [1, 1, 1]} : vector<18x18x4xbf16> to vector<16x16x4xbf16>
    %9 = vector.extract_strided_slice %5 {offsets = [1, 0, 0], sizes = [16, 16, 4], strides = [1, 1, 1]} : vector<18x18x4xbf16> to vector<16x16x4xbf16>
    %10 = vector.extract_strided_slice %5 {offsets = [1, 1, 0], sizes = [16, 16, 4], strides = [1, 1, 1]} : vector<18x18x4xbf16> to vector<16x16x4xbf16>
    %11 = vector.extract_strided_slice %5 {offsets = [1, 2, 0], sizes = [16, 16, 4], strides = [1, 1, 1]} : vector<18x18x4xbf16> to vector<16x16x4xbf16>
    %12 = vector.extract_strided_slice %5 {offsets = [2, 0, 0], sizes = [16, 16, 4], strides = [1, 1, 1]} : vector<18x18x4xbf16> to vector<16x16x4xbf16>
    %13 = vector.extract_strided_slice %5 {offsets = [2, 1, 0], sizes = [16, 16, 4], strides = [1, 1, 1]} : vector<18x18x4xbf16> to vector<16x16x4xbf16>
    %14 = vector.extract_strided_slice %5 {offsets = [2, 2, 0], sizes = [16, 16, 4], strides = [1, 1, 1]} : vector<18x18x4xbf16> to vector<16x16x4xbf16>
    %15 = tpu.concatenate %6, %7, %8, %9, %10, %11, %12, %13, %14 in 2 : vector<16x16x4xbf16>, vector<16x16x4xbf16>, vector<16x16x4xbf16>, vector<16x16x4xbf16>, vector<16x16x4xbf16>, vector<16x16x4xbf16>, vector<16x16x4xbf16>, vector<16x16x4xbf16>, vector<16x16x4xbf16> -> vector<16x16x36xbf16>
    %16 = vector.shape_cast %15 : vector<16x16x36xbf16> to vector<256x36xbf16>
    %c0_4 = arith.constant 0 : index
    %c0_5 = arith.constant 0 : index
    %17 = vector.load %arg2[%c0_4, %c0_5] : memref<36x32xbf16, #tpu.memory_space<vmem>>, vector<36x32xbf16>
    %cst_6 = arith.constant dense<0.000000e+00> : vector<256x32xf32>
    %18 = tpu.matmul %16, %17, %cst_6 {dimension_numbers = #tpu.dot_dimension_numbers<[1], [0], [0], [1], [0, 0, 1, 1], [], []>} : vector<256x36xbf16>, vector<36x32xbf16>, vector<256x32xf32> -> vector<256x32xf32>
    %c0_7 = arith.constant 0 : index
    %c0_8 = arith.constant 0 : index
    %19 = vector.load %arg3[%c0_7, %c0_8] : memref<1x32xf32, #tpu.memory_space<vmem>>, vector<1x32xf32>
    %20 = vector.broadcast %19 : vector<1x32xf32> to vector<256x32xf32>
    %21 = arith.addf %18, %20 : vector<256x32xf32>
    %cst_9 = arith.constant 0.000000e+00 : f32
    %22 = vector.broadcast %cst_9 : f32 to vector<256x32xf32>
    %23 = arith.cmpf oge, %21, %22 : vector<256x32xf32>
    %cst_10 = arith.constant 0.00999999977 : f32
    %24 = vector.broadcast %cst_10 : f32 to vector<256x32xf32>
    %25 = arith.mulf %24, %21 : vector<256x32xf32>
    %26 = arith.select %23, %21, %25 : vector<256x32xi1>, vector<256x32xf32>
    %27 = arith.truncf %26 : vector<256x32xf32> to vector<256x32xbf16>
    %28 = vector.shape_cast %27 : vector<256x32xbf16> to vector<16x16x32xbf16>
    %cst_11 = arith.constant 0.000000e+00 : bf16
    %29 = vector.broadcast %cst_11 : bf16 to vector<16x1x32xbf16>
    %30 = tpu.concatenate %29, %28, %29 in 1 : vector<16x1x32xbf16>, vector<16x16x32xbf16>, vector<16x1x32xbf16> -> vector<16x18x32xbf16>
    %cst_12 = arith.constant 0.000000e+00 : bf16
    %31 = vector.broadcast %cst_12 : bf16 to vector<1x18x32xbf16>
    %32 = tpu.concatenate %31, %30, %31 in 0 : vector<1x18x32xbf16>, vector<16x18x32xbf16>, vector<1x18x32xbf16> -> vector<18x18x32xbf16>
    %33 = vector.extract_strided_slice %32 {offsets = [0, 0, 0], sizes = [16, 16, 32], strides = [1, 1, 1]} : vector<18x18x32xbf16> to vector<16x16x32xbf16>
    %34 = vector.extract_strided_slice %32 {offsets = [0, 1, 0], sizes = [16, 16, 32], strides = [1, 1, 1]} : vector<18x18x32xbf16> to vector<16x16x32xbf16>
    %35 = vector.extract_strided_slice %32 {offsets = [0, 2, 0], sizes = [16, 16, 32], strides = [1, 1, 1]} : vector<18x18x32xbf16> to vector<16x16x32xbf16>
    %36 = vector.extract_strided_slice %32 {offsets = [1, 0, 0], sizes = [16, 16, 32], strides = [1, 1, 1]} : vector<18x18x32xbf16> to vector<16x16x32xbf16>
    %37 = vector.extract_strided_slice %32 {offsets = [1, 1, 0], sizes = [16, 16, 32], strides = [1, 1, 1]} : vector<18x18x32xbf16> to vector<16x16x32xbf16>
    %38 = vector.extract_strided_slice %32 {offsets = [1, 2, 0], sizes = [16, 16, 32], strides = [1, 1, 1]} : vector<18x18x32xbf16> to vector<16x16x32xbf16>
    %39 = vector.extract_strided_slice %32 {offsets = [2, 0, 0], sizes = [16, 16, 32], strides = [1, 1, 1]} : vector<18x18x32xbf16> to vector<16x16x32xbf16>
    %40 = vector.extract_strided_slice %32 {offsets = [2, 1, 0], sizes = [16, 16, 32], strides = [1, 1, 1]} : vector<18x18x32xbf16> to vector<16x16x32xbf16>
    %41 = vector.extract_strided_slice %32 {offsets = [2, 2, 0], sizes = [16, 16, 32], strides = [1, 1, 1]} : vector<18x18x32xbf16> to vector<16x16x32xbf16>
    %42 = tpu.concatenate %33, %34, %35, %36, %37, %38, %39, %40, %41 in 2 : vector<16x16x32xbf16>, vector<16x16x32xbf16>, vector<16x16x32xbf16>, vector<16x16x32xbf16>, vector<16x16x32xbf16>, vector<16x16x32xbf16>, vector<16x16x32xbf16>, vector<16x16x32xbf16>, vector<16x16x32xbf16> -> vector<16x16x288xbf16>
    %43 = vector.shape_cast %42 : vector<16x16x288xbf16> to vector<256x288xbf16>
    %c0_13 = arith.constant 0 : index
    %c0_14 = arith.constant 0 : index
    %44 = vector.load %arg4[%c0_13, %c0_14] : memref<288x32xbf16, #tpu.memory_space<vmem>>, vector<288x32xbf16>
    %cst_15 = arith.constant dense<0.000000e+00> : vector<256x32xf32>
    %45 = tpu.matmul %43, %44, %cst_15 {dimension_numbers = #tpu.dot_dimension_numbers<[1], [0], [0], [1], [0, 0, 1, 1], [], []>} : vector<256x288xbf16>, vector<288x32xbf16>, vector<256x32xf32> -> vector<256x32xf32>
    %c0_16 = arith.constant 0 : index
    %c0_17 = arith.constant 0 : index
    %46 = vector.load %arg5[%c0_16, %c0_17] : memref<1x32xf32, #tpu.memory_space<vmem>>, vector<1x32xf32>
    %47 = vector.broadcast %46 : vector<1x32xf32> to vector<256x32xf32>
    %48 = arith.addf %45, %47 : vector<256x32xf32>
    %cst_18 = arith.constant 0.000000e+00 : f32
    %49 = vector.broadcast %cst_18 : f32 to vector<256x32xf32>
    %50 = arith.cmpf oge, %48, %49 : vector<256x32xf32>
    %cst_19 = arith.constant 0.00999999977 : f32
    %51 = vector.broadcast %cst_19 : f32 to vector<256x32xf32>
    %52 = arith.mulf %51, %48 : vector<256x32xf32>
    %53 = arith.select %50, %48, %52 : vector<256x32xi1>, vector<256x32xf32>
    %54 = arith.truncf %53 : vector<256x32xf32> to vector<256x32xbf16>
    %55 = vector.shape_cast %54 : vector<256x32xbf16> to vector<16x16x32xbf16>
    %cst_20 = arith.constant 0.000000e+00 : bf16
    %56 = vector.broadcast %cst_20 : bf16 to vector<16x1x32xbf16>
    %57 = tpu.concatenate %56, %55, %56 in 1 : vector<16x1x32xbf16>, vector<16x16x32xbf16>, vector<16x1x32xbf16> -> vector<16x18x32xbf16>
    %cst_21 = arith.constant 0.000000e+00 : bf16
    %58 = vector.broadcast %cst_21 : bf16 to vector<1x18x32xbf16>
    %59 = tpu.concatenate %58, %57, %58 in 0 : vector<1x18x32xbf16>, vector<16x18x32xbf16>, vector<1x18x32xbf16> -> vector<18x18x32xbf16>
    %60 = vector.extract_strided_slice %59 {offsets = [0, 0, 0], sizes = [16, 16, 32], strides = [1, 1, 1]} : vector<18x18x32xbf16> to vector<16x16x32xbf16>
    %61 = vector.extract_strided_slice %59 {offsets = [0, 1, 0], sizes = [16, 16, 32], strides = [1, 1, 1]} : vector<18x18x32xbf16> to vector<16x16x32xbf16>
    %62 = vector.extract_strided_slice %59 {offsets = [0, 2, 0], sizes = [16, 16, 32], strides = [1, 1, 1]} : vector<18x18x32xbf16> to vector<16x16x32xbf16>
    %63 = vector.extract_strided_slice %59 {offsets = [1, 0, 0], sizes = [16, 16, 32], strides = [1, 1, 1]} : vector<18x18x32xbf16> to vector<16x16x32xbf16>
    %64 = vector.extract_strided_slice %59 {offsets = [1, 1, 0], sizes = [16, 16, 32], strides = [1, 1, 1]} : vector<18x18x32xbf16> to vector<16x16x32xbf16>
    %65 = vector.extract_strided_slice %59 {offsets = [1, 2, 0], sizes = [16, 16, 32], strides = [1, 1, 1]} : vector<18x18x32xbf16> to vector<16x16x32xbf16>
    %66 = vector.extract_strided_slice %59 {offsets = [2, 0, 0], sizes = [16, 16, 32], strides = [1, 1, 1]} : vector<18x18x32xbf16> to vector<16x16x32xbf16>
    %67 = vector.extract_strided_slice %59 {offsets = [2, 1, 0], sizes = [16, 16, 32], strides = [1, 1, 1]} : vector<18x18x32xbf16> to vector<16x16x32xbf16>
    %68 = vector.extract_strided_slice %59 {offsets = [2, 2, 0], sizes = [16, 16, 32], strides = [1, 1, 1]} : vector<18x18x32xbf16> to vector<16x16x32xbf16>
    %69 = tpu.concatenate %60, %61, %62, %63, %64, %65, %66, %67, %68 in 2 : vector<16x16x32xbf16>, vector<16x16x32xbf16>, vector<16x16x32xbf16>, vector<16x16x32xbf16>, vector<16x16x32xbf16>, vector<16x16x32xbf16>, vector<16x16x32xbf16>, vector<16x16x32xbf16>, vector<16x16x32xbf16> -> vector<16x16x288xbf16>
    %70 = vector.shape_cast %69 : vector<16x16x288xbf16> to vector<256x288xbf16>
    %c0_22 = arith.constant 0 : index
    %c0_23 = arith.constant 0 : index
    %71 = vector.load %arg6[%c0_22, %c0_23] : memref<288x4xbf16, #tpu.memory_space<vmem>>, vector<288x4xbf16>
    %cst_24 = arith.constant dense<0.000000e+00> : vector<256x4xf32>
    %72 = tpu.matmul %70, %71, %cst_24 {dimension_numbers = #tpu.dot_dimension_numbers<[1], [0], [0], [1], [0, 0, 1, 1], [], []>} : vector<256x288xbf16>, vector<288x4xbf16>, vector<256x4xf32> -> vector<256x4xf32>
    %c0_25 = arith.constant 0 : index
    %c0_26 = arith.constant 0 : index
    %73 = vector.load %arg7[%c0_25, %c0_26] : memref<1x4xf32, #tpu.memory_space<vmem>>, vector<1x4xf32>
    %74 = vector.broadcast %73 : vector<1x4xf32> to vector<256x4xf32>
    %75 = arith.addf %72, %74 : vector<256x4xf32>
    %76 = tpu.transpose %75, [1, 0] : vector<256x4xf32> -> vector<4x256xf32>
    %cst_27 = arith.constant -1.000000e+00 : f32
    %cst_28 = arith.constant 1.000000e+00 : f32
    %77 = vector.broadcast %cst_27 : f32 to vector<4x256xf32>
    %78 = arith.maximumf %77, %76 : vector<4x256xf32>
    %79 = vector.broadcast %cst_28 : f32 to vector<4x256xf32>
    %80 = arith.minimumf %79, %78 : vector<4x256xf32>
    %c0_29 = arith.constant 0 : index
    %c0_30 = arith.constant 0 : index
    %c0_31 = arith.constant 0 : index
    %81 = vector.load %arg8[%c0_29, %c0_30, %c0_31] : memref<1x4x256xf32, #tpu.memory_space<vmem>>, vector<1x4x256xf32>
    %82 = vector.shape_cast %81 : vector<1x4x256xf32> to vector<4x256xf32>
    %83 = vector.shape_cast %80 : vector<4x256xf32> to vector<1x4x256xf32>
    tpu.vector_store %arg8[%c0_29, %c0_30, %c0_31], %83 {strides = array<i32>} : memref<1x4x256xf32, #tpu.memory_space<vmem>>, vector<1x4x256xf32>,
    return
  }
  func.func @transform_0(%arg0: i32) -> (i32, i32, i32, i32) {
    %c0_i32 = arith.constant 0 : i32
    %c0_i32_0 = arith.constant 0 : i32
    %c0_i32_1 = arith.constant 0 : i32
    %c0_i32_2 = arith.constant 0 : i32
    return %arg0, %c0_i32, %c0_i32_0, %c0_i32_1 : i32, i32, i32, i32
  }
  func.func @transform_1(%arg0: i32) -> (i32, i32) {
    %c0_i32 = arith.constant 0 : i32
    %c0_i32_0 = arith.constant 0 : i32
    %c0_i32_1 = arith.constant 0 : i32
    return %c0_i32, %c0_i32_0 : i32, i32
  }
  func.func @transform_2(%arg0: i32) -> (i32, i32) {
    %c0_i32 = arith.constant 0 : i32
    %c0_i32_0 = arith.constant 0 : i32
    %c0_i32_1 = arith.constant 0 : i32
    return %c0_i32, %c0_i32_0 : i32, i32
  }
  func.func @transform_3(%arg0: i32) -> (i32, i32) {
    %c0_i32 = arith.constant 0 : i32
    %c0_i32_0 = arith.constant 0 : i32
    %c0_i32_1 = arith.constant 0 : i32
    return %c0_i32, %c0_i32_0 : i32, i32
  }
  func.func @transform_4(%arg0: i32) -> (i32, i32) {
    %c0_i32 = arith.constant 0 : i32
    %c0_i32_0 = arith.constant 0 : i32
    %c0_i32_1 = arith.constant 0 : i32
    return %c0_i32, %c0_i32_0 : i32, i32
  }
  func.func @transform_5(%arg0: i32) -> (i32, i32) {
    %c0_i32 = arith.constant 0 : i32
    %c0_i32_0 = arith.constant 0 : i32
    %c0_i32_1 = arith.constant 0 : i32
    return %c0_i32, %c0_i32_0 : i32, i32
  }
  func.func @transform_6(%arg0: i32) -> (i32, i32) {
    %c0_i32 = arith.constant 0 : i32
    %c0_i32_0 = arith.constant 0 : i32
    %c0_i32_1 = arith.constant 0 : i32
    return %c0_i32, %c0_i32_0 : i32, i32
  }
  func.func @transform_7(%arg0: i32) -> (i32, i32, i32) {
    %c0_i32 = arith.constant 0 : i32
    %c0_i32_0 = arith.constant 0 : i32
    %c0_i32_1 = arith.constant 0 : i32
    return %arg0, %c0_i32, %c0_i32_0 : i32, i32, i32
  }
}

</mosaic_0001>

<llo_original>
// kernel: _filter_forward.1
$region0: #{_filter_forward.1}
  #allocation0 [shape = 'u32[]', space=smem, size = 0x4, offset = 0x4, fixed_abs, tag = 'smem constant byte address 0x4 - core index']
  #allocation1 [shape = 'u32[144,128]{1,0:T(1,128)}', space=vmem, size = 0x12000, scoped, tag = 'internal scratch']
  %s0 = inlined_call_operand.vmem [shape: bf16[2,16,16,4], index: 0, kind: input, shape index: {}]
  %s1 = inlined_call_operand.vmem [shape: bf16[36,32], index: 1, kind: input, shape index: {}]
  %s2 = inlined_call_operand.vmem [shape: f32[1,32], index: 2, kind: input, shape index: {}]
  %s3 = inlined_call_operand.vmem [shape: bf16[288,32], index: 3, kind: input, shape index: {}]
  %s4 = inlined_call_operand.vmem [shape: f32[1,32], index: 4, kind: input, shape index: {}]
  %s5 = inlined_call_operand.vmem [shape: bf16[288,4], index: 5, kind: input, shape index: {}]
  %s6 = inlined_call_operand.vmem [shape: f32[1,4], index: 6, kind: input, shape index: {}]
  %s7 = inlined_call_operand.vmem [shape: f32[2,4,256], index: 7, kind: output, shape index: {}]
  %s8 = sld [smem:[#allocation0]]
  $region61: #{_filter_forward.1} parent=0
    _
  %s10 = ssub.s32 1, %s8
  %s11 = scalar_select 0, %s10, %s8
  loop: start=0, step=1, limit=4
  $region2: #{_filter_forward.1} parent=0 // loop_pre_header
    _
  $region3: #{_filter_forward.1} parent=0 // loop_header
    %s13 = sphi 0, %s17
    %p14 = scmp.ge.s32.totalorder %s13, 4
    %s23 = sphi 0, %s25
    %s26 = sphi 0, %s23
    %s27 = sphi 0, %s26
    %s43 = sphi 0, %s27
    %s47 = sphi 0, %s47
    %s49 = sphi 0, %s47
    %s50 = sphi 0, %s49
    %s64 = sphi 0, %s50
    %s68 = sphi 0, %s68
    %s70 = sphi 0, %s68
    %s71 = sphi 0, %s70
    %s85 = sphi 0, %s71
    %s89 = sphi 0, %s89
    %s91 = sphi 0, %s89
    %s92 = sphi 0, %s91
    %s106 = sphi 0, %s92
    %s110 = sphi 0, %s110
    %s112 = sphi 0, %s110
    %s113 = sphi 0, %s112
    %s127 = sphi 0, %s113
    %s131 = sphi 0, %s131
    %s133 = sphi 0, %s131
    %s134 = sphi 0, %s133
    %s148 = sphi 0, %s134
    %s152 = sphi 0, %s152
    %s154 = sphi 0, %s152
    %s155 = sphi 0, %s154
    %s169 = sphi 0, %s155
    %s175 = sphi 0, %s177
    %s178 = sphi 0, %s175
    %s179 = sphi 0, %s178
    %s195 = sphi 0, %s179
  $region4: #{_filter_forward.1} parent=0 // loop_header_branch
    %16 = sbr.rel (%p14) target = $region8
  $region5: #{_filter_forward.1} parent=0 // loop_body
    %s18 = ssub.s32 %s13, 1
    %s19 = ssub.s32 %s13, 2
    %s20 = sadd.s32 %s13, 1
    %s21 = ssub.s32 %s13, %s20
    %p22 = scmp.eq.s32.totalorder %s21, 0
    %s24 = sadd.s32 %s23, 1
    %s25 = scalar_select %p22, %s23, %s24
    %p28 = pneg %p22
    %p29 = scmp.eq.s32.totalorder %s13, 1
    %p30 = por %p28, %p29
    %p31 = scmp.ne.s32.totalorder %s23, %s26
    %p32 = scmp.eq.s32.totalorder %s13, 0
    %p33 = por %p31, %p32
    %p34 = scmp.ne.s32.totalorder %s23, %s26
    %p35 = scmp.eq.s32.totalorder %s18, 1
    %p36 = por %p34, %p35
    %p37 = scmp.ne.s32.totalorder %s26, %s27
    %p38 = scmp.eq.s32.totalorder %s18, 0
    %p39 = por %p37, %p38
    %p40 = scmp.ne.s32.totalorder %s26, %s27
    %p41 = scmp.eq.s32.totalorder %s19, 1
    %p42 = por %p40, %p41
    %p44 = scmp.ne.s32.totalorder %s27, %s43
    %p45 = scmp.eq.s32.totalorder %s19, 0
    %p46 = por %p44, %p45
    %s48 = sadd.s32 %s47, 1
    %p51 = scmp.eq.s32.totalorder %s13, 1
    %p52 = scmp.ne.s32.totalorder %s47, %s49
    %p53 = scmp.eq.s32.totalorder %s13, 0
    %p54 = por %p52, %p53
    %p55 = scmp.ne.s32.totalorder %s47, %s49
    %p56 = scmp.eq.s32.totalorder %s18, 1
    %p57 = por %p55, %p56
    %p58 = scmp.ne.s32.totalorder %s49, %s50
    %p59 = scmp.eq.s32.totalorder %s18, 0
    %p60 = por %p58, %p59
    %p61 = scmp.ne.s32.totalorder %s49, %s50
    %p62 = scmp.eq.s32.totalorder %s19, 1
    %p63 = por %p61, %p62
    %p65 = scmp.ne.s32.totalorder %s50, %s64
    %p66 = scmp.eq.s32.totalorder %s19, 0
    %p67 = por %p65, %p66
    %s69 = sadd.s32 %s68, 1
    %p72 = scmp.eq.s32.totalorder %s13, 1
    %p73 = scmp.ne.s32.totalorder %s68, %s70
    %p74 = scmp.eq.s32.totalorder %s13, 0
    %p75 = por %p73, %p74
    %p76 = scmp.ne.s32.totalorder %s68, %s70
    %p77 = scmp.eq.s32.totalorder %s18, 1
    %p78 = por %p76, %p77
    %p79 = scmp.ne.s32.totalorder %s70, %s71
    %p80 = scmp.eq.s32.totalorder %s18, 0
    %p81 = por %p79, %p80
    %p82 = scmp.ne.s32.totalorder %s70, %s71
    %p83 = scmp.eq.s32.totalorder %s19, 1
    %p84 = por %p82, %p83
    %p86 = scmp.ne.s32.totalorder %s71, %s85
    %p87 = scmp.eq.s32.totalorder %s19, 0
    %p88 = por %p86, %p87
    %s90 = sadd.s32 %s89, 1
    %p93 = scmp.eq.s32.totalorder %s13, 1
    %p94 = scmp.ne.s32.totalorder %s89, %s91
    %p95 = scmp.eq.s32.totalorder %s13, 0
    %p96 = por %p94, %p95
    %p97 = scmp.ne.s32.totalorder %s89, %s91
    %p98 = scmp.eq.s32.totalorder %s18, 1
    %p99 = por %p97, %p98
    %p100 = scmp.ne.s32.totalorder %s91, %s92
    %p101 = scmp.eq.s32.totalorder %s18, 0
    %p102 = por %p100, %p101
    %p103 = scmp.ne.s32.totalorder %s91, %s92
    %p104 = scmp.eq.s32.totalorder %s19, 1
    %p105 = por %p103, %p104
    %p107 = scmp.ne.s32.totalorder %s92, %s106
    %p108 = scmp.eq.s32.totalorder %s19, 0
    %p109 = por %p107, %p108
    %s111 = sadd.s32 %s110, 1
    %p114 = scmp.eq.s32.totalorder %s13, 1
    %p115 = scmp.ne.s32.totalorder %s110, %s112
    %p116 = scmp.eq.s32.totalorder %s13, 0
    %p117 = por %p115, %p116
    %p118 = scmp.ne.s32.totalorder %s110, %s112
    %p119 = scmp.eq.s32.totalorder %s18, 1
    %p120 = por %p118, %p119
    %p121 = scmp.ne.s32.totalorder %s112, %s113
    %p122 = scmp.eq.s32.totalorder %s18, 0
    %p123 = por %p121, %p122
    %p124 = scmp.ne.s32.totalorder %s112, %s113
    %p125 = scmp.eq.s32.totalorder %s19, 1
    %p126 = por %p124, %p125
    %p128 = scmp.ne.s32.totalorder %s113, %s127
    %p129 = scmp.eq.s32.totalorder %s19, 0
    %p130 = por %p128, %p129
    %s132 = sadd.s32 %s131, 1
    %p135 = scmp.eq.s32.totalorder %s13, 1
    %p136 = scmp.ne.s32.totalorder %s131, %s133
    %p137 = scmp.eq.s32.totalorder %s13, 0
    %p138 = por %p136, %p137
    %p139 = scmp.ne.s32.totalorder %s131, %s133
    %p140 = scmp.eq.s32.totalorder %s18, 1
    %p141 = por %p139, %p140
    %p142 = scmp.ne.s32.totalorder %s133, %s134
    %p143 = scmp.eq.s32.totalorder %s18, 0
    %p144 = por %p142, %p143
    %p145 = scmp.ne.s32.totalorder %s133, %s134
    %p146 = scmp.eq.s32.totalorder %s19, 1
    %p147 = por %p145, %p146
    %p149 = scmp.ne.s32.totalorder %s134, %s148
    %p150 = scmp.eq.s32.totalorder %s19, 0
    %p151 = por %p149, %p150
    %s153 = sadd.s32 %s152, 1
    %p156 = scmp.eq.s32.totalorder %s13, 1
    %p157 = scmp.ne.s32.totalorder %s152, %s154
    %p158 = scmp.eq.s32.totalorder %s13, 0
    %p159 = por %p157, %p158
    %p160 = scmp.ne.s32.totalorder %s152, %s154
    %p161 = scmp.eq.s32.totalorder %s18, 1
    %p162 = por %p160, %p161
    %p163 = scmp.ne.s32.totalorder %s154, %s155
    %p164 = scmp.eq.s32.totalorder %s18, 0
    %p165 = por %p163, %p164
    %p166 = scmp.ne.s32.totalorder %s154, %s155
    %p167 = scmp.eq.s32.totalorder %s19, 1
    %p168 = por %p166, %p167
    %p170 = scmp.ne.s32.totalorder %s155, %s169
    %p171 = scmp.eq.s32.totalorder %s19, 0
    %p172 = por %p170, %p171
    %s173 = ssub.s32 %s13, %s20
    %p174 = scmp.eq.s32.totalorder %s173, 0
    %s176 = sadd.s32 %s175, 1
    %s177 = scalar_select %p174, %s175, %s176
    %p180 = pneg %p174
    %p181 = scmp.eq.s32.totalorder %s13, 1
    %p182 = por %p180, %p181
    %p183 = scmp.ne.s32.totalorder %s175, %s178
    %p184 = scmp.eq.s32.totalorder %s13, 0
    %p185 = por %p183, %p184
    %p186 = scmp.ne.s32.totalorder %s175, %s178
    %p187 = scmp.eq.s32.totalorder %s18, 1
    %p188 = por %p186, %p187
    %p189 = scmp.ne.s32.totalorder %s178, %s179
    %p190 = scmp.eq.s32.totalorder %s18, 0
    %p191 = por %p189, %p190
    %p192 = scmp.ne.s32.totalorder %s178, %s179
    %p193 = scmp.eq.s32.totalorder %s19, 1
    %p194 = por %p192, %p193
    %p196 = scmp.ne.s32.totalorder %s179, %s195
    %p197 = scmp.eq.s32.totalorder %s19, 0
    %p198 = por %p196, %p197
    %p199 = scmp.le.s32.totalorder 1, %s13
    %p200 = scmp.lt.s32.totalorder %s13, 3
    %p201 = pnand %p199, %p200
    %p202 = pneg %p201
    // Predicated region
    $region9: #{_filter_forward.1} parent=5 // pred_check
      _
    $region10: #{_filter_forward.1} parent=5 // pred_check_branch
      %204 = sbr.rel (%p201) target = $region12
    $region11: #{_filter_forward.1} parent=5 // pred_region
      %s205 = ssub.s32 %s13, 1
      // Predicated region
      $region13: #{_filter_forward.1} parent=11 // pred_check
        %p206 = pneg %p60
      $region14: #{_filter_forward.1} parent=11 // pred_check_branch
        %208 = sbr.rel (%p206) target = $region16
      $region15: #{_filter_forward.1} parent=11 // pred_region
        _
      $region16: #{_filter_forward.1} parent=11 // pred_fallthru
        _
      // Predicated region
      $region17: #{_filter_forward.1} parent=11 // pred_check
        %p209 = pneg %p81
      $region18: #{_filter_forward.1} parent=11 // pred_check_branch
        %211 = sbr.rel (%p209) target = $region20
      $region19: #{_filter_forward.1} parent=11 // pred_region
        _
      $region20: #{_filter_forward.1} parent=11 // pred_fallthru
        _
      // Predicated region
      $region21: #{_filter_forward.1} parent=11 // pred_check
        %p212 = pneg %p102
      $region22: #{_filter_forward.1} parent=11 // pred_check_branch
        %214 = sbr.rel (%p212) target = $region24
      $region23: #{_filter_forward.1} parent=11 // pred_region
        _
      $region24: #{_filter_forward.1} parent=11 // pred_fallthru
        _
      // Predicated region
      $region25: #{_filter_forward.1} parent=11 // pred_check
        %p215 = pneg %p123
      $region26: #{_filter_forward.1} parent=11 // pred_check_branch
        %217 = sbr.rel (%p215) target = $region28
      $region27: #{_filter_forward.1} parent=11 // pred_region
        _
      $region28: #{_filter_forward.1} parent=11 // pred_fallthru
        _
      // Predicated region
      $region29: #{_filter_forward.1} parent=11 // pred_check
        %p218 = pneg %p144
      $region30: #{_filter_forward.1} parent=11 // pred_check_branch
        %220 = sbr.rel (%p218) target = $region32
      $region31: #{_filter_forward.1} parent=11 // pred_region
        _
      $region32: #{_filter_forward.1} parent=11 // pred_fallthru
        _
      // Predicated region
      $region33: #{_filter_forward.1} parent=11 // pred_check
        %p221 = pneg %p165
      $region34: #{_filter_forward.1} parent=11 // pred_check_branch
        %223 = sbr.rel (%p221) target = $region36
      $region35: #{_filter_forward.1} parent=11 // pred_region
        _
      $region36: #{_filter_forward.1} parent=11 // pred_fallthru
        _
    $region12: #{_filter_forward.1} parent=5 // pred_fallthru
      _
    %p224 = scmp.lt.s32.totalorder %s13, 2
    // Predicated region
    $region37: #{_filter_forward.1} parent=5 // pred_check
      %p225 = pneg %p224
    $region38: #{_filter_forward.1} parent=5 // pred_check_branch
      %227 = sbr.rel (%p225) target = $region40
    $region39: #{_filter_forward.1} parent=5 // pred_region
      // Predicated region
      $region41: #{_filter_forward.1} parent=39 // pred_check
        %p228 = pneg %p33
      $region42: #{_filter_forward.1} parent=39 // pred_check_branch
        %230 = sbr.rel (%p228) target = $region44
      $region43: #{_filter_forward.1} parent=39 // pred_region
        %p231 = scmp.lt.s32.totalorder %s13, 1
        %s232 = scalar_select %p231, %s13, 1
        %s233 = smul.addr %s232, 32
        %s234 = smul.addr %s233, 4
        %s235 = scalar_lea.vmem %s0, %s234
      $region44: #{_filter_forward.1} parent=39 // pred_fallthru
        _
    $region40: #{_filter_forward.1} parent=5 // pred_fallthru
      _
    %p236 = scmp.le.s32.totalorder 1, %s13
    %p237 = scmp.lt.s32.totalorder %s13, 3
    %p238 = pnand %p236, %p237
    %p239 = pneg %p238
    // Predicated region
    $region45: #{_filter_forward.1} parent=5 // pred_check
      _
    $region46: #{_filter_forward.1} parent=5 // pred_check_branch
      %241 = sbr.rel (%p238) target = $region48
    $region47: #{_filter_forward.1} parent=5 // pred_region
      %s242 = ssub.s32 %s13, 1
      %p243 = scmp.lt.s32.totalorder %s18, 1
      %s244 = scalar_select %p243, %s18, 1
      %s245 = smul.addr %s244, 32
      %s246 = smul.addr %s245, 4
      %s247 = scalar_lea.vmem %s0, %s246
      %p248 = pneg %p39
      %p249 = pneg %p36
      %p250 = pneg %p60
      %p251 = pneg %p57
      %p252 = pneg %p81
      %p253 = pneg %p78
      %p254 = pneg %p102
      %p255 = pneg %p99
      %p256 = pneg %p123
      %p257 = pneg %p120
      %p258 = pneg %p144
      %p259 = pneg %p141
      %p260 = pneg %p165
      %p261 = pneg %p162
      %p262 = pneg %p191
      %p263 = pneg %p188
      %p264 = scmp.lt.s32.totalorder %s18, 1
      %s265 = scalar_select %p264, %s18, 1
      %s266 = smul.addr %s265, 2
      %s267 = smul.addr %s266, 4
      %s268 = scalar_lea.vmem %s7, %s267
      %p269 = scmp.lt.s32.totalorder %s18, 1
      %s270 = scalar_select %p269, %s18, 1
      %s271 = smul.addr %s270, 32
      %s272 = smul.addr %s271, 4
      %s273 = scalar_lea.vmem %s0, %s272
      %p274 = scmp.lt.s32.totalorder %s18, 1
      %s275 = scalar_select %p274, %s18, 1
      %s276 = smul.addr %s275, 2
      %s277 = smul.addr %s276, 4
      %s278 = scalar_lea.vmem %s7, %s277
      %v280 = vld [vmem:[%s273] sm:$0xf]
      %v281 = vld [vmem:[%s273 + $0x4] sm:$0xf]
      %v282 = vld [vmem:[%s273 + $0x8] sm:$0xf]
      %v283 = vld [vmem:[%s273 + $0xc] sm:$0xf]
      %v284 = vld [vmem:[%s273 + $0x10] sm:$0xf]
      %v285 = vld [vmem:[%s273 + $0x14] sm:$0xf]
      %v286 = vld [vmem:[%s273 + $0x18] sm:$0xf]
      %v287 = vld [vmem:[%s273 + $0x1c] sm:$0xf]
      %v288 = vld [vmem:[%s273 + $0x20] sm:$0xf]
      %v289 = vld [vmem:[%s273 + $0x24] sm:$0xf]
      %v290 = vld [vmem:[%s273 + $0x28] sm:$0xf]
      %v291 = vld [vmem:[%s273 + $0x2c] sm:$0xf]
      %v292 = vld [vmem:[%s273 + $0x30] sm:$0xf]
      %v293 = vld [vmem:[%s273 + $0x34] sm:$0xf]
      %v294 = vld [vmem:[%s273 + $0x38] sm:$0xf]
      %v295 = vld [vmem:[%s273 + $0x3c] sm:$0xf]
      %v296 = vld [vmem:[%s273 + $0x40] sm:$0xf]
      %v297 = vld [vmem:[%s273 + $0x44] sm:$0xf]
      %v298 = vld [vmem:[%s273 + $0x48] sm:$0xf]
      %v299 = vld [vmem:[%s273 + $0x4c] sm:$0xf]
      %v300 = vld [vmem:[%s273 + $0x50] sm:$0xf]
      %v301 = vld [vmem:[%s273 + $0x54] sm:$0xf]
      %v302 = vld [vmem:[%s273 + $0x58] sm:$0xf]
      %v303 = vld [vmem:[%s273 + $0x5c] sm:$0xf]
      %v304 = vld [vmem:[%s273 + $0x60] sm:$0xf]
      %v305 = vld [vmem:[%s273 + $0x64] sm:$0xf]
      %v306 = vld [vmem:[%s273 + $0x68] sm:$0xf]
      %v307 = vld [vmem:[%s273 + $0x6c] sm:$0xf]
      %v308 = vld [vmem:[%s273 + $0x70] sm:$0xf]
      %v309 = vld [vmem:[%s273 + $0x74] sm:$0xf]
      %v310 = vld [vmem:[%s273 + $0x78] sm:$0xf]
      %v311 = vld [vmem:[%s273 + $0x7c] sm:$0xf]
      %v344 = vunpack.c.l.b16 %v280
      %v345 = vunpack.c.l.b16 %v281
      %v346 = vunpack.c.l.b16 %v282
      %v347 = vunpack.c.l.b16 %v283
      %v348 = vunpack.c.l.b16 %v284
      %v349 = vunpack.c.l.b16 %v285
      %v350 = vunpack.c.l.b16 %v286
      %v351 = vunpack.c.l.b16 %v287
      %v352 = vunpack.c.l.b16 %v288
      %v353 = vunpack.c.l.b16 %v289
      %v354 = vunpack.c.l.b16 %v290
      %v355 = vunpack.c.l.b16 %v291
      %v356 = vunpack.c.l.b16 %v292
      %v357 = vunpack.c.l.b16 %v293
      %v358 = vunpack.c.l.b16 %v294
      %v359 = vunpack.c.l.b16 %v295
      %v360 = vunpack.c.l.b16 %v296
      %v361 = vunpack.c.l.b16 %v297
      %v362 = vunpack.c.l.b16 %v298
      %v363 = vunpack.c.l.b16 %v299
      %v364 = vunpack.c.l.b16 %v300
      %v365 = vunpack.c.l.b16 %v301
      %v366 = vunpack.c.l.b16 %v302
      %v367 = vunpack.c.l.b16 %v303
      %v368 = vunpack.c.l.b16 %v304
      %v369 = vunpack.c.l.b16 %v305
      %v370 = vunpack.c.l.b16 %v306
      %v371 = vunpack.c.l.b16 %v307
      %v372 = vunpack.c.l.b16 %v308
      %v373 = vunpack.c.l.b16 %v309
      %v374 = vunpack.c.l.b16 %v310
      %v375 = vunpack.c.l.b16 %v311
      %v376 = vpack.c.b16 %v345, %v344
      %v377 = vpack.c.b16 %v347, %v346
      %v378 = vpack.c.b16 %v349, %v348
      %v379 = vpack.c.b16 %v351, %v350
      %v380 = vpack.c.b16 %v353, %v352
      %v381 = vpack.c.b16 %v355, %v354
      %v382 = vpack.c.b16 %v357, %v356
      %v383 = vpack.c.b16 %v359, %v358
      %v384 = vpack.c.b16 %v361, %v360
      %v385 = vpack.c.b16 %v363, %v362
      %v386 = vpack.c.b16 %v365, %v364
      %v387 = vpack.c.b16 %v367, %v366
      %v388 = vpack.c.b16 %v369, %v368
      %v389 = vpack.c.b16 %v371, %v370
      %v390 = vpack.c.b16 %v373, %v372
      %v391 = vpack.c.b16 %v375, %v374
      %v393 = vshrl.u32 %v376, 16
      %v395 = vrot.slane %v393, 7
      %v396 = vshll.u32 %v376, 16
      %v398 = vor.u32 %v395, %v396
      %v400 = vshrl.u32 %v377, 16
      %v402 = vrot.slane %v400, 7
      %v403 = vshll.u32 %v377, 16
      %v405 = vor.u32 %v402, %v403
      %v407 = vshrl.u32 %v378, 16
      %v409 = vrot.slane %v407, 7
      %v410 = vshll.u32 %v378, 16
      %v412 = vor.u32 %v409, %v410
      %v414 = vshrl.u32 %v379, 16
      %v416 = vrot.slane %v414, 7
      %v417 = vshll.u32 %v379, 16
      %v419 = vor.u32 %v416, %v417
      %v421 = vshrl.u32 %v380, 16
      %v423 = vrot.slane %v421, 7
      %v424 = vshll.u32 %v380, 16
      %v426 = vor.u32 %v423, %v424
      %v428 = vshrl.u32 %v381, 16
      %v430 = vrot.slane %v428, 7
      %v431 = vshll.u32 %v381, 16
      %v433 = vor.u32 %v430, %v431
      %v435 = vshrl.u32 %v382, 16
      %v437 = vrot.slane %v435, 7
      %v438 = vshll.u32 %v382, 16
      %v440 = vor.u32 %v437, %v438
      %v442 = vshrl.u32 %v383, 16
      %v444 = vrot.slane %v442, 7
      %v445 = vshll.u32 %v383, 16
      %v447 = vor.u32 %v444, %v445
      %v449 = vshrl.u32 %v384, 16
      %v451 = vrot.slane %v449, 7
      %v452 = vshll.u32 %v384, 16
      %v454 = vor.u32 %v451, %v452
      %v456 = vshrl.u32 %v385, 16
      %v458 = vrot.slane %v456, 7
      %v459 = vshll.u32 %v385, 16
      %v461 = vor.u32 %v458, %v459
      %v463 = vshrl.u32 %v386, 16
      %v465 = vrot.slane %v463, 7
      %v466 = vshll.u32 %v386, 16
      %v468 = vor.u32 %v465, %v466
      %v470 = vshrl.u32 %v387, 16
      %v472 = vrot.slane %v470, 7
      %v473 = vshll.u32 %v387, 16
      %v475 = vor.u32 %v472, %v473
      %v477 = vshrl.u32 %v388, 16
      %v479 = vrot.slane %v477, 7
      %v480 = vshll.u32 %v388, 16
      %v482 = vor.u32 %v479, %v480
      %v484 = vshrl.u32 %v389, 16
      %v486 = vrot.slane %v484, 7
      %v487 = vshll.u32 %v389, 16
      %v489 = vor.u32 %v486, %v487
      %v491 = vshrl.u32 %v390, 16
      %v493 = vrot.slane %v491, 7
      %v494 = vshll.u32 %v390, 16
      %v496 = vor.u32 %v493, %v494
      %v498 = vshrl.u32 %v391, 16
      %v500 = vrot.slane %v498, 7
      %v501 = vshll.u32 %v391, 16
      %v503 = vor.u32 %v500, %v501
      %vm536 = vcmask 1040384
      %vm537 = vsmask.f32 256
      %vm538 = vmand %vm536, %vm537
      %v539 = vsel %vm538, 0, %v398
      %v540 = vsel %vm538, 0, %v405
      %v541 = vsel %vm538, 0, %v412
      %v542 = vsel %vm538, 0, %v419
      %v543 = vsel %vm538, 0, %v426
      %v544 = vsel %vm538, 0, %v433
      %v545 = vsel %vm538, 0, %v440
      %v546 = vsel %vm538, 0, %v447
      %v547 = vsel %vm538, 0, %v454
      %v548 = vsel %vm538, 0, %v461
      %v549 = vsel %vm538, 0, %v468
      %v550 = vsel %vm538, 0, %v475
      %v551 = vsel %vm538, 0, %v482
      %v552 = vsel %vm538, 0, %v489
      %v553 = vsel %vm538, 0, %v496
      %v554 = vsel %vm538, 0, %v503
      %v555 = vsel %vm538, %v395, 0
      %v556 = vsel %vm538, %v402, 0
      %v557 = vsel %vm538, %v409, 0
      %v558 = vsel %vm538, %v416, 0
      %v559 = vsel %vm538, %v423, 0
      %v560 = vsel %vm538, %v430, 0
      %v561 = vsel %vm538, %v437, 0
      %v562 = vsel %vm538, %v444, 0
      %v563 = vsel %vm538, %v451, 0
      %v564 = vsel %vm538, %v458, 0
      %v565 = vsel %vm538, %v465, 0
      %v566 = vsel %vm538, %v472, 0
      %v567 = vsel %vm538, %v479, 0
      %v568 = vsel %vm538, %v486, 0
      %v569 = vsel %vm538, %v493, 0
      %v570 = vsel %vm538, %v500, 0
      %vm571 = vsmask.f32 7424
      %v573 = vshrl.u32 0, 16
      %v575 = vshll.u32 0, 16
      %v577 = vrot.slane %v575, 1
      %v578 = vor.u32 %v573, %v577
      %v579 = vsel %vm571, %v578, %v577
      %v581 = vshrl.u32 %v539, 16
      %v583 = vshll.u32 %v539, 16
      %v585 = vrot.slane %v583, 1
      %v586 = vor.u32 %v581, %v585
      %v588 = vshll.u32 %v555, 16
      %v590 = vrot.slane %v588, 1
      %v591 = vsel %vm571, %v586, %v590
      %v593 = vshrl.u32 %v540, 16
      %v595 = vshll.u32 %v540, 16
      %v597 = vrot.slane %v595, 1
      %v598 = vor.u32 %v593, %v597
      %v600 = vshll.u32 %v556, 16
      %v602 = vrot.slane %v600, 1
      %v603 = vsel %vm571, %v598, %v602
      %v605 = vshrl.u32 %v541, 16
      %v607 = vshll.u32 %v541, 16
      %v609 = vrot.slane %v607, 1
      %v610 = vor.u32 %v605, %v609
      %v612 = vshll.u32 %v557, 16
      %v614 = vrot.slane %v612, 1
      %v615 = vsel %vm571, %v610, %v614
      %v617 = vshrl.u32 %v542, 16
      %v619 = vshll.u32 %v542, 16
      %v621 = vrot.slane %v619, 1
      %v622 = vor.u32 %v617, %v621
      %v624 = vshll.u32 %v558, 16
      %v626 = vrot.slane %v624, 1
      %v627 = vsel %vm571, %v622, %v626
      %v629 = vshrl.u32 %v543, 16
      %v631 = vshll.u32 %v543, 16
      %v633 = vrot.slane %v631, 1
      %v634 = vor.u32 %v629, %v633
      %v636 = vshll.u32 %v559, 16
      %v638 = vrot.slane %v636, 1
      %v639 = vsel %vm571, %v634, %v638
      %v641 = vshrl.u32 %v544, 16
      %v643 = vshll.u32 %v544, 16
      %v645 = vrot.slane %v643, 1
      %v646 = vor.u32 %v641, %v645
      %v648 = vshll.u32 %v560, 16
      %v650 = vrot.slane %v648, 1
      %v651 = vsel %vm571, %v646, %v650
      %v653 = vshrl.u32 %v545, 16
      %v655 = vshll.u32 %v545, 16
      %v657 = vrot.slane %v655, 1
      %v658 = vor.u32 %v653, %v657
      %v660 = vshll.u32 %v561, 16
      %v662 = vrot.slane %v660, 1
      %v663 = vsel %vm571, %v658, %v662
      %v665 = vshrl.u32 %v546, 16
      %v667 = vshll.u32 %v546, 16
      %v669 = vrot.slane %v667, 1
      %v670 = vor.u32 %v665, %v669
      %v672 = vshll.u32 %v562, 16
      %v674 = vrot.slane %v672, 1
      %v675 = vsel %vm571, %v670, %v674
      %v677 = vshrl.u32 %v547, 16
      %v679 = vshll.u32 %v547, 16
      %v681 = vrot.slane %v679, 1
      %v682 = vor.u32 %v677, %v681
      %v684 = vshll.u32 %v563, 16
      %v686 = vrot.slane %v684, 1
      %v687 = vsel %vm571, %v682, %v686
      %v689 = vshrl.u32 %v548, 16
      %v691 = vshll.u32 %v548, 16
      %v693 = vrot.slane %v691, 1
      %v694 = vor.u32 %v689, %v693
      %v696 = vshll.u32 %v564, 16
      %v698 = vrot.slane %v696, 1
      %v699 = vsel %vm571, %v694, %v698
      %v701 = vshrl.u32 %v549, 16
      %v703 = vshll.u32 %v549, 16
      %v705 = vrot.slane %v703, 1
      %v706 = vor.u32 %v701, %v705
      %v708 = vshll.u32 %v565, 16
      %v710 = vrot.slane %v708, 1
      %v711 = vsel %vm571, %v706, %v710
      %v713 = vshrl.u32 %v550, 16
      %v715 = vshll.u32 %v550, 16
      %v717 = vrot.slane %v715, 1
      %v718 = vor.u32 %v713, %v717
      %v720 = vshll.u32 %v566, 16
      %v722 = vrot.slane %v720, 1
      %v723 = vsel %vm571, %v718, %v722
      %v725 = vshrl.u32 %v551, 16
      %v727 = vshll.u32 %v551, 16
      %v729 = vrot.slane %v727, 1
      %v730 = vor.u32 %v725, %v729
      %v732 = vshll.u32 %v567, 16
      %v734 = vrot.slane %v732, 1
      %v735 = vsel %vm571, %v730, %v734
      %v737 = vshrl.u32 %v552, 16
      %v739 = vshll.u32 %v552, 16
      %v741 = vrot.slane %v739, 1
      %v742 = vor.u32 %v737, %v741
      %v744 = vshll.u32 %v568, 16
      %v746 = vrot.slane %v744, 1
      %v747 = vsel %vm571, %v742, %v746
      %v749 = vshrl.u32 %v553, 16
      %v751 = vshll.u32 %v553, 16
      %v753 = vrot.slane %v751, 1
      %v754 = vor.u32 %v749, %v753
      %v756 = vshll.u32 %v569, 16
      %v758 = vrot.slane %v756, 1
      %v759 = vsel %vm571, %v754, %v758
      %760 = vrot.lane.b32.xlu0 %v579, 4
      %v761 = vpop.permute.xlu0 %760
      %762 = vrot.lane.b32.xlu0 %v591, 4
      %v763 = vpop.permute.xlu0 %762
      %764 = vrot.lane.b32.xlu0 %v603, 4
      %v765 = vpop.permute.xlu0 %764
      %766 = vrot.lane.b32.xlu0 %v615, 4
      %v767 = vpop.permute.xlu0 %766
      %768 = vrot.lane.b32.xlu0 %v627, 4
      %v769 = vpop.permute.xlu0 %768
      %770 = vrot.lane.b32.xlu0 %v639, 4
      %v771 = vpop.permute.xlu0 %770
      %772 = vrot.lane.b32.xlu0 %v651, 4
      %v773 = vpop.permute.xlu0 %772
      %774 = vrot.lane.b32.xlu0 %v663, 4
      %v775 = vpop.permute.xlu0 %774
      %776 = vrot.lane.b32.xlu0 %v675, 4
      %v777 = vpop.permute.xlu0 %776
      %778 = vrot.lane.b32.xlu0 %v687, 4
      %v779 = vpop.permute.xlu0 %778
      %780 = vrot.lane.b32.xlu0 %v699, 4
      %v781 = vpop.permute.xlu0 %780
      %782 = vrot.lane.b32.xlu0 %v711, 4
      %v783 = vpop.permute.xlu0 %782
      %784 = vrot.lane.b32.xlu0 %v723, 4
      %v785 = vpop.permute.xlu0 %784
      %786 = vrot.lane.b32.xlu0 %v735, 4
      %v787 = vpop.permute.xlu0 %786
      %788 = vrot.lane.b32.xlu0 %v747, 4
      %v789 = vpop.permute.xlu0 %788
      %790 = vrot.lane.b32.xlu0 %v759, 4
      %v791 = vpop.permute.xlu0 %790
      %vm823 = vcmask 1046528
      %v824 = vrot.slane 0, 1
      %v825 = vsel %vm823, %v824, %v824
      %v826 = vrot.slane %v539, 1
      %v827 = vrot.slane %v555, 1
      %v828 = vsel %vm823, %v826, %v827
      %v829 = vrot.slane %v540, 1
      %v830 = vrot.slane %v556, 1
      %v831 = vsel %vm823, %v829, %v830
      %v832 = vrot.slane %v541, 1
      %v833 = vrot.slane %v557, 1
      %v834 = vsel %vm823, %v832, %v833
      %v835 = vrot.slane %v542, 1
      %v836 = vrot.slane %v558, 1
      %v837 = vsel %vm823, %v835, %v836
      %v838 = vrot.slane %v543, 1
      %v839 = vrot.slane %v559, 1
      %v840 = vsel %vm823, %v838, %v839
      %v841 = vrot.slane %v544, 1
      %v842 = vrot.slane %v560, 1
      %v843 = vsel %vm823, %v841, %v842
      %v844 = vrot.slane %v545, 1
      %v845 = vrot.slane %v561, 1
      %v846 = vsel %vm823, %v844, %v845
      %v847 = vrot.slane %v546, 1
      %v848 = vrot.slane %v562, 1
      %v849 = vsel %vm823, %v847, %v848
      %v850 = vrot.slane %v547, 1
      %v851 = vrot.slane %v563, 1
      %v852 = vsel %vm823, %v850, %v851
      %v853 = vrot.slane %v548, 1
      %v854 = vrot.slane %v564, 1
      %v855 = vsel %vm823, %v853, %v854
      %v856 = vrot.slane %v549, 1
      %v857 = vrot.slane %v565, 1
      %v858 = vsel %vm823, %v856, %v857
      %v859 = vrot.slane %v550, 1
      %v860 = vrot.slane %v566, 1
      %v861 = vsel %vm823, %v859, %v860
      %v862 = vrot.slane %v551, 1
      %v863 = vrot.slane %v567, 1
      %v864 = vsel %vm823, %v862, %v863
      %v865 = vrot.slane %v552, 1
      %v866 = vrot.slane %v568, 1
      %v867 = vsel %vm823, %v865, %v866
      %v868 = vrot.slane %v553, 1
      %v869 = vrot.slane %v569, 1
      %v870 = vsel %vm823, %v868, %v869
      %871 = vrot.lane.b32.xlu0 %v825, 8
      %v872 = vpop.permute.xlu0 %871
      %873 = vrot.lane.b32.xlu0 %v828, 8
      %v874 = vpop.permute.xlu0 %873
      %875 = vrot.lane.b32.xlu0 %v831, 8
      %v876 = vpop.permute.xlu0 %875
      %877 = vrot.lane.b32.xlu0 %v834, 8
      %v878 = vpop.permute.xlu0 %877
      %879 = vrot.lane.b32.xlu0 %v837, 8
      %v880 = vpop.permute.xlu0 %879
      %881 = vrot.lane.b32.xlu0 %v840, 8
      %v882 = vpop.permute.xlu0 %881
      %883 = vrot.lane.b32.xlu0 %v843, 8
      %v884 = vpop.permute.xlu0 %883
      %885 = vrot.lane.b32.xlu0 %v846, 8
      %v886 = vpop.permute.xlu0 %885
      %887 = vrot.lane.b32.xlu0 %v849, 8
      %v888 = vpop.permute.xlu0 %887
      %889 = vrot.lane.b32.xlu0 %v852, 8
      %v890 = vpop.permute.xlu0 %889
      %891 = vrot.lane.b32.xlu0 %v855, 8
      %v892 = vpop.permute.xlu0 %891
      %893 = vrot.lane.b32.xlu0 %v858, 8
      %v894 = vpop.permute.xlu0 %893
      %895 = vrot.lane.b32.xlu0 %v861, 8
      %v896 = vpop.permute.xlu0 %895
      %897 = vrot.lane.b32.xlu0 %v864, 8
      %v898 = vpop.permute.xlu0 %897
      %899 = vrot.lane.b32.xlu0 %v867, 8
      %v900 = vpop.permute.xlu0 %899
      %901 = vrot.lane.b32.xlu0 %v870, 8
      %v902 = vpop.permute.xlu0 %901
      %904 = vrot.lane.b32.xlu0 %v539, 12
      %v905 = vpop.permute.xlu0 %904
      %906 = vrot.lane.b32.xlu0 %v540, 12
      %v907 = vpop.permute.xlu0 %906
      %908 = vrot.lane.b32.xlu0 %v541, 12
      %v909 = vpop.permute.xlu0 %908
      %910 = vrot.lane.b32.xlu0 %v542, 12
      %v911 = vpop.permute.xlu0 %910
      %912 = vrot.lane.b32.xlu0 %v543, 12
      %v913 = vpop.permute.xlu0 %912
      %914 = vrot.lane.b32.xlu0 %v544, 12
      %v915 = vpop.permute.xlu0 %914
      %916 = vrot.lane.b32.xlu0 %v545, 12
      %v917 = vpop.permute.xlu0 %916
      %918 = vrot.lane.b32.xlu0 %v546, 12
      %v919 = vpop.permute.xlu0 %918
      %920 = vrot.lane.b32.xlu0 %v547, 12
      %v921 = vpop.permute.xlu0 %920
      %922 = vrot.lane.b32.xlu0 %v548, 12
      %v923 = vpop.permute.xlu0 %922
      %924 = vrot.lane.b32.xlu0 %v549, 12
      %v925 = vpop.permute.xlu0 %924
      %926 = vrot.lane.b32.xlu0 %v550, 12
      %v927 = vpop.permute.xlu0 %926
      %928 = vrot.lane.b32.xlu0 %v551, 12
      %v929 = vpop.permute.xlu0 %928
      %930 = vrot.lane.b32.xlu0 %v552, 12
      %v931 = vpop.permute.xlu0 %930
      %932 = vrot.lane.b32.xlu0 %v553, 12
      %v933 = vpop.permute.xlu0 %932
      %934 = vrot.lane.b32.xlu0 %v554, 12
      %v935 = vpop.permute.xlu0 %934
      %v937 = vshrl.u32 %v554, 16
      %v939 = vshll.u32 %v554, 16
      %v941 = vrot.slane %v939, 1
      %v942 = vor.u32 %v937, %v941
      %v944 = vshll.u32 %v570, 16
      %v946 = vrot.slane %v944, 1
      %v947 = vsel %vm571, %v942, %v946
      %948 = vrot.lane.b32.xlu0 %v591, 16
      %v949 = vpop.permute.xlu0 %948
      %950 = vrot.lane.b32.xlu0 %v603, 16
      %v951 = vpop.permute.xlu0 %950
      %952 = vrot.lane.b32.xlu0 %v615, 16
      %v953 = vpop.permute.xlu0 %952
      %954 = vrot.lane.b32.xlu0 %v627, 16
      %v955 = vpop.permute.xlu0 %954
      %956 = vrot.lane.b32.xlu0 %v639, 16
      %v957 = vpop.permute.xlu0 %956
      %958 = vrot.lane.b32.xlu0 %v651, 16
      %v959 = vpop.permute.xlu0 %958
      %960 = vrot.lane.b32.xlu0 %v663, 16
      %v961 = vpop.permute.xlu0 %960
      %962 = vrot.lane.b32.xlu0 %v675, 16
      %v963 = vpop.permute.xlu0 %962
      %964 = vrot.lane.b32.xlu0 %v687, 16
      %v965 = vpop.permute.xlu0 %964
      %966 = vrot.lane.b32.xlu0 %v699, 16
      %v967 = vpop.permute.xlu0 %966
      %968 = vrot.lane.b32.xlu0 %v711, 16
      %v969 = vpop.permute.xlu0 %968
      %970 = vrot.lane.b32.xlu0 %v723, 16
      %v971 = vpop.permute.xlu0 %970
      %972 = vrot.lane.b32.xlu0 %v735, 16
      %v973 = vpop.permute.xlu0 %972
      %974 = vrot.lane.b32.xlu0 %v747, 16
      %v975 = vpop.permute.xlu0 %974
      %976 = vrot.lane.b32.xlu0 %v759, 16
      %v977 = vpop.permute.xlu0 %976
      %978 = vrot.lane.b32.xlu0 %v947, 16
      %v979 = vpop.permute.xlu0 %978
      %v981 = vrot.slane %v554, 1
      %v982 = vrot.slane %v570, 1
      %v983 = vsel %vm823, %v981, %v982
      %984 = vrot.lane.b32.xlu0 %v828, 20
      %v985 = vpop.permute.xlu0 %984
      %986 = vrot.lane.b32.xlu0 %v831, 20
      %v987 = vpop.permute.xlu0 %986
      %988 = vrot.lane.b32.xlu0 %v834, 20
      %v989 = vpop.permute.xlu0 %988
      %990 = vrot.lane.b32.xlu0 %v837, 20
      %v991 = vpop.permute.xlu0 %990
      %992 = vrot.lane.b32.xlu0 %v840, 20
      %v993 = vpop.permute.xlu0 %992
      %994 = vrot.lane.b32.xlu0 %v843, 20
      %v995 = vpop.permute.xlu0 %994
      %996 = vrot.lane.b32.xlu0 %v846, 20
      %v997 = vpop.permute.xlu0 %996
      %998 = vrot.lane.b32.xlu0 %v849, 20
      %v999 = vpop.permute.xlu0 %998
      %1000 = vrot.lane.b32.xlu0 %v852, 20
      %v1001 = vpop.permute.xlu0 %1000
      %1002 = vrot.lane.b32.xlu0 %v855, 20
      %v1003 = vpop.permute.xlu0 %1002
      %1004 = vrot.lane.b32.xlu0 %v858, 20
      %v1005 = vpop.permute.xlu0 %1004
      %1006 = vrot.lane.b32.xlu0 %v861, 20
      %v1007 = vpop.permute.xlu0 %1006
      %1008 = vrot.lane.b32.xlu0 %v864, 20
      %v1009 = vpop.permute.xlu0 %1008
      %1010 = vrot.lane.b32.xlu0 %v867, 20
      %v1011 = vpop.permute.xlu0 %1010
      %1012 = vrot.lane.b32.xlu0 %v870, 20
      %v1013 = vpop.permute.xlu0 %1012
      %1014 = vrot.lane.b32.xlu0 %v983, 20
      %v1015 = vpop.permute.xlu0 %1014
      %1016 = vrot.lane.b32.xlu0 %v540, 24
      %v1017 = vpop.permute.xlu0 %1016
      %1018 = vrot.lane.b32.xlu0 %v541, 24
      %v1019 = vpop.permute.xlu0 %1018
      %1020 = vrot.lane.b32.xlu0 %v542, 24
      %v1021 = vpop.permute.xlu0 %1020
      %1022 = vrot.lane.b32.xlu0 %v543, 24
      %v1023 = vpop.permute.xlu0 %1022
      %1024 = vrot.lane.b32.xlu0 %v544, 24
      %v1025 = vpop.permute.xlu0 %1024
      %1026 = vrot.lane.b32.xlu0 %v545, 24
      %v1027 = vpop.permute.xlu0 %1026
      %1028 = vrot.lane.b32.xlu0 %v546, 24
      %v1029 = vpop.permute.xlu0 %1028
      %1030 = vrot.lane.b32.xlu0 %v547, 24
      %v1031 = vpop.permute.xlu0 %1030
      %1032 = vrot.lane.b32.xlu0 %v548, 24
      %v1033 = vpop.permute.xlu0 %1032
      %1034 = vrot.lane.b32.xlu0 %v549, 24
      %v1035 = vpop.permute.xlu0 %1034
      %1036 = vrot.lane.b32.xlu0 %v550, 24
      %v1037 = vpop.permute.xlu0 %1036
      %1038 = vrot.lane.b32.xlu0 %v551, 24
      %v1039 = vpop.permute.xlu0 %1038
      %1040 = vrot.lane.b32.xlu0 %v552, 24
      %v1041 = vpop.permute.xlu0 %1040
      %1042 = vrot.lane.b32.xlu0 %v553, 24
      %v1043 = vpop.permute.xlu0 %1042
      %1044 = vrot.lane.b32.xlu0 %v554, 24
      %v1045 = vpop.permute.xlu0 %1044
      %1046 = vrot.lane.b32.xlu0 0, 24
      %v1047 = vpop.permute.xlu0 %1046
      %1048 = vrot.lane.b32.xlu0 %v603, 28
      %v1049 = vpop.permute.xlu0 %1048
      %1050 = vrot.lane.b32.xlu0 %v615, 28
      %v1051 = vpop.permute.xlu0 %1050
      %1052 = vrot.lane.b32.xlu0 %v627, 28
      %v1053 = vpop.permute.xlu0 %1052
      %1054 = vrot.lane.b32.xlu0 %v639, 28
      %v1055 = vpop.permute.xlu0 %1054
      %1056 = vrot.lane.b32.xlu0 %v651, 28
      %v1057 = vpop.permute.xlu0 %1056
      %1058 = vrot.lane.b32.xlu0 %v663, 28
      %v1059 = vpop.permute.xlu0 %1058
      %1060 = vrot.lane.b32.xlu0 %v675, 28
      %v1061 = vpop.permute.xlu0 %1060
      %1062 = vrot.lane.b32.xlu0 %v687, 28
      %v1063 = vpop.permute.xlu0 %1062
      %1064 = vrot.lane.b32.xlu0 %v699, 28
      %v1065 = vpop.permute.xlu0 %1064
      %1066 = vrot.lane.b32.xlu0 %v711, 28
      %v1067 = vpop.permute.xlu0 %1066
      %1068 = vrot.lane.b32.xlu0 %v723, 28
      %v1069 = vpop.permute.xlu0 %1068
      %1070 = vrot.lane.b32.xlu0 %v735, 28
      %v1071 = vpop.permute.xlu0 %1070
      %1072 = vrot.lane.b32.xlu0 %v747, 28
      %v1073 = vpop.permute.xlu0 %1072
      %1074 = vrot.lane.b32.xlu0 %v759, 28
      %v1075 = vpop.permute.xlu0 %1074
      %1076 = vrot.lane.b32.xlu0 %v947, 28
      %v1077 = vpop.permute.xlu0 %1076
      %1078 = vrot.lane.b32.xlu0 %v579, 28
      %v1079 = vpop.permute.xlu0 %1078
      %1080 = vrot.lane.b32.xlu0 %v831, 32
      %v1081 = vpop.permute.xlu0 %1080
      %1082 = vrot.lane.b32.xlu0 %v834, 32
      %v1083 = vpop.permute.xlu0 %1082
      %1084 = vrot.lane.b32.xlu0 %v837, 32
      %v1085 = vpop.permute.xlu0 %1084
      %1086 = vrot.lane.b32.xlu0 %v840, 32
      %v1087 = vpop.permute.xlu0 %1086
      %1088 = vrot.lane.b32.xlu0 %v843, 32
      %v1089 = vpop.permute.xlu0 %1088
      %1090 = vrot.lane.b32.xlu0 %v846, 32
      %v1091 = vpop.permute.xlu0 %1090
      %1092 = vrot.lane.b32.xlu0 %v849, 32
      %v1093 = vpop.permute.xlu0 %1092
      %1094 = vrot.lane.b32.xlu0 %v852, 32
      %v1095 = vpop.permute.xlu0 %1094
      %1096 = vrot.lane.b32.xlu0 %v855, 32
      %v1097 = vpop.permute.xlu0 %1096
      %1098 = vrot.lane.b32.xlu0 %v858, 32
      %v1099 = vpop.permute.xlu0 %1098
      %1100 = vrot.lane.b32.xlu0 %v861, 32
      %v1101 = vpop.permute.xlu0 %1100
      %1102 = vrot.lane.b32.xlu0 %v864, 32
      %v1103 = vpop.permute.xlu0 %1102
      %1104 = vrot.lane.b32.xlu0 %v867, 32
      %v1105 = vpop.permute.xlu0 %1104
      %1106 = vrot.lane.b32.xlu0 %v870, 32
      %v1107 = vpop.permute.xlu0 %1106
      %1108 = vrot.lane.b32.xlu0 %v983, 32
      %v1109 = vpop.permute.xlu0 %1108
      %1110 = vrot.lane.b32.xlu0 %v825, 32
      %v1111 = vpop.permute.xlu0 %1110
      %vm1112 = vcmask 31744
      %v1114 = vsel %vm1112, 0, %v761
      %v1116 = vsel %vm1112, %v539, %v763
      %v1118 = vsel %vm1112, %v540, %v765
      %v1120 = vsel %vm1112, %v541, %v767
      %v1122 = vsel %vm1112, %v542, %v769
      %v1124 = vsel %vm1112, %v543, %v771
      %v1126 = vsel %vm1112, %v544, %v773
      %v1128 = vsel %vm1112, %v545, %v775
      %v1130 = vsel %vm1112, %v546, %v777
      %v1132 = vsel %vm1112, %v547, %v779
      %v1134 = vsel %vm1112, %v548, %v781
      %v1136 = vsel %vm1112, %v549, %v783
      %v1138 = vsel %vm1112, %v550, %v785
      %v1140 = vsel %vm1112, %v551, %v787
      %v1142 = vsel %vm1112, %v552, %v789
      %v1144 = vsel %vm1112, %v553, %v791
      %vm1145 = vcmask 64512
      %v1147 = vsel %vm1145, %v1114, %v872
      %v1149 = vsel %vm1145, %v1116, %v874
      %v1151 = vsel %vm1145, %v1118, %v876
      %v1153 = vsel %vm1145, %v1120, %v878
      %v1155 = vsel %vm1145, %v1122, %v880
      %v1157 = vsel %vm1145, %v1124, %v882
      %v1159 = vsel %vm1145, %v1126, %v884
      %v1161 = vsel %vm1145, %v1128, %v886
      %v1163 = vsel %vm1145, %v1130, %v888
      %v1165 = vsel %vm1145, %v1132, %v890
      %v1167 = vsel %vm1145, %v1134, %v892
      %v1169 = vsel %vm1145, %v1136, %v894
      %v1171 = vsel %vm1145, %v1138, %v896
      %v1173 = vsel %vm1145, %v1140, %v898
      %v1175 = vsel %vm1145, %v1142, %v900
      %v1177 = vsel %vm1145, %v1144, %v902
      %vm1178 = vcmask 97280
      %v1180 = vsel %vm1178, %v1147, %v905
      %v1182 = vsel %vm1178, %v1149, %v907
      %v1184 = vsel %vm1178, %v1151, %v909
      %v1186 = vsel %vm1178, %v1153, %v911
      %v1188 = vsel %vm1178, %v1155, %v913
      %v1190 = vsel %vm1178, %v1157, %v915
      %v1192 = vsel %vm1178, %v1159, %v917
      %v1194 = vsel %vm1178, %v1161, %v919
      %v1196 = vsel %vm1178, %v1163, %v921
      %v1198 = vsel %vm1178, %v1165, %v923
      %v1200 = vsel %vm1178, %v1167, %v925
      %v1202 = vsel %vm1178, %v1169, %v927
      %v1204 = vsel %vm1178, %v1171, %v929
      %v1206 = vsel %vm1178, %v1173, %v931
      %v1208 = vsel %vm1178, %v1175, %v933
      %v1210 = vsel %vm1178, %v1177, %v935
      %vm1211 = vcmask 130048
      %v1213 = vsel %vm1211, %v1180, %v949
      %v1215 = vsel %vm1211, %v1182, %v951
      %v1217 = vsel %vm1211, %v1184, %v953
      %v1219 = vsel %vm1211, %v1186, %v955
      %v1221 = vsel %vm1211, %v1188, %v957
      %v1223 = vsel %vm1211, %v1190, %v959
      %v1225 = vsel %vm1211, %v1192, %v961
      %v1227 = vsel %vm1211, %v1194, %v963
      %v1229 = vsel %vm1211, %v1196, %v965
      %v1231 = vsel %vm1211, %v1198, %v967
      %v1233 = vsel %vm1211, %v1200, %v969
      %v1235 = vsel %vm1211, %v1202, %v971
      %v1237 = vsel %vm1211, %v1204, %v973
      %v1239 = vsel %vm1211, %v1206, %v975
      %v1241 = vsel %vm1211, %v1208, %v977
      %v1243 = vsel %vm1211, %v1210, %v979
      %vm1244 = vcmask 162816
      %v1246 = vsel %vm1244, %v1213, %v985
      %v1248 = vsel %vm1244, %v1215, %v987
      %v1250 = vsel %vm1244, %v1217, %v989
      %v1252 = vsel %vm1244, %v1219, %v991
      %v1254 = vsel %vm1244, %v1221, %v993
      %v1256 = vsel %vm1244, %v1223, %v995
      %v1258 = vsel %vm1244, %v1225, %v997
      %v1260 = vsel %vm1244, %v1227, %v999
      %v1262 = vsel %vm1244, %v1229, %v1001
      %v1264 = vsel %vm1244, %v1231, %v1003
      %v1266 = vsel %vm1244, %v1233, %v1005
      %v1268 = vsel %vm1244, %v1235, %v1007
      %v1270 = vsel %vm1244, %v1237, %v1009
      %v1272 = vsel %vm1244, %v1239, %v1011
      %v1274 = vsel %vm1244, %v1241, %v1013
      %v1276 = vsel %vm1244, %v1243, %v1015
      %vm1277 = vcmask 195584
      %v1279 = vsel %vm1277, %v1246, %v1017
      %v1281 = vsel %vm1277, %v1248, %v1019
      %v1283 = vsel %vm1277, %v1250, %v1021
      %v1285 = vsel %vm1277, %v1252, %v1023
      %v1287 = vsel %vm1277, %v1254, %v1025
      %v1289 = vsel %vm1277, %v1256, %v1027
      %v1291 = vsel %vm1277, %v1258, %v1029
      %v1293 = vsel %vm1277, %v1260, %v1031
      %v1295 = vsel %vm1277, %v1262, %v1033
      %v1297 = vsel %vm1277, %v1264, %v1035
      %v1299 = vsel %vm1277, %v1266, %v1037
      %v1301 = vsel %vm1277, %v1268, %v1039
      %v1303 = vsel %vm1277, %v1270, %v1041
      %v1305 = vsel %vm1277, %v1272, %v1043
      %v1307 = vsel %vm1277, %v1274, %v1045
      %v1309 = vsel %vm1277, %v1276, %v1047
      %vm1310 = vcmask 228352
      %v1312 = vsel %vm1310, %v1279, %v1049
      %v1314 = vsel %vm1310, %v1281, %v1051
      %v1316 = vsel %vm1310, %v1283, %v1053
      %v1318 = vsel %vm1310, %v1285, %v1055
      %v1320 = vsel %vm1310, %v1287, %v1057
      %v1322 = vsel %vm1310, %v1289, %v1059
      %v1324 = vsel %vm1310, %v1291, %v1061
      %v1326 = vsel %vm1310, %v1293, %v1063
      %v1328 = vsel %vm1310, %v1295, %v1065
      %v1330 = vsel %vm1310, %v1297, %v1067
      %v1332 = vsel %vm1310, %v1299, %v1069
      %v1334 = vsel %vm1310, %v1301, %v1071
      %v1336 = vsel %vm1310, %v1303, %v1073
      %v1338 = vsel %vm1310, %v1305, %v1075
      %v1340 = vsel %vm1310, %v1307, %v1077
      %v1342 = vsel %vm1310, %v1309, %v1079
      %vm1343 = vcmask 261120
      %v1345 = vsel %vm1343, %v1312, %v1081
      %v1347 = vsel %vm1343, %v1314, %v1083
      %v1349 = vsel %vm1343, %v1316, %v1085
      %v1351 = vsel %vm1343, %v1318, %v1087
      %v1353 = vsel %vm1343, %v1320, %v1089
      %v1355 = vsel %vm1343, %v1322, %v1091
      %v1357 = vsel %vm1343, %v1324, %v1093
      %v1359 = vsel %vm1343, %v1326, %v1095
      %v1361 = vsel %vm1343, %v1328, %v1097
      %v1363 = vsel %vm1343, %v1330, %v1099
      %v1365 = vsel %vm1343, %v1332, %v1101
      %v1367 = vsel %vm1343, %v1334, %v1103
      %v1369 = vsel %vm1343, %v1336, %v1105
      %v1371 = vsel %vm1343, %v1338, %v1107
      %v1373 = vsel %vm1343, %v1340, %v1109
      %v1375 = vsel %vm1343, %v1342, %v1111
      %v1376 = vld [vmem:[%s1] sm:$0xf]
      %v1377 = vld [vmem:[%s1 + $0x4] sm:$0xf]
      %v1378 = vld [vmem:[%s1 + $0x8] sm:$0xf]
      %v1379 = vld [vmem:[%s1 + $0xc] sm:$0xf]
      %v1380 = vld [vmem:[%s1 + $0x10] sm:$0x3]
      %v1381 = vld [vmem:[%s2] sm:$0x1]
      %v1383 = vlaneseq
      %v1384 = vshrl.u32 %v1383, 7
      %v1385 = vsub.s32 0, %v1384
      %v1386 = vrot.slane %v1381, %v1385
      %v1393 = vunpack.c.l.b16 %v1376
      %v1394 = vunpack.c.l.b16 %v1377
      %v1395 = vunpack.c.l.b16 %v1378
      %v1396 = vunpack.c.l.b16 %v1379
      %v1397 = vunpack.c.l.b16 %v1380
      %v1398 = vpack.c.b16 %v1394, %v1393
      %v1399 = vpack.c.b16 %v1396, %v1395
      %v1400 = vpack.c.b16 %v1397, %v1397
      %vm1403 = vcmask 293888
      %v1404 = vsel %vm1403, %v1345, 0
      %v1406 = vsel %vm1403, %v1347, 0
      %v1408 = vsel %vm1403, %v1349, 0
      %v1410 = vsel %vm1403, %v1351, 0
      %v1412 = vsel %vm1403, %v1353, 0
      %v1414 = vsel %vm1403, %v1355, 0
      %v1416 = vsel %vm1403, %v1357, 0
      %v1418 = vsel %vm1403, %v1359, 0
      %v1420 = vsel %vm1403, %v1361, 0
      %v1422 = vsel %vm1403, %v1363, 0
      %v1424 = vsel %vm1403, %v1365, 0
      %v1426 = vsel %vm1403, %v1367, 0
      %v1428 = vsel %vm1403, %v1369, 0
      %v1430 = vsel %vm1403, %v1371, 0
      %v1432 = vsel %vm1403, %v1373, 0
      %v1434 = vsel %vm1403, %v1375, 0
      %vm1436 = vcmask 1041408
      %v1438 = vsel %vm1436, %v1400, 0
      %1440 = vmatprep.subr.bf16.mxu0 0
      %1441 = vmatpush1.bf16.msra.mxu0 %v1398
      %1442 = vmatprep.subr.bf16.mxu0 0
      %1443 = vmatpush1.bf16.msra.mxu0 %v1399
      %1444 = vmatprep.subr.bf16.mxu0 0
      %1445 = vmatpush1.bf16.msra.mxu0 %v1438
      %1446 = vmatprep.subr.bf16.mxu0 0
      %1447 = vmatpush1.bf16.msra.mxu0 0
      %1448 = vmatprep.subr.bf16.mxu0 0
      %1449 = vmatpush1.bf16.msra.mxu0 0
      %1450 = vmatprep.subr.bf16.mxu0 0
      %1451 = vmatpush1.bf16.msra.mxu0 0
      %1452 = vmatprep.subr.bf16.mxu0 0
      %1453 = vmatpush1.bf16.msra.mxu0 0
      %1454 = vmatprep.subr.bf16.mxu0 0
      %1455 = vmatpush1.bf16.msra.mxu0 0
      %1456 = vmatprep.subr.bf16.mxu0 0
      %1457 = vmatpush1.bf16.msra.mxu0 0
      %1458 = vmatprep.subr.bf16.mxu0 0
      %1459 = vmatpush1.bf16.msra.mxu0 0
      %1460 = vmatprep.subr.bf16.mxu0 0
      %1461 = vmatpush1.bf16.msra.mxu0 0
      %1462 = vmatprep.subr.bf16.mxu0 0
      %1463 = vmatpush1.bf16.msra.mxu0 0
      %1464 = vmatprep.subr.bf16.mxu0 0
      %1465 = vmatpush1.bf16.msra.mxu0 0
      %1466 = vmatprep.subr.bf16.mxu0 0
      %1467 = vmatpush1.bf16.msra.mxu0 0
      %1468 = vmatprep.subr.bf16.mxu0 0
      %1469 = vmatpush1.bf16.msra.mxu0 0
      %1470 = vmatprep.subr.bf16.mxu0 0
      %1471 = vmatpush1.bf16.msra.mxu0 0
      %1472 = vmatprep.mubr.bf16.mxu0 0
      %1473 = vmatmul.mubr.bf16.gmra.mrb[0].mxu0 %v1404
      %v1474 = vpop.f32.mrb[0].mxu0
      %v1475 = vadd.f32 %v1386, %v1474
      %v1476 = vpop.f32.mrb[0].mxu0
      %v1477 = vpop.f32.mrb[0].mxu0
      %v1478 = vadd.f32 %v1386, %v1477
      %v1479 = vpop.f32.mrb[0].mxu0
      %1480 = vmatprep.mubr.bf16.mxu0 0
      %1481 = vmatmul.mubr.bf16.gmra.mrb[0].mxu0 %v1406
      %v1482 = vpop.f32.mrb[0].mxu0
      %v1483 = vadd.f32 %v1386, %v1482
      %v1484 = vpop.f32.mrb[0].mxu0
      %v1485 = vpop.f32.mrb[0].mxu0
      %v1486 = vadd.f32 %v1386, %v1485
      %v1487 = vpop.f32.mrb[0].mxu0
      %1488 = vmatprep.mubr.bf16.mxu0 0
      %1489 = vmatmul.mubr.bf16.gmra.mrb[0].mxu0 %v1408
      %v1490 = vpop.f32.mrb[0].mxu0
      %v1491 = vadd.f32 %v1386, %v1490
      %v1492 = vpop.f32.mrb[0].mxu0
      %v1493 = vpop.f32.mrb[0].mxu0
      %v1494 = vadd.f32 %v1386, %v1493
      %v1495 = vpop.f32.mrb[0].mxu0
      %1496 = vmatprep.mubr.bf16.mxu0 0
      %1497 = vmatmul.mubr.bf16.gmra.mrb[0].mxu0 %v1410
      %v1498 = vpop.f32.mrb[0].mxu0
      %v1499 = vadd.f32 %v1386, %v1498
      %v1500 = vpop.f32.mrb[0].mxu0
      %v1501 = vpop.f32.mrb[0].mxu0
      %v1502 = vadd.f32 %v1386, %v1501
      %v1503 = vpop.f32.mrb[0].mxu0
      %1504 = vmatprep.mubr.bf16.mxu0 0
      %1505 = vmatmul.mubr.bf16.gmra.mrb[0].mxu0 %v1412
      %v1506 = vpop.f32.mrb[0].mxu0
      %v1507 = vadd.f32 %v1386, %v1506
      %v1508 = vpop.f32.mrb[0].mxu0
      %v1509 = vpop.f32.mrb[0].mxu0
      %v1510 = vadd.f32 %v1386, %v1509
      %v1511 = vpop.f32.mrb[0].mxu0
      %1512 = vmatprep.mubr.bf16.mxu0 0
      %1513 = vmatmul.mubr.bf16.gmra.mrb[0].mxu0 %v1414
      %v1514 = vpop.f32.mrb[0].mxu0
      %v1515 = vadd.f32 %v1386, %v1514
      %v1516 = vpop.f32.mrb[0].mxu0
      %v1517 = vpop.f32.mrb[0].mxu0
      %v1518 = vadd.f32 %v1386, %v1517
      %v1519 = vpop.f32.mrb[0].mxu0
      %1520 = vmatprep.mubr.bf16.mxu0 0
      %1521 = vmatmul.mubr.bf16.gmra.mrb[0].mxu0 %v1416
      %v1522 = vpop.f32.mrb[0].mxu0
      %v1523 = vadd.f32 %v1386, %v1522
      %v1524 = vpop.f32.mrb[0].mxu0
      %v1525 = vpop.f32.mrb[0].mxu0
      %v1526 = vadd.f32 %v1386, %v1525
      %v1527 = vpop.f32.mrb[0].mxu0
      %1528 = vmatprep.mubr.bf16.mxu0 0
      %1529 = vmatmul.mubr.bf16.gmra.mrb[0].mxu0 %v1418
      %v1530 = vpop.f32.mrb[0].mxu0
      %v1531 = vadd.f32 %v1386, %v1530
      %v1532 = vpop.f32.mrb[0].mxu0
      %v1533 = vpop.f32.mrb[0].mxu0
      %v1534 = vadd.f32 %v1386, %v1533
      %v1535 = vpop.f32.mrb[0].mxu0
      %1536 = vmatprep.mubr.bf16.mxu0 0
      %1537 = vmatmul.mubr.bf16.gmra.mrb[0].mxu0 %v1420
      %v1538 = vpop.f32.mrb[0].mxu0
      %v1539 = vadd.f32 %v1386, %v1538
      %v1540 = vpop.f32.mrb[0].mxu0
      %v1541 = vpop.f32.mrb[0].mxu0
      %v1542 = vadd.f32 %v1386, %v1541
      %v1543 = vpop.f32.mrb[0].mxu0
      %1544 = vmatprep.mubr.bf16.mxu0 0
      %1545 = vmatmul.mubr.bf16.gmra.mrb[0].mxu0 %v1422
      %v1546 = vpop.f32.mrb[0].mxu0
      %v1547 = vadd.f32 %v1386, %v1546
      %v1548 = vpop.f32.mrb[0].mxu0
      %v1549 = vpop.f32.mrb[0].mxu0
      %v1550 = vadd.f32 %v1386, %v1549
      %v1551 = vpop.f32.mrb[0].mxu0
      %1552 = vmatprep.mubr.bf16.mxu0 0
      %1553 = vmatmul.mubr.bf16.gmra.mrb[0].mxu0 %v1424
      %v1554 = vpop.f32.mrb[0].mxu0
      %v1555 = vadd.f32 %v1386, %v1554
      %v1556 = vpop.f32.mrb[0].mxu0
      %v1557 = vpop.f32.mrb[0].mxu0
      %v1558 = vadd.f32 %v1386, %v1557
      %v1559 = vpop.f32.mrb[0].mxu0
      %1560 = vmatprep.mubr.bf16.mxu0 0
      %1561 = vmatmul.mubr.bf16.gmra.mrb[0].mxu0 %v1426
      %v1562 = vpop.f32.mrb[0].mxu0
      %v1563 = vadd.f32 %v1386, %v1562
      %v1564 = vpop.f32.mrb[0].mxu0
      %v1565 = vpop.f32.mrb[0].mxu0
      %v1566 = vadd.f32 %v1386, %v1565
      %v1567 = vpop.f32.mrb[0].mxu0
      %1568 = vmatprep.mubr.bf16.mxu0 0
      %1569 = vmatmul.mubr.bf16.gmra.mrb[0].mxu0 %v1428
      %v1570 = vpop.f32.mrb[0].mxu0
      %v1571 = vadd.f32 %v1386, %v1570
      %v1572 = vpop.f32.mrb[0].mxu0
      %v1573 = vpop.f32.mrb[0].mxu0
      %v1574 = vadd.f32 %v1386, %v1573
      %v1575 = vpop.f32.mrb[0].mxu0
      %1576 = vmatprep.mubr.bf16.mxu0 0
      %1577 = vmatmul.mubr.bf16.gmra.mrb[0].mxu0 %v1430
      %v1578 = vpop.f32.mrb[0].mxu0
      %v1579 = vadd.f32 %v1386, %v1578
      %v1580 = vpop.f32.mrb[0].mxu0
      %v1581 = vpop.f32.mrb[0].mxu0
      %v1582 = vadd.f32 %v1386, %v1581
      %v1583 = vpop.f32.mrb[0].mxu0
      %1584 = vmatprep.mubr.bf16.mxu0 0
      %1585 = vmatmul.mubr.bf16.gmra.mrb[0].mxu0 %v1432
      %v1586 = vpop.f32.mrb[0].mxu0
      %v1587 = vadd.f32 %v1386, %v1586
      %v1588 = vpop.f32.mrb[0].mxu0
      %v1589 = vpop.f32.mrb[0].mxu0
      %v1590 = vadd.f32 %v1386, %v1589
      %v1591 = vpop.f32.mrb[0].mxu0
      %1592 = vmatprep.mubr.bf16.mxu0 0
      %1593 = vmatmul.mubr.bf16.gmra.mrb[0].mxu0 %v1434
      %v1594 = vpop.f32.mrb[0].mxu0
      %v1595 = vadd.f32 %v1386, %v1594
      %v1596 = vpop.f32.mrb[0].mxu0
      %v1597 = vpop.f32.mrb[0].mxu0
      %v1598 = vadd.f32 %v1386, %v1597
      %v1599 = vpop.f32.mrb[0].mxu0
      %1600 = vdwg.mxu0
      %vm1601 = vcmp.ge.f32.partialorder %v1475, 0.0
      %vm1602 = vcmp.ge.f32.partialorder %v1478, 0.0
      %vm1603 = vcmp.ge.f32.partialorder %v1483, 0.0
      %vm1604 = vcmp.ge.f32.partialorder %v1486, 0.0
      %vm1605 = vcmp.ge.f32.partialorder %v1491, 0.0
      %vm1606 = vcmp.ge.f32.partialorder %v1494, 0.0
      %vm1607 = vcmp.ge.f32.partialorder %v1499, 0.0
      %vm1608 = vcmp.ge.f32.partialorder %v1502, 0.0
      %vm1609 = vcmp.ge.f32.partialorder %v1507, 0.0
      %vm1610 = vcmp.ge.f32.partialorder %v1510, 0.0
      %vm1611 = vcmp.ge.f32.partialorder %v1515, 0.0
      %vm1612 = vcmp.ge.f32.partialorder %v1518, 0.0
      %vm1613 = vcmp.ge.f32.partialorder %v1523, 0.0
      %vm1614 = vcmp.ge.f32.partialorder %v1526, 0.0
      %vm1615 = vcmp.ge.f32.partialorder %v1531, 0.0
      %vm1616 = vcmp.ge.f32.partialorder %v1534, 0.0
      %vm1617 = vcmp.ge.f32.partialorder %v1539, 0.0
      %vm1618 = vcmp.ge.f32.partialorder %v1542, 0.0
      %vm1619 = vcmp.ge.f32.partialorder %v1547, 0.0
      %vm1620 = vcmp.ge.f32.partialorder %v1550, 0.0
      %vm1621 = vcmp.ge.f32.partialorder %v1555, 0.0
      %vm1622 = vcmp.ge.f32.partialorder %v1558, 0.0
      %vm1623 = vcmp.ge.f32.partialorder %v1563, 0.0
      %vm1624 = vcmp.ge.f32.partialorder %v1566, 0.0
      %vm1625 = vcmp.ge.f32.partialorder %v1571, 0.0
      %vm1626 = vcmp.ge.f32.partialorder %v1574, 0.0
      %vm1627 = vcmp.ge.f32.partialorder %v1579, 0.0
      %vm1628 = vcmp.ge.f32.partialorder %v1582, 0.0
      %vm1629 = vcmp.ge.f32.partialorder %v1587, 0.0
      %vm1630 = vcmp.ge.f32.partialorder %v1590, 0.0
      %vm1631 = vcmp.ge.f32.partialorder %v1595, 0.0
      %vm1632 = vcmp.ge.f32.partialorder %v1598, 0.0
      %v1633 = vmul.f32 %v1475, 0.01
      %v1634 = vmul.f32 %v1478, 0.01
      %v1635 = vmul.f32 %v1483, 0.01
      %v1636 = vmul.f32 %v1486, 0.01
      %v1637 = vmul.f32 %v1491, 0.01
      %v1638 = vmul.f32 %v1494, 0.01
      %v1639 = vmul.f32 %v1499, 0.01
      %v1640 = vmul.f32 %v1502, 0.01
      %v1641 = vmul.f32 %v1507, 0.01
      %v1642 = vmul.f32 %v1510, 0.01
      %v1643 = vmul.f32 %v1515, 0.01
      %v1644 = vmul.f32 %v1518, 0.01
      %v1645 = vmul.f32 %v1523, 0.01
      %v1646 = vmul.f32 %v1526, 0.01
      %v1647 = vmul.f32 %v1531, 0.01
      %v1648 = vmul.f32 %v1534, 0.01
      %v1649 = vmul.f32 %v1539, 0.01
      %v1650 = vmul.f32 %v1542, 0.01
      %v1651 = vmul.f32 %v1547, 0.01
      %v1652 = vmul.f32 %v1550, 0.01
      %v1653 = vmul.f32 %v1555, 0.01
      %v1654 = vmul.f32 %v1558, 0.01
      %v1655 = vmul.f32 %v1563, 0.01
      %v1656 = vmul.f32 %v1566, 0.01
      %v1657 = vmul.f32 %v1571, 0.01
      %v1658 = vmul.f32 %v1574, 0.01
      %v1659 = vmul.f32 %v1579, 0.01
      %v1660 = vmul.f32 %v1582, 0.01
      %v1661 = vmul.f32 %v1587, 0.01
      %v1662 = vmul.f32 %v1590, 0.01
      %v1663 = vmul.f32 %v1595, 0.01
      %v1664 = vmul.f32 %v1598, 0.01
      %v1665 = vsel %vm1601, %v1475, %v1633
      %v1666 = vsel %vm1602, %v1478, %v1634
      %v1667 = vsel %vm1603, %v1483, %v1635
      %v1668 = vsel %vm1604, %v1486, %v1636
      %v1669 = vsel %vm1605, %v1491, %v1637
      %v1670 = vsel %vm1606, %v1494, %v1638
      %v1671 = vsel %vm1607, %v1499, %v1639
      %v1672 = vsel %vm1608, %v1502, %v1640
      %v1673 = vsel %vm1609, %v1507, %v1641
      %v1674 = vsel %vm1610, %v1510, %v1642
      %v1675 = vsel %vm1611, %v1515, %v1643
      %v1676 = vsel %vm1612, %v1518, %v1644
      %v1677 = vsel %vm1613, %v1523, %v1645
      %v1678 = vsel %vm1614, %v1526, %v1646
      %v1679 = vsel %vm1615, %v1531, %v1647
      %v1680 = vsel %vm1616, %v1534, %v1648
      %v1681 = vsel %vm1617, %v1539, %v1649
      %v1682 = vsel %vm1618, %v1542, %v1650
      %v1683 = vsel %vm1619, %v1547, %v1651
      %v1684 = vsel %vm1620, %v1550, %v1652
      %v1685 = vsel %vm1621, %v1555, %v1653
      %v1686 = vsel %vm1622, %v1558, %v1654
      %v1687 = vsel %vm1623, %v1563, %v1655
      %v1688 = vsel %vm1624, %v1566, %v1656
      %v1689 = vsel %vm1625, %v1571, %v1657
      %v1690 = vsel %vm1626, %v1574, %v1658
      %v1691 = vsel %vm1627, %v1579, %v1659
      %v1692 = vsel %vm1628, %v1582, %v1660
      %v1693 = vsel %vm1629, %v1587, %v1661
      %v1694 = vsel %vm1630, %v1590, %v1662
      %v1695 = vsel %vm1631, %v1595, %v1663
      %v1696 = vsel %vm1632, %v1598, %v1664
      %v1697 = vpack.c.bf16 %v1666, %v1665
      %v1698 = vpack.c.bf16 %v1668, %v1667
      %v1699 = vpack.c.bf16 %v1670, %v1669
      %v1700 = vpack.c.bf16 %v1672, %v1671
      %v1701 = vpack.c.bf16 %v1674, %v1673
      %v1702 = vpack.c.bf16 %v1676, %v1675
      %v1703 = vpack.c.bf16 %v1678, %v1677
      %v1704 = vpack.c.bf16 %v1680, %v1679
      %v1705 = vpack.c.bf16 %v1682, %v1681
      %v1706 = vpack.c.bf16 %v1684, %v1683
      %v1707 = vpack.c.bf16 %v1686, %v1685
      %v1708 = vpack.c.bf16 %v1688, %v1687
      %v1709 = vpack.c.bf16 %v1690, %v1689
      %v1710 = vpack.c.bf16 %v1692, %v1691
      %v1711 = vpack.c.bf16 %v1694, %v1693
      %v1712 = vpack.c.bf16 %v1696, %v1695
      %v1714 = vshrl.u32 %v1697, 16
      %v1716 = vrot.slane %v1714, 7
      %v1717 = vshll.u32 %v1697, 16
      %v1719 = vor.u32 %v1716, %v1717
      %v1721 = vshrl.u32 %v1698, 16
      %v1723 = vrot.slane %v1721, 7
      %v1724 = vshll.u32 %v1698, 16
      %v1726 = vor.u32 %v1723, %v1724
      %v1728 = vshrl.u32 %v1699, 16
      %v1730 = vrot.slane %v1728, 7
      %v1731 = vshll.u32 %v1699, 16
      %v1733 = vor.u32 %v1730, %v1731
      %v1735 = vshrl.u32 %v1700, 16
      %v1737 = vrot.slane %v1735, 7
      %v1738 = vshll.u32 %v1700, 16
      %v1740 = vor.u32 %v1737, %v1738
      %v1742 = vshrl.u32 %v1701, 16
      %v1744 = vrot.slane %v1742, 7
      %v1745 = vshll.u32 %v1701, 16
      %v1747 = vor.u32 %v1744, %v1745
      %v1749 = vshrl.u32 %v1702, 16
      %v1751 = vrot.slane %v1749, 7
      %v1752 = vshll.u32 %v1702, 16
      %v1754 = vor.u32 %v1751, %v1752
      %v1756 = vshrl.u32 %v1703, 16
      %v1758 = vrot.slane %v1756, 7
      %v1759 = vshll.u32 %v1703, 16
      %v1761 = vor.u32 %v1758, %v1759
      %v1763 = vshrl.u32 %v1704, 16
      %v1765 = vrot.slane %v1763, 7
      %v1766 = vshll.u32 %v1704, 16
      %v1768 = vor.u32 %v1765, %v1766
      %v1770 = vshrl.u32 %v1705, 16
      %v1772 = vrot.slane %v1770, 7
      %v1773 = vshll.u32 %v1705, 16
      %v1775 = vor.u32 %v1772, %v1773
      %v1777 = vshrl.u32 %v1706, 16
      %v1779 = vrot.slane %v1777, 7
      %v1780 = vshll.u32 %v1706, 16
      %v1782 = vor.u32 %v1779, %v1780
      %v1784 = vshrl.u32 %v1707, 16
      %v1786 = vrot.slane %v1784, 7
      %v1787 = vshll.u32 %v1707, 16
      %v1789 = vor.u32 %v1786, %v1787
      %v1791 = vshrl.u32 %v1708, 16
      %v1793 = vrot.slane %v1791, 7
      %v1794 = vshll.u32 %v1708, 16
      %v1796 = vor.u32 %v1793, %v1794
      %v1798 = vshrl.u32 %v1709, 16
      %v1800 = vrot.slane %v1798, 7
      %v1801 = vshll.u32 %v1709, 16
      %v1803 = vor.u32 %v1800, %v1801
      %v1805 = vshrl.u32 %v1710, 16
      %v1807 = vrot.slane %v1805, 7
      %v1808 = vshll.u32 %v1710, 16
      %v1810 = vor.u32 %v1807, %v1808
      %v1812 = vshrl.u32 %v1711, 16
      %v1814 = vrot.slane %v1812, 7
      %v1815 = vshll.u32 %v1711, 16
      %v1817 = vor.u32 %v1814, %v1815
      %v1819 = vshrl.u32 %v1712, 16
      %v1821 = vrot.slane %v1819, 7
      %v1822 = vshll.u32 %v1712, 16
      %v1824 = vor.u32 %v1821, %v1822
      %v1857 = vsel %vm538, 0, %v1719
      %v1858 = vsel %vm538, 0, %v1726
      %v1859 = vsel %vm538, 0, %v1733
      %v1860 = vsel %vm538, 0, %v1740
      %v1861 = vsel %vm538, 0, %v1747
      %v1862 = vsel %vm538, 0, %v1754
      %v1863 = vsel %vm538, 0, %v1761
      %v1864 = vsel %vm538, 0, %v1768
      %v1865 = vsel %vm538, 0, %v1775
      %v1866 = vsel %vm538, 0, %v1782
      %v1867 = vsel %vm538, 0, %v1789
      %v1868 = vsel %vm538, 0, %v1796
      %v1869 = vsel %vm538, 0, %v1803
      %v1870 = vsel %vm538, 0, %v1810
      %v1871 = vsel %vm538, 0, %v1817
      %v1872 = vsel %vm538, 0, %v1824
      %v1873 = vsel %vm538, %v1716, 0
      %v1874 = vsel %vm538, %v1723, 0
      %v1875 = vsel %vm538, %v1730, 0
      %v1876 = vsel %vm538, %v1737, 0
      %v1877 = vsel %vm538, %v1744, 0
      %v1878 = vsel %vm538, %v1751, 0
      %v1879 = vsel %vm538, %v1758, 0
      %v1880 = vsel %vm538, %v1765, 0
      %v1881 = vsel %vm538, %v1772, 0
      %v1882 = vsel %vm538, %v1779, 0
      %v1883 = vsel %vm538, %v1786, 0
      %v1884 = vsel %vm538, %v1793, 0
      %v1885 = vsel %vm538, %v1800, 0
      %v1886 = vsel %vm538, %v1807, 0
      %v1887 = vsel %vm538, %v1814, 0
      %v1888 = vsel %vm538, %v1821, 0
      %v1890 = vshrl.u32 %v1857, 16
      %v1892 = vshll.u32 %v1857, 16
      %v1894 = vrot.slane %v1892, 1
      %v1895 = vor.u32 %v1890, %v1894
      %v1897 = vshll.u32 %v1873, 16
      %v1899 = vrot.slane %v1897, 1
      %v1900 = vsel %vm571, %v1895, %v1899
      %v1902 = vshrl.u32 %v1858, 16
      %v1904 = vshll.u32 %v1858, 16
      %v1906 = vrot.slane %v1904, 1
      %v1907 = vor.u32 %v1902, %v1906
      %v1909 = vshll.u32 %v1874, 16
      %v1911 = vrot.slane %v1909, 1
      %v1912 = vsel %vm571, %v1907, %v1911
      %v1914 = vshrl.u32 %v1859, 16
      %v1916 = vshll.u32 %v1859, 16
      %v1918 = vrot.slane %v1916, 1
      %v1919 = vor.u32 %v1914, %v1918
      %v1921 = vshll.u32 %v1875, 16
      %v1923 = vrot.slane %v1921, 1
      %v1924 = vsel %vm571, %v1919, %v1923
      %v1926 = vshrl.u32 %v1860, 16
      %v1928 = vshll.u32 %v1860, 16
      %v1930 = vrot.slane %v1928, 1
      %v1931 = vor.u32 %v1926, %v1930
      %v1933 = vshll.u32 %v1876, 16
      %v1935 = vrot.slane %v1933, 1
      %v1936 = vsel %vm571, %v1931, %v1935
      %v1938 = vshrl.u32 %v1861, 16
      %v1940 = vshll.u32 %v1861, 16
      %v1942 = vrot.slane %v1940, 1
      %v1943 = vor.u32 %v1938, %v1942
      %v1945 = vshll.u32 %v1877, 16
      %v1947 = vrot.slane %v1945, 1
      %v1948 = vsel %vm571, %v1943, %v1947
      %v1950 = vshrl.u32 %v1862, 16
      %v1952 = vshll.u32 %v1862, 16
      %v1954 = vrot.slane %v1952, 1
      %v1955 = vor.u32 %v1950, %v1954
      %v1957 = vshll.u32 %v1878, 16
      %v1959 = vrot.slane %v1957, 1
      %v1960 = vsel %vm571, %v1955, %v1959
      %v1962 = vshrl.u32 %v1863, 16
      %v1964 = vshll.u32 %v1863, 16
      %v1966 = vrot.slane %v1964, 1
      %v1967 = vor.u32 %v1962, %v1966
      %v1969 = vshll.u32 %v1879, 16
      %v1971 = vrot.slane %v1969, 1
      %v1972 = vsel %vm571, %v1967, %v1971
      %v1974 = vshrl.u32 %v1864, 16
      %v1976 = vshll.u32 %v1864, 16
      %v1978 = vrot.slane %v1976, 1
      %v1979 = vor.u32 %v1974, %v1978
      %v1981 = vshll.u32 %v1880, 16
      %v1983 = vrot.slane %v1981, 1
      %v1984 = vsel %vm571, %v1979, %v1983
      %v1986 = vshrl.u32 %v1865, 16
      %v1988 = vshll.u32 %v1865, 16
      %v1990 = vrot.slane %v1988, 1
      %v1991 = vor.u32 %v1986, %v1990
      %v1993 = vshll.u32 %v1881, 16
      %v1995 = vrot.slane %v1993, 1
      %v1996 = vsel %vm571, %v1991, %v1995
      %v1998 = vshrl.u32 %v1866, 16
      %v2000 = vshll.u32 %v1866, 16
      %v2002 = vrot.slane %v2000, 1
      %v2003 = vor.u32 %v1998, %v2002
      %v2005 = vshll.u32 %v1882, 16
      %v2007 = vrot.slane %v2005, 1
      %v2008 = vsel %vm571, %v2003, %v2007
      %v2010 = vshrl.u32 %v1867, 16
      %v2012 = vshll.u32 %v1867, 16
      %v2014 = vrot.slane %v2012, 1
      %v2015 = vor.u32 %v2010, %v2014
      %v2017 = vshll.u32 %v1883, 16
      %v2019 = vrot.slane %v2017, 1
      %v2020 = vsel %vm571, %v2015, %v2019
      %v2022 = vshrl.u32 %v1868, 16
      %v2024 = vshll.u32 %v1868, 16
      %v2026 = vrot.slane %v2024, 1
      %v2027 = vor.u32 %v2022, %v2026
      %v2029 = vshll.u32 %v1884, 16
      %v2031 = vrot.slane %v2029, 1
      %v2032 = vsel %vm571, %v2027, %v2031
      %v2034 = vshrl.u32 %v1869, 16
      %v2036 = vshll.u32 %v1869, 16
      %v2038 = vrot.slane %v2036, 1
      %v2039 = vor.u32 %v2034, %v2038
      %v2041 = vshll.u32 %v1885, 16
      %v2043 = vrot.slane %v2041, 1
      %v2044 = vsel %vm571, %v2039, %v2043
      %v2046 = vshrl.u32 %v1870, 16
      %v2048 = vshll.u32 %v1870, 16
      %v2050 = vrot.slane %v2048, 1
      %v2051 = vor.u32 %v2046, %v2050
      %v2053 = vshll.u32 %v1886, 16
      %v2055 = vrot.slane %v2053, 1
      %v2056 = vsel %vm571, %v2051, %v2055
      %v2058 = vshrl.u32 %v1871, 16
      %v2060 = vshll.u32 %v1871, 16
      %v2062 = vrot.slane %v2060, 1
      %v2063 = vor.u32 %v2058, %v2062
      %v2065 = vshll.u32 %v1887, 16
      %v2067 = vrot.slane %v2065, 1
      %v2068 = vsel %vm571, %v2063, %v2067
      %2069 = vrot.lane.b32.xlu0 %v579, 32
      %v2070 = vpop.permute.xlu0 %2069
      %2071 = vrot.lane.b32.xlu0 %v1900, 32
      %v2072 = vpop.permute.xlu0 %2071
      %2073 = vrot.lane.b32.xlu0 %v1912, 32
      %v2074 = vpop.permute.xlu0 %2073
      %2075 = vrot.lane.b32.xlu0 %v1924, 32
      %v2076 = vpop.permute.xlu0 %2075
      %2077 = vrot.lane.b32.xlu0 %v1936, 32
      %v2078 = vpop.permute.xlu0 %2077
      %2079 = vrot.lane.b32.xlu0 %v1948, 32
      %v2080 = vpop.permute.xlu0 %2079
      %2081 = vrot.lane.b32.xlu0 %v1960, 32
      %v2082 = vpop.permute.xlu0 %2081
      %2083 = vrot.lane.b32.xlu0 %v1972, 32
      %v2084 = vpop.permute.xlu0 %2083
      %2085 = vrot.lane.b32.xlu0 %v1984, 32
      %v2086 = vpop.permute.xlu0 %2085
      %2087 = vrot.lane.b32.xlu0 %v1996, 32
      %v2088 = vpop.permute.xlu0 %2087
      %2089 = vrot.lane.b32.xlu0 %v2008, 32
      %v2090 = vpop.permute.xlu0 %2089
      %2091 = vrot.lane.b32.xlu0 %v2020, 32
      %v2092 = vpop.permute.xlu0 %2091
      %2093 = vrot.lane.b32.xlu0 %v2032, 32
      %v2094 = vpop.permute.xlu0 %2093
      %2095 = vrot.lane.b32.xlu0 %v2044, 32
      %v2096 = vpop.permute.xlu0 %2095
      %2097 = vrot.lane.b32.xlu0 %v2056, 32
      %v2098 = vpop.permute.xlu0 %2097
      %2099 = vrot.lane.b32.xlu0 %v2068, 32
      %v2100 = vpop.permute.xlu0 %2099
      %v2131 = vrot.slane %v1857, 1
      %v2132 = vrot.slane %v1873, 1
      %v2133 = vsel %vm823, %v2131, %v2132
      %v2134 = vrot.slane %v1858, 1
      %v2135 = vrot.slane %v1874, 1
      %v2136 = vsel %vm823, %v2134, %v2135
      %v2137 = vrot.slane %v1859, 1
      %v2138 = vrot.slane %v1875, 1
      %v2139 = vsel %vm823, %v2137, %v2138
      %v2140 = vrot.slane %v1860, 1
      %v2141 = vrot.slane %v1876, 1
      %v2142 = vsel %vm823, %v2140, %v2141
      %v2143 = vrot.slane %v1861, 1
      %v2144 = vrot.slane %v1877, 1
      %v2145 = vsel %vm823, %v2143, %v2144
      %v2146 = vrot.slane %v1862, 1
      %v2147 = vrot.slane %v1878, 1
      %v2148 = vsel %vm823, %v2146, %v2147
      %v2149 = vrot.slane %v1863, 1
      %v2150 = vrot.slane %v1879, 1
      %v2151 = vsel %vm823, %v2149, %v2150
      %v2152 = vrot.slane %v1864, 1
      %v2153 = vrot.slane %v1880, 1
      %v2154 = vsel %vm823, %v2152, %v2153
      %v2155 = vrot.slane %v1865, 1
      %v2156 = vrot.slane %v1881, 1
      %v2157 = vsel %vm823, %v2155, %v2156
      %v2158 = vrot.slane %v1866, 1
      %v2159 = vrot.slane %v1882, 1
      %v2160 = vsel %vm823, %v2158, %v2159
      %v2161 = vrot.slane %v1867, 1
      %v2162 = vrot.slane %v1883, 1
      %v2163 = vsel %vm823, %v2161, %v2162
      %v2164 = vrot.slane %v1868, 1
      %v2165 = vrot.slane %v1884, 1
      %v2166 = vsel %vm823, %v2164, %v2165
      %v2167 = vrot.slane %v1869, 1
      %v2168 = vrot.slane %v1885, 1
      %v2169 = vsel %vm823, %v2167, %v2168
      %v2170 = vrot.slane %v1870, 1
      %v2171 = vrot.slane %v1886, 1
      %v2172 = vsel %vm823, %v2170, %v2171
      %v2173 = vrot.slane %v1871, 1
      %v2174 = vrot.slane %v1887, 1
      %v2175 = vsel %vm823, %v2173, %v2174
      %2176 = vrot.lane.b32.xlu0 %v825, 64
      %v2177 = vpop.permute.xlu0 %2176
      %2178 = vrot.lane.b32.xlu0 %v2133, 64
      %v2179 = vpop.permute.xlu0 %2178
      %2180 = vrot.lane.b32.xlu0 %v2136, 64
      %v2181 = vpop.permute.xlu0 %2180
      %2182 = vrot.lane.b32.xlu0 %v2139, 64
      %v2183 = vpop.permute.xlu0 %2182
      %2184 = vrot.lane.b32.xlu0 %v2142, 64
      %v2185 = vpop.permute.xlu0 %2184
      %2186 = vrot.lane.b32.xlu0 %v2145, 64
      %v2187 = vpop.permute.xlu0 %2186
      %2188 = vrot.lane.b32.xlu0 %v2148, 64
      %v2189 = vpop.permute.xlu0 %2188
      %2190 = vrot.lane.b32.xlu0 %v2151, 64
      %v2191 = vpop.permute.xlu0 %2190
      %2192 = vrot.lane.b32.xlu0 %v2154, 64
      %v2193 = vpop.permute.xlu0 %2192
      %2194 = vrot.lane.b32.xlu0 %v2157, 64
      %v2195 = vpop.permute.xlu0 %2194
      %2196 = vrot.lane.b32.xlu0 %v2160, 64
      %v2197 = vpop.permute.xlu0 %2196
      %2198 = vrot.lane.b32.xlu0 %v2163, 64
      %v2199 = vpop.permute.xlu0 %2198
      %2200 = vrot.lane.b32.xlu0 %v2166, 64
      %v2201 = vpop.permute.xlu0 %2200
      %2202 = vrot.lane.b32.xlu0 %v2169, 64
      %v2203 = vpop.permute.xlu0 %2202
      %2204 = vrot.lane.b32.xlu0 %v2172, 64
      %v2205 = vpop.permute.xlu0 %2204
      %2206 = vrot.lane.b32.xlu0 %v2175, 64
      %v2207 = vpop.permute.xlu0 %2206
      %2209 = vrot.lane.b32.xlu0 %v1857, 96
      %v2210 = vpop.permute.xlu0 %2209
      %2211 = vrot.lane.b32.xlu0 %v1858, 96
      %v2212 = vpop.permute.xlu0 %2211
      %2213 = vrot.lane.b32.xlu0 %v1859, 96
      %v2214 = vpop.permute.xlu0 %2213
      %2215 = vrot.lane.b32.xlu0 %v1860, 96
      %v2216 = vpop.permute.xlu0 %2215
      %2217 = vrot.lane.b32.xlu0 %v1861, 96
      %v2218 = vpop.permute.xlu0 %2217
      %2219 = vrot.lane.b32.xlu0 %v1862, 96
      %v2220 = vpop.permute.xlu0 %2219
      %2221 = vrot.lane.b32.xlu0 %v1863, 96
      %v2222 = vpop.permute.xlu0 %2221
      %2223 = vrot.lane.b32.xlu0 %v1864, 96
      %v2224 = vpop.permute.xlu0 %2223
      %2225 = vrot.lane.b32.xlu0 %v1865, 96
      %v2226 = vpop.permute.xlu0 %2225
      %2227 = vrot.lane.b32.xlu0 %v1866, 96
      %v2228 = vpop.permute.xlu0 %2227
      %2229 = vrot.lane.b32.xlu0 %v1867, 96
      %v2230 = vpop.permute.xlu0 %2229
      %2231 = vrot.lane.b32.xlu0 %v1868, 96
      %v2232 = vpop.permute.xlu0 %2231
      %2233 = vrot.lane.b32.xlu0 %v1869, 96
      %v2234 = vpop.permute.xlu0 %2233
      %2235 = vrot.lane.b32.xlu0 %v1870, 96
      %v2236 = vpop.permute.xlu0 %2235
      %2237 = vrot.lane.b32.xlu0 %v1871, 96
      %v2238 = vpop.permute.xlu0 %2237
      %2239 = vrot.lane.b32.xlu0 %v1872, 96
      %v2240 = vpop.permute.xlu0 %2239
      %v2242 = vshrl.u32 %v1872, 16
      %v2244 = vshll.u32 %v1872, 16
      %v2246 = vrot.slane %v2244, 1
      %v2247 = vor.u32 %v2242, %v2246
      %v2249 = vshll.u32 %v1888, 16
      %v2251 = vrot.slane %v2249, 1
      %v2252 = vsel %vm571, %v2247, %v2251
      %v2254 = vrot.slane %v1872, 1
      %v2255 = vrot.slane %v1888, 1
      %v2256 = vsel %vm823, %v2254, %v2255
      %2257 = vrot.lane.b32.xlu0 %v2133, 32
      %v2258 = vpop.permute.xlu0 %2257
      %2259 = vrot.lane.b32.xlu0 %v2136, 32
      %v2260 = vpop.permute.xlu0 %2259
      %2261 = vrot.lane.b32.xlu0 %v2139, 32
      %v2262 = vpop.permute.xlu0 %2261
      %2263 = vrot.lane.b32.xlu0 %v2142, 32
      %v2264 = vpop.permute.xlu0 %2263
      %2265 = vrot.lane.b32.xlu0 %v2145, 32
      %v2266 = vpop.permute.xlu0 %2265
      %2267 = vrot.lane.b32.xlu0 %v2148, 32
      %v2268 = vpop.permute.xlu0 %2267
      %2269 = vrot.lane.b32.xlu0 %v2151, 32
      %v2270 = vpop.permute.xlu0 %2269
      %2271 = vrot.lane.b32.xlu0 %v2154, 32
      %v2272 = vpop.permute.xlu0 %2271
      %2273 = vrot.lane.b32.xlu0 %v2157, 32
      %v2274 = vpop.permute.xlu0 %2273
      %2275 = vrot.lane.b32.xlu0 %v2160, 32
      %v2276 = vpop.permute.xlu0 %2275
      %2277 = vrot.lane.b32.xlu0 %v2163, 32
      %v2278 = vpop.permute.xlu0 %2277
      %2279 = vrot.lane.b32.xlu0 %v2166, 32
      %v2280 = vpop.permute.xlu0 %2279
      %2281 = vrot.lane.b32.xlu0 %v2169, 32
      %v2282 = vpop.permute.xlu0 %2281
      %2283 = vrot.lane.b32.xlu0 %v2172, 32
      %v2284 = vpop.permute.xlu0 %2283
      %2285 = vrot.lane.b32.xlu0 %v2175, 32
      %v2286 = vpop.permute.xlu0 %2285
      %2287 = vrot.lane.b32.xlu0 %v2256, 32
      %v2288 = vpop.permute.xlu0 %2287
      %2289 = vrot.lane.b32.xlu0 %v1858, 64
      %v2290 = vpop.permute.xlu0 %2289
      %2291 = vrot.lane.b32.xlu0 %v1859, 64
      %v2292 = vpop.permute.xlu0 %2291
      %2293 = vrot.lane.b32.xlu0 %v1860, 64
      %v2294 = vpop.permute.xlu0 %2293
      %2295 = vrot.lane.b32.xlu0 %v1861, 64
      %v2296 = vpop.permute.xlu0 %2295
      %2297 = vrot.lane.b32.xlu0 %v1862, 64
      %v2298 = vpop.permute.xlu0 %2297
      %2299 = vrot.lane.b32.xlu0 %v1863, 64
      %v2300 = vpop.permute.xlu0 %2299
      %2301 = vrot.lane.b32.xlu0 %v1864, 64
      %v2302 = vpop.permute.xlu0 %2301
      %2303 = vrot.lane.b32.xlu0 %v1865, 64
      %v2304 = vpop.permute.xlu0 %2303
      %2305 = vrot.lane.b32.xlu0 %v1866, 64
      %v2306 = vpop.permute.xlu0 %2305
      %2307 = vrot.lane.b32.xlu0 %v1867, 64
      %v2308 = vpop.permute.xlu0 %2307
      %2309 = vrot.lane.b32.xlu0 %v1868, 64
      %v2310 = vpop.permute.xlu0 %2309
      %2311 = vrot.lane.b32.xlu0 %v1869, 64
      %v2312 = vpop.permute.xlu0 %2311
      %2313 = vrot.lane.b32.xlu0 %v1870, 64
      %v2314 = vpop.permute.xlu0 %2313
      %2315 = vrot.lane.b32.xlu0 %v1871, 64
      %v2316 = vpop.permute.xlu0 %2315
      %2317 = vrot.lane.b32.xlu0 %v1872, 64
      %v2318 = vpop.permute.xlu0 %2317
      %2319 = vrot.lane.b32.xlu0 0, 64
      %v2320 = vpop.permute.xlu0 %2319
      %2321 = vrot.lane.b32.xlu0 %v1912, 96
      %v2322 = vpop.permute.xlu0 %2321
      %2323 = vrot.lane.b32.xlu0 %v1924, 96
      %v2324 = vpop.permute.xlu0 %2323
      %2325 = vrot.lane.b32.xlu0 %v1936, 96
      %v2326 = vpop.permute.xlu0 %2325
      %2327 = vrot.lane.b32.xlu0 %v1948, 96
      %v2328 = vpop.permute.xlu0 %2327
      %2329 = vrot.lane.b32.xlu0 %v1960, 96
      %v2330 = vpop.permute.xlu0 %2329
      %2331 = vrot.lane.b32.xlu0 %v1972, 96
      %v2332 = vpop.permute.xlu0 %2331
      %2333 = vrot.lane.b32.xlu0 %v1984, 96
      %v2334 = vpop.permute.xlu0 %2333
      %2335 = vrot.lane.b32.xlu0 %v1996, 96
      %v2336 = vpop.permute.xlu0 %2335
      %2337 = vrot.lane.b32.xlu0 %v2008, 96
      %v2338 = vpop.permute.xlu0 %2337
      %2339 = vrot.lane.b32.xlu0 %v2020, 96
      %v2340 = vpop.permute.xlu0 %2339
      %2341 = vrot.lane.b32.xlu0 %v2032, 96
      %v2342 = vpop.permute.xlu0 %2341
      %2343 = vrot.lane.b32.xlu0 %v2044, 96
      %v2344 = vpop.permute.xlu0 %2343
      %2345 = vrot.lane.b32.xlu0 %v2056, 96
      %v2346 = vpop.permute.xlu0 %2345
      %2347 = vrot.lane.b32.xlu0 %v2068, 96
      %v2348 = vpop.permute.xlu0 %2347
      %2349 = vrot.lane.b32.xlu0 %v2252, 96
      %v2350 = vpop.permute.xlu0 %2349
      %2351 = vrot.lane.b32.xlu0 %v579, 96
      %v2352 = vpop.permute.xlu0 %2351
      %v2354 = vsel %vm1343, 0, %v2070
      %v2356 = vsel %vm1343, %v1857, %v2072
      %v2358 = vsel %vm1343, %v1858, %v2074
      %v2360 = vsel %vm1343, %v1859, %v2076
      %v2362 = vsel %vm1343, %v1860, %v2078
      %v2364 = vsel %vm1343, %v1861, %v2080
      %v2366 = vsel %vm1343, %v1862, %v2082
      %v2368 = vsel %vm1343, %v1863, %v2084
      %v2370 = vsel %vm1343, %v1864, %v2086
      %v2372 = vsel %vm1343, %v1865, %v2088
      %v2374 = vsel %vm1343, %v1866, %v2090
      %v2376 = vsel %vm1343, %v1867, %v2092
      %v2378 = vsel %vm1343, %v1868, %v2094
      %v2380 = vsel %vm1343, %v1869, %v2096
      %v2382 = vsel %vm1343, %v1870, %v2098
      %v2384 = vsel %vm1343, %v1871, %v2100
      %vm2385 = vcmask 523264
      %v2387 = vsel %vm2385, %v2354, %v2177
      %v2389 = vsel %vm2385, %v2356, %v2179
      %v2391 = vsel %vm2385, %v2358, %v2181
      %v2393 = vsel %vm2385, %v2360, %v2183
      %v2395 = vsel %vm2385, %v2362, %v2185
      %v2397 = vsel %vm2385, %v2364, %v2187
      %v2399 = vsel %vm2385, %v2366, %v2189
      %v2401 = vsel %vm2385, %v2368, %v2191
      %v2403 = vsel %vm2385, %v2370, %v2193
      %v2405 = vsel %vm2385, %v2372, %v2195
      %v2407 = vsel %vm2385, %v2374, %v2197
      %v2409 = vsel %vm2385, %v2376, %v2199
      %v2411 = vsel %vm2385, %v2378, %v2201
      %v2413 = vsel %vm2385, %v2380, %v2203
      %v2415 = vsel %vm2385, %v2382, %v2205
      %v2417 = vsel %vm2385, %v2384, %v2207
      %vm2418 = vcmask 785408
      %v2420 = vsel %vm2418, %v2387, %v2210
      %v2423 = vsel %vm2418, %v2389, %v2212
      %v2426 = vsel %vm2418, %v2391, %v2214
      %v2429 = vsel %vm2418, %v2393, %v2216
      %v2432 = vsel %vm2418, %v2395, %v2218
      %v2435 = vsel %vm2418, %v2397, %v2220
      %v2438 = vsel %vm2418, %v2399, %v2222
      %v2441 = vsel %vm2418, %v2401, %v2224
      %v2444 = vsel %vm2418, %v2403, %v2226
      %v2447 = vsel %vm2418, %v2405, %v2228
      %v2450 = vsel %vm2418, %v2407, %v2230
      %v2453 = vsel %vm2418, %v2409, %v2232
      %v2456 = vsel %vm2418, %v2411, %v2234
      %v2459 = vsel %vm2418, %v2413, %v2236
      %v2462 = vsel %vm2418, %v2415, %v2238
      %v2465 = vsel %vm2418, %v2417, %v2240
      %v2469 = vsel %vm1343, %v1900, %v2258
      %v2472 = vsel %vm1343, %v1912, %v2260
      %v2475 = vsel %vm1343, %v1924, %v2262
      %v2478 = vsel %vm1343, %v1936, %v2264
      %v2481 = vsel %vm1343, %v1948, %v2266
      %v2484 = vsel %vm1343, %v1960, %v2268
      %v2487 = vsel %vm1343, %v1972, %v2270
      %v2490 = vsel %vm1343, %v1984, %v2272
      %v2493 = vsel %vm1343, %v1996, %v2274
      %v2496 = vsel %vm1343, %v2008, %v2276
      %v2499 = vsel %vm1343, %v2020, %v2278
      %v2502 = vsel %vm1343, %v2032, %v2280
      %v2505 = vsel %vm1343, %v2044, %v2282
      %v2508 = vsel %vm1343, %v2056, %v2284
      %v2511 = vsel %vm1343, %v2068, %v2286
      %v2514 = vsel %vm1343, %v2252, %v2288
      %v2516 = vsel %vm2385, %v2469, %v2290
      %v2518 = vsel %vm2385, %v2472, %v2292
      %v2520 = vsel %vm2385, %v2475, %v2294
      %v2522 = vsel %vm2385, %v2478, %v2296
      %v2524 = vsel %vm2385, %v2481, %v2298
      %v2526 = vsel %vm2385, %v2484, %v2300
      %v2528 = vsel %vm2385, %v2487, %v2302
      %v2530 = vsel %vm2385, %v2490, %v2304
      %v2532 = vsel %vm2385, %v2493, %v2306
      %v2534 = vsel %vm2385, %v2496, %v2308
      %v2536 = vsel %vm2385, %v2499, %v2310
      %v2538 = vsel %vm2385, %v2502, %v2312
      %v2540 = vsel %vm2385, %v2505, %v2314
      %v2542 = vsel %vm2385, %v2508, %v2316
      %v2544 = vsel %vm2385, %v2511, %v2318
      %v2546 = vsel %vm2385, %v2514, %v2320
      %v2548 = vsel %vm2418, %v2516, %v2322
      %v2551 = vsel %vm2418, %v2518, %v2324
      %v2554 = vsel %vm2418, %v2520, %v2326
      %v2557 = vsel %vm2418, %v2522, %v2328
      %v2560 = vsel %vm2418, %v2524, %v2330
      %v2563 = vsel %vm2418, %v2526, %v2332
      %v2566 = vsel %vm2418, %v2528, %v2334
      %v2569 = vsel %vm2418, %v2530, %v2336
      %v2572 = vsel %vm2418, %v2532, %v2338
      %v2575 = vsel %vm2418, %v2534, %v2340
      %v2578 = vsel %vm2418, %v2536, %v2342
      %v2581 = vsel %vm2418, %v2538, %v2344
      %v2584 = vsel %vm2418, %v2540, %v2346
      %v2587 = vsel %vm2418, %v2542, %v2348
      %v2590 = vsel %vm2418, %v2544, %v2350
      %v2593 = vsel %vm2418, %v2546, %v2352
      %v2595 = vld [vmem:[%s3] sm:$0xf]
      %v2596 = vld [vmem:[%s3 + $0x4] sm:$0xf]
      %v2597 = vld [vmem:[%s3 + $0x8] sm:$0xf]
      %v2598 = vld [vmem:[%s3 + $0xc] sm:$0xf]
      %v2599 = vld [vmem:[%s3 + $0x10] sm:$0xf]
      %v2600 = vld [vmem:[%s3 + $0x14] sm:$0xf]
      %v2601 = vld [vmem:[%s3 + $0x18] sm:$0xf]
      %v2602 = vld [vmem:[%s3 + $0x1c] sm:$0xf]
      %v2603 = vld [vmem:[%s3 + $0x20] sm:$0xf]
      %v2604 = vld [vmem:[%s3 + $0x24] sm:$0xf]
      %v2605 = vld [vmem:[%s3 + $0x28] sm:$0xf]
      %v2606 = vld [vmem:[%s3 + $0x2c] sm:$0xf]
      %v2607 = vld [vmem:[%s3 + $0x30] sm:$0xf]
      %v2608 = vld [vmem:[%s3 + $0x34] sm:$0xf]
      %v2609 = vld [vmem:[%s3 + $0x38] sm:$0xf]
      %v2610 = vld [vmem:[%s3 + $0x3c] sm:$0xf]
      %v2611 = vld [vmem:[%s3 + $0x40] sm:$0xf]
      %v2612 = vld [vmem:[%s3 + $0x44] sm:$0xf]
      %v2613 = vld [vmem:[%s3 + $0x48] sm:$0xf]
      %v2614 = vld [vmem:[%s3 + $0x4c] sm:$0xf]
      %v2615 = vld [vmem:[%s3 + $0x50] sm:$0xf]
      %v2616 = vld [vmem:[%s3 + $0x54] sm:$0xf]
      %v2617 = vld [vmem:[%s3 + $0x58] sm:$0xf]
      %v2618 = vld [vmem:[%s3 + $0x5c] sm:$0xf]
      %v2619 = vld [vmem:[%s3 + $0x60] sm:$0xf]
      %v2620 = vld [vmem:[%s3 + $0x64] sm:$0xf]
      %v2621 = vld [vmem:[%s3 + $0x68] sm:$0xf]
      %v2622 = vld [vmem:[%s3 + $0x6c] sm:$0xf]
      %v2623 = vld [vmem:[%s3 + $0x70] sm:$0xf]
      %v2624 = vld [vmem:[%s3 + $0x74] sm:$0xf]
      %v2625 = vld [vmem:[%s3 + $0x78] sm:$0xf]
      %v2626 = vld [vmem:[%s3 + $0x7c] sm:$0xf]
      %v2627 = vld [vmem:[%s3 + $0x80] sm:$0xf]
      %v2628 = vld [vmem:[%s3 + $0x84] sm:$0xf]
      %v2629 = vld [vmem:[%s3 + $0x88] sm:$0xf]
      %v2630 = vld [vmem:[%s3 + $0x8c] sm:$0xf]
      %v2631 = vld [vmem:[%s4] sm:$0x1]
      %v2633 = vlaneseq
      %v2634 = vshrl.u32 %v2633, 7
      %v2635 = vsub.s32 0, %v2634
      %v2636 = vrot.slane %v2631, %v2635
      %v2674 = vunpack.c.l.b16 %v2595
      %v2675 = vunpack.c.l.b16 %v2596
      %v2676 = vunpack.c.l.b16 %v2597
      %v2677 = vunpack.c.l.b16 %v2598
      %v2678 = vunpack.c.l.b16 %v2599
      %v2679 = vunpack.c.l.b16 %v2600
      %v2680 = vunpack.c.l.b16 %v2601
      %v2681 = vunpack.c.l.b16 %v2602
      %v2682 = vunpack.c.l.b16 %v2603
      %v2683 = vunpack.c.l.b16 %v2604
      %v2684 = vunpack.c.l.b16 %v2605
      %v2685 = vunpack.c.l.b16 %v2606
      %v2686 = vunpack.c.l.b16 %v2607
      %v2687 = vunpack.c.l.b16 %v2608
      %v2688 = vunpack.c.l.b16 %v2609
      %v2689 = vunpack.c.l.b16 %v2610
      %v2690 = vunpack.c.l.b16 %v2611
      %v2691 = vunpack.c.l.b16 %v2612
      %v2692 = vunpack.c.l.b16 %v2613
      %v2693 = vunpack.c.l.b16 %v2614
      %v2694 = vunpack.c.l.b16 %v2615
      %v2695 = vunpack.c.l.b16 %v2616
      %v2696 = vunpack.c.l.b16 %v2617
      %v2697 = vunpack.c.l.b16 %v2618
      %v2698 = vunpack.c.l.b16 %v2619
      %v2699 = vunpack.c.l.b16 %v2620
      %v2700 = vunpack.c.l.b16 %v2621
      %v2701 = vunpack.c.l.b16 %v2622
      %v2702 = vunpack.c.l.b16 %v2623
      %v2703 = vunpack.c.l.b16 %v2624
      %v2704 = vunpack.c.l.b16 %v2625
      %v2705 = vunpack.c.l.b16 %v2626
      %v2706 = vunpack.c.l.b16 %v2627
      %v2707 = vunpack.c.l.b16 %v2628
      %v2708 = vunpack.c.l.b16 %v2629
      %v2709 = vunpack.c.l.b16 %v2630
      %v2710 = vpack.c.b16 %v2675, %v2674
      %v2711 = vpack.c.b16 %v2677, %v2676
      %v2712 = vpack.c.b16 %v2679, %v2678
      %v2713 = vpack.c.b16 %v2681, %v2680
      %v2714 = vpack.c.b16 %v2683, %v2682
      %v2715 = vpack.c.b16 %v2685, %v2684
      %v2716 = vpack.c.b16 %v2687, %v2686
      %v2717 = vpack.c.b16 %v2689, %v2688
      %v2718 = vpack.c.b16 %v2691, %v2690
      %v2719 = vpack.c.b16 %v2693, %v2692
      %v2720 = vpack.c.b16 %v2695, %v2694
      %v2721 = vpack.c.b16 %v2697, %v2696
      %v2722 = vpack.c.b16 %v2699, %v2698
      %v2723 = vpack.c.b16 %v2701, %v2700
      %v2724 = vpack.c.b16 %v2703, %v2702
      %v2725 = vpack.c.b16 %v2705, %v2704
      %v2726 = vpack.c.b16 %v2707, %v2706
      %v2727 = vpack.c.b16 %v2709, %v2708
      %v2747 = vsel %vm1343, %v2136, 0
      %v2750 = vsel %vm1343, %v2139, 0
      %v2753 = vsel %vm1343, %v2142, 0
      %v2756 = vsel %vm1343, %v2145, 0
      %v2759 = vsel %vm1343, %v2148, 0
      %v2762 = vsel %vm1343, %v2151, 0
      %v2765 = vsel %vm1343, %v2154, 0
      %v2768 = vsel %vm1343, %v2157, 0
      %v2771 = vsel %vm1343, %v2160, 0
      %v2774 = vsel %vm1343, %v2163, 0
      %v2777 = vsel %vm1343, %v2166, 0
      %v2780 = vsel %vm1343, %v2169, 0
      %v2783 = vsel %vm1343, %v2172, 0
      %v2786 = vsel %vm1343, %v2175, 0
      %v2789 = vsel %vm1343, %v2256, 0
      %v2792 = vsel %vm1343, %v825, 0
      %2794 = vmatprep.subr.bf16.mxu0 0
      %2795 = vmatpush1.bf16.msra.mxu0 %v2710
      %2796 = vmatprep.subr.bf16.mxu0 0
      %2797 = vmatpush1.bf16.msra.mxu0 %v2711
      %2798 = vmatprep.subr.bf16.mxu0 0
      %2799 = vmatpush1.bf16.msra.mxu0 %v2712
      %2800 = vmatprep.subr.bf16.mxu0 0
      %2801 = vmatpush1.bf16.msra.mxu0 %v2713
      %2802 = vmatprep.subr.bf16.mxu0 0
      %2803 = vmatpush1.bf16.msra.mxu0 %v2714
      %2804 = vmatprep.subr.bf16.mxu0 0
      %2805 = vmatpush1.bf16.msra.mxu0 %v2715
      %2806 = vmatprep.subr.bf16.mxu0 0
      %2807 = vmatpush1.bf16.msra.mxu0 %v2716
      %2808 = vmatprep.subr.bf16.mxu0 0
      %2809 = vmatpush1.bf16.msra.mxu0 %v2717
      %2810 = vmatprep.subr.bf16.mxu0 0
      %2811 = vmatpush1.bf16.msra.mxu0 %v2718
      %2812 = vmatprep.subr.bf16.mxu0 0
      %2813 = vmatpush1.bf16.msra.mxu0 %v2719
      %2814 = vmatprep.subr.bf16.mxu0 0
      %2815 = vmatpush1.bf16.msra.mxu0 %v2720
      %2816 = vmatprep.subr.bf16.mxu0 0
      %2817 = vmatpush1.bf16.msra.mxu0 %v2721
      %2818 = vmatprep.subr.bf16.mxu0 0
      %2819 = vmatpush1.bf16.msra.mxu0 %v2722
      %2820 = vmatprep.subr.bf16.mxu0 0
      %2821 = vmatpush1.bf16.msra.mxu0 %v2723
      %2822 = vmatprep.subr.bf16.mxu0 0
      %2823 = vmatpush1.bf16.msra.mxu0 %v2724
      %2824 = vmatprep.subr.bf16.mxu0 0
      %2825 = vmatpush1.bf16.msra.mxu0 %v2725
      %2826 = vmatprep.mubr.bf16.mxu0 %v2548
      %2827 = vmatmul.mubr.bf16.gmra.mrb[0].mxu0 %v2420
      %v2828 = vpop.f32.mrb[0].mxu0
      %v2829 = vadd.f32 %v2636, %v2828
      %v2830 = vpop.f32.mrb[0].mxu0
      %v2831 = vpop.f32.mrb[0].mxu0
      %v2832 = vadd.f32 %v2636, %v2831
      %v2833 = vpop.f32.mrb[0].mxu0
      %2834 = vmatprep.mubr.bf16.mxu0 %v2551
      %2835 = vmatmul.mubr.bf16.gmra.mrb[0].mxu0 %v2423
      %v2836 = vpop.f32.mrb[0].mxu0
      %v2837 = vadd.f32 %v2636, %v2836
      %v2838 = vpop.f32.mrb[0].mxu0
      %v2839 = vpop.f32.mrb[0].mxu0
      %v2840 = vadd.f32 %v2636, %v2839
      %v2841 = vpop.f32.mrb[0].mxu0
      %2842 = vmatprep.mubr.bf16.mxu0 %v2554
      %2843 = vmatmul.mubr.bf16.gmra.mrb[0].mxu0 %v2426
      %v2844 = vpop.f32.mrb[0].mxu0
      %v2845 = vadd.f32 %v2636, %v2844
      %v2846 = vpop.f32.mrb[0].mxu0
      %v2847 = vpop.f32.mrb[0].mxu0
      %v2848 = vadd.f32 %v2636, %v2847
      %v2849 = vpop.f32.mrb[0].mxu0
      %2850 = vmatprep.mubr.bf16.mxu0 %v2557
      %2851 = vmatmul.mubr.bf16.gmra.mrb[0].mxu0 %v2429
      %v2852 = vpop.f32.mrb[0].mxu0
      %v2853 = vadd.f32 %v2636, %v2852
      %v2854 = vpop.f32.mrb[0].mxu0
      %v2855 = vpop.f32.mrb[0].mxu0
      %v2856 = vadd.f32 %v2636, %v2855
      %v2857 = vpop.f32.mrb[0].mxu0
      %2858 = vmatprep.mubr.bf16.mxu0 %v2560
      %2859 = vmatmul.mubr.bf16.gmra.mrb[0].mxu0 %v2432
      %v2860 = vpop.f32.mrb[0].mxu0
      %v2861 = vadd.f32 %v2636, %v2860
      %v2862 = vpop.f32.mrb[0].mxu0
      %v2863 = vpop.f32.mrb[0].mxu0
      %v2864 = vadd.f32 %v2636, %v2863
      %v2865 = vpop.f32.mrb[0].mxu0
      %2866 = vmatprep.mubr.bf16.mxu0 %v2563
      %2867 = vmatmul.mubr.bf16.gmra.mrb[0].mxu0 %v2435
      %v2868 = vpop.f32.mrb[0].mxu0
      %v2869 = vadd.f32 %v2636, %v2868
      %v2870 = vpop.f32.mrb[0].mxu0
      %v2871 = vpop.f32.mrb[0].mxu0
      %v2872 = vadd.f32 %v2636, %v2871
      %v2873 = vpop.f32.mrb[0].mxu0
      %2874 = vmatprep.mubr.bf16.mxu0 %v2566
      %2875 = vmatmul.mubr.bf16.gmra.mrb[0].mxu0 %v2438
      %v2876 = vpop.f32.mrb[0].mxu0
      %v2877 = vadd.f32 %v2636, %v2876
      %v2878 = vpop.f32.mrb[0].mxu0
      %v2879 = vpop.f32.mrb[0].mxu0
      %v2880 = vadd.f32 %v2636, %v2879
      %v2881 = vpop.f32.mrb[0].mxu0
      %2882 = vmatprep.mubr.bf16.mxu0 %v2569
      %2883 = vmatmul.mubr.bf16.gmra.mrb[0].mxu0 %v2441
      %v2884 = vpop.f32.mrb[0].mxu0
      %v2885 = vadd.f32 %v2636, %v2884
      %v2886 = vpop.f32.mrb[0].mxu0
      %v2887 = vpop.f32.mrb[0].mxu0
      %v2888 = vadd.f32 %v2636, %v2887
      %v2889 = vpop.f32.mrb[0].mxu0
      %2890 = vmatprep.mubr.bf16.mxu0 %v2572
      %2891 = vmatmul.mubr.bf16.gmra.mrb[0].mxu0 %v2444
      %v2892 = vpop.f32.mrb[0].mxu0
      %v2893 = vadd.f32 %v2636, %v2892
      %v2894 = vpop.f32.mrb[0].mxu0
      %v2895 = vpop.f32.mrb[0].mxu0
      %v2896 = vadd.f32 %v2636, %v2895
      %v2897 = vpop.f32.mrb[0].mxu0
      %2898 = vmatprep.mubr.bf16.mxu0 %v2575
      %2899 = vmatmul.mubr.bf16.gmra.mrb[0].mxu0 %v2447
      %v2900 = vpop.f32.mrb[0].mxu0
      %v2901 = vadd.f32 %v2636, %v2900
      %v2902 = vpop.f32.mrb[0].mxu0
      %v2903 = vpop.f32.mrb[0].mxu0
      %v2904 = vadd.f32 %v2636, %v2903
      %v2905 = vpop.f32.mrb[0].mxu0
      %2906 = vmatprep.mubr.bf16.mxu0 %v2578
      %2907 = vmatmul.mubr.bf16.gmra.mrb[0].mxu0 %v2450
      %v2908 = vpop.f32.mrb[0].mxu0
      %v2909 = vadd.f32 %v2636, %v2908
      %v2910 = vpop.f32.mrb[0].mxu0
      %v2911 = vpop.f32.mrb[0].mxu0
      %v2912 = vadd.f32 %v2636, %v2911
      %v2913 = vpop.f32.mrb[0].mxu0
      %2914 = vmatprep.mubr.bf16.mxu0 %v2581
      %2915 = vmatmul.mubr.bf16.gmra.mrb[0].mxu0 %v2453
      %v2916 = vpop.f32.mrb[0].mxu0
      %v2917 = vadd.f32 %v2636, %v2916
      %v2918 = vpop.f32.mrb[0].mxu0
      %v2919 = vpop.f32.mrb[0].mxu0
      %v2920 = vadd.f32 %v2636, %v2919
      %v2921 = vpop.f32.mrb[0].mxu0
      %2922 = vmatprep.mubr.bf16.mxu0 %v2584
      %2923 = vmatmul.mubr.bf16.gmra.mrb[0].mxu0 %v2456
      %v2924 = vpop.f32.mrb[0].mxu0
      %v2925 = vadd.f32 %v2636, %v2924
      %v2926 = vpop.f32.mrb[0].mxu0
      %v2927 = vpop.f32.mrb[0].mxu0
      %v2928 = vadd.f32 %v2636, %v2927
      %v2929 = vpop.f32.mrb[0].mxu0
      %2930 = vmatprep.mubr.bf16.mxu0 %v2587
      %2931 = vmatmul.mubr.bf16.gmra.mrb[0].mxu0 %v2459
      %v2932 = vpop.f32.mrb[0].mxu0
      %v2933 = vadd.f32 %v2636, %v2932
      %v2934 = vpop.f32.mrb[0].mxu0
      %v2935 = vpop.f32.mrb[0].mxu0
      %v2936 = vadd.f32 %v2636, %v2935
      %v2937 = vpop.f32.mrb[0].mxu0
      %2938 = vmatprep.mubr.bf16.mxu0 %v2590
      %2939 = vmatmul.mubr.bf16.gmra.mrb[0].mxu0 %v2462
      %v2940 = vpop.f32.mrb[0].mxu0
      %v2941 = vadd.f32 %v2636, %v2940
      %v2942 = vpop.f32.mrb[0].mxu0
      %v2943 = vpop.f32.mrb[0].mxu0
      %v2944 = vadd.f32 %v2636, %v2943
      %v2945 = vpop.f32.mrb[0].mxu0
      %2946 = vmatprep.mubr.bf16.mxu0 %v2593
      %2947 = vmatmul.mubr.bf16.gmra.mrb[0].mxu0 %v2465
      %v2948 = vpop.f32.mrb[0].mxu0
      %v2949 = vadd.f32 %v2636, %v2948
      %v2950 = vpop.f32.mrb[0].mxu0
      %v2951 = vpop.f32.mrb[0].mxu0
      %v2952 = vadd.f32 %v2636, %v2951
      %v2953 = vpop.f32.mrb[0].mxu0
      %2954 = vdwg.mxu0
      %2955 = vmatprep.subr.bf16.mxu0 0
      %2956 = vmatpush1.bf16.msra.mxu0 %v2726
      %2957 = vmatprep.subr.bf16.mxu0 0
      %2958 = vmatpush1.bf16.msra.mxu0 %v2727
      %2959 = vmatprep.subr.bf16.mxu0 0
      %2960 = vmatpush1.bf16.msra.mxu0 0
      %2961 = vmatprep.subr.bf16.mxu0 0
      %2962 = vmatpush1.bf16.msra.mxu0 0
      %2963 = vmatprep.subr.bf16.mxu0 0
      %2964 = vmatpush1.bf16.msra.mxu0 0
      %2965 = vmatprep.subr.bf16.mxu0 0
      %2966 = vmatpush1.bf16.msra.mxu0 0
      %2967 = vmatprep.subr.bf16.mxu0 0
      %2968 = vmatpush1.bf16.msra.mxu0 0
      %2969 = vmatprep.subr.bf16.mxu0 0
      %2970 = vmatpush1.bf16.msra.mxu0 0
      %2971 = vmatprep.subr.bf16.mxu0 0
      %2972 = vmatpush1.bf16.msra.mxu0 0
      %2973 = vmatprep.subr.bf16.mxu0 0
      %2974 = vmatpush1.bf16.msra.mxu0 0
      %2975 = vmatprep.subr.bf16.mxu0 0
      %2976 = vmatpush1.bf16.msra.mxu0 0
      %2977 = vmatprep.subr.bf16.mxu0 0
      %2978 = vmatpush1.bf16.msra.mxu0 0
      %2979 = vmatprep.subr.bf16.mxu0 0
      %2980 = vmatpush1.bf16.msra.mxu0 0
      %2981 = vmatprep.subr.bf16.mxu0 0
      %2982 = vmatpush1.bf16.msra.mxu0 0
      %2983 = vmatprep.subr.bf16.mxu0 0
      %2984 = vmatpush1.bf16.msra.mxu0 0
      %2985 = vmatprep.subr.bf16.mxu0 0
      %2986 = vmatpush1.bf16.msra.mxu0 0
      %2987 = vmatprep.mubr.bf16.mxu0 0
      %2988 = vmatmul.mubr.bf16.gmra.mrb[0].mxu0 %v2747
      %v2989 = vpop.f32.mrb[0].mxu0
      %v2990 = vadd.f32 %v2829, %v2989
      %v2991 = vpop.f32.mrb[0].mxu0
      %v2992 = vpop.f32.mrb[0].mxu0
      %v2993 = vadd.f32 %v2832, %v2992
      %v2994 = vpop.f32.mrb[0].mxu0
      %2995 = vmatprep.mubr.bf16.mxu0 0
      %2996 = vmatmul.mubr.bf16.gmra.mrb[0].mxu0 %v2750
      %v2997 = vpop.f32.mrb[0].mxu0
      %v2998 = vadd.f32 %v2837, %v2997
      %v2999 = vpop.f32.mrb[0].mxu0
      %v3000 = vpop.f32.mrb[0].mxu0
      %v3001 = vadd.f32 %v2840, %v3000
      %v3002 = vpop.f32.mrb[0].mxu0
      %3003 = vmatprep.mubr.bf16.mxu0 0
      %3004 = vmatmul.mubr.bf16.gmra.mrb[0].mxu0 %v2753
      %v3005 = vpop.f32.mrb[0].mxu0
      %v3006 = vadd.f32 %v2845, %v3005
      %v3007 = vpop.f32.mrb[0].mxu0
      %v3008 = vpop.f32.mrb[0].mxu0
      %v3009 = vadd.f32 %v2848, %v3008
      %v3010 = vpop.f32.mrb[0].mxu0
      %3011 = vmatprep.mubr.bf16.mxu0 0
      %3012 = vmatmul.mubr.bf16.gmra.mrb[0].mxu0 %v2756
      %v3013 = vpop.f32.mrb[0].mxu0
      %v3014 = vadd.f32 %v2853, %v3013
      %v3015 = vpop.f32.mrb[0].mxu0
      %v3016 = vpop.f32.mrb[0].mxu0
      %v3017 = vadd.f32 %v2856, %v3016
      %v3018 = vpop.f32.mrb[0].mxu0
      %3019 = vmatprep.mubr.bf16.mxu0 0
      %3020 = vmatmul.mubr.bf16.gmra.mrb[0].mxu0 %v2759
      %v3021 = vpop.f32.mrb[0].mxu0
      %v3022 = vadd.f32 %v2861, %v3021
      %v3023 = vpop.f32.mrb[0].mxu0
      %v3024 = vpop.f32.mrb[0].mxu0
      %v3025 = vadd.f32 %v2864, %v3024
      %v3026 = vpop.f32.mrb[0].mxu0
      %3027 = vmatprep.mubr.bf16.mxu0 0
      %3028 = vmatmul.mubr.bf16.gmra.mrb[0].mxu0 %v2762
      %v3029 = vpop.f32.mrb[0].mxu0
      %v3030 = vadd.f32 %v2869, %v3029
      %v3031 = vpop.f32.mrb[0].mxu0
      %v3032 = vpop.f32.mrb[0].mxu0
      %v3033 = vadd.f32 %v2872, %v3032
      %v3034 = vpop.f32.mrb[0].mxu0
      %3035 = vmatprep.mubr.bf16.mxu0 0
      %3036 = vmatmul.mubr.bf16.gmra.mrb[0].mxu0 %v2765
      %v3037 = vpop.f32.mrb[0].mxu0
      %v3038 = vadd.f32 %v2877, %v3037
      %v3039 = vpop.f32.mrb[0].mxu0
      %v3040 = vpop.f32.mrb[0].mxu0
      %v3041 = vadd.f32 %v2880, %v3040
      %v3042 = vpop.f32.mrb[0].mxu0
      %3043 = vmatprep.mubr.bf16.mxu0 0
      %3044 = vmatmul.mubr.bf16.gmra.mrb[0].mxu0 %v2768
      %v3045 = vpop.f32.mrb[0].mxu0
      %v3046 = vadd.f32 %v2885, %v3045
      %v3047 = vpop.f32.mrb[0].mxu0
      %v3048 = vpop.f32.mrb[0].mxu0
      %v3049 = vadd.f32 %v2888, %v3048
      %v3050 = vpop.f32.mrb[0].mxu0
      %3051 = vmatprep.mubr.bf16.mxu0 0
      %3052 = vmatmul.mubr.bf16.gmra.mrb[0].mxu0 %v2771
      %v3053 = vpop.f32.mrb[0].mxu0
      %v3054 = vadd.f32 %v2893, %v3053
      %v3055 = vpop.f32.mrb[0].mxu0
      %v3056 = vpop.f32.mrb[0].mxu0
      %v3057 = vadd.f32 %v2896, %v3056
      %v3058 = vpop.f32.mrb[0].mxu0
      %3059 = vmatprep.mubr.bf16.mxu0 0
      %3060 = vmatmul.mubr.bf16.gmra.mrb[0].mxu0 %v2774
      %v3061 = vpop.f32.mrb[0].mxu0
      %v3062 = vadd.f32 %v2901, %v3061
      %v3063 = vpop.f32.mrb[0].mxu0
      %v3064 = vpop.f32.mrb[0].mxu0
      %v3065 = vadd.f32 %v2904, %v3064
      %v3066 = vpop.f32.mrb[0].mxu0
      %3067 = vmatprep.mubr.bf16.mxu0 0
      %3068 = vmatmul.mubr.bf16.gmra.mrb[0].mxu0 %v2777
      %v3069 = vpop.f32.mrb[0].mxu0
      %v3070 = vadd.f32 %v2909, %v3069
      %v3071 = vpop.f32.mrb[0].mxu0
      %v3072 = vpop.f32.mrb[0].mxu0
      %v3073 = vadd.f32 %v2912, %v3072
      %v3074 = vpop.f32.mrb[0].mxu0
      %3075 = vmatprep.mubr.bf16.mxu0 0
      %3076 = vmatmul.mubr.bf16.gmra.mrb[0].mxu0 %v2780
      %v3077 = vpop.f32.mrb[0].mxu0
      %v3078 = vadd.f32 %v2917, %v3077
      %v3079 = vpop.f32.mrb[0].mxu0
      %v3080 = vpop.f32.mrb[0].mxu0
      %v3081 = vadd.f32 %v2920, %v3080
      %v3082 = vpop.f32.mrb[0].mxu0
      %3083 = vmatprep.mubr.bf16.mxu0 0
      %3084 = vmatmul.mubr.bf16.gmra.mrb[0].mxu0 %v2783
      %v3085 = vpop.f32.mrb[0].mxu0
      %v3086 = vadd.f32 %v2925, %v3085
      %v3087 = vpop.f32.mrb[0].mxu0
      %v3088 = vpop.f32.mrb[0].mxu0
      %v3089 = vadd.f32 %v2928, %v3088
      %v3090 = vpop.f32.mrb[0].mxu0
      %3091 = vmatprep.mubr.bf16.mxu0 0
      %3092 = vmatmul.mubr.bf16.gmra.mrb[0].mxu0 %v2786
      %v3093 = vpop.f32.mrb[0].mxu0
      %v3094 = vadd.f32 %v2933, %v3093
      %v3095 = vpop.f32.mrb[0].mxu0
      %v3096 = vpop.f32.mrb[0].mxu0
      %v3097 = vadd.f32 %v2936, %v3096
      %v3098 = vpop.f32.mrb[0].mxu0
      %3099 = vmatprep.mubr.bf16.mxu0 0
      %3100 = vmatmul.mubr.bf16.gmra.mrb[0].mxu0 %v2789
      %v3101 = vpop.f32.mrb[0].mxu0
      %v3102 = vadd.f32 %v2941, %v3101
      %v3103 = vpop.f32.mrb[0].mxu0
      %v3104 = vpop.f32.mrb[0].mxu0
      %v3105 = vadd.f32 %v2944, %v3104
      %v3106 = vpop.f32.mrb[0].mxu0
      %3107 = vmatprep.mubr.bf16.mxu0 0
      %3108 = vmatmul.mubr.bf16.gmra.mrb[0].mxu0 %v2792
      %v3109 = vpop.f32.mrb[0].mxu0
      %v3110 = vadd.f32 %v2949, %v3109
      %v3111 = vpop.f32.mrb[0].mxu0
      %v3112 = vpop.f32.mrb[0].mxu0
      %v3113 = vadd.f32 %v2952, %v3112
      %v3114 = vpop.f32.mrb[0].mxu0
      %3115 = vdwg.mxu0
      %vm3116 = vcmp.ge.f32.partialorder %v2990, 0.0
      %vm3117 = vcmp.ge.f32.partialorder %v2993, 0.0
      %vm3118 = vcmp.ge.f32.partialorder %v2998, 0.0
      %vm3119 = vcmp.ge.f32.partialorder %v3001, 0.0
      %vm3120 = vcmp.ge.f32.partialorder %v3006, 0.0
      %vm3121 = vcmp.ge.f32.partialorder %v3009, 0.0
      %vm3122 = vcmp.ge.f32.partialorder %v3014, 0.0
      %vm3123 = vcmp.ge.f32.partialorder %v3017, 0.0
      %vm3124 = vcmp.ge.f32.partialorder %v3022, 0.0
      %vm3125 = vcmp.ge.f32.partialorder %v3025, 0.0
      %vm3126 = vcmp.ge.f32.partialorder %v3030, 0.0
      %vm3127 = vcmp.ge.f32.partialorder %v3033, 0.0
      %vm3128 = vcmp.ge.f32.partialorder %v3038, 0.0
      %vm3129 = vcmp.ge.f32.partialorder %v3041, 0.0
      %vm3130 = vcmp.ge.f32.partialorder %v3046, 0.0
      %vm3131 = vcmp.ge.f32.partialorder %v3049, 0.0
      %vm3132 = vcmp.ge.f32.partialorder %v3054, 0.0
      %vm3133 = vcmp.ge.f32.partialorder %v3057, 0.0
      %vm3134 = vcmp.ge.f32.partialorder %v3062, 0.0
      %vm3135 = vcmp.ge.f32.partialorder %v3065, 0.0
      %vm3136 = vcmp.ge.f32.partialorder %v3070, 0.0
      %vm3137 = vcmp.ge.f32.partialorder %v3073, 0.0
      %vm3138 = vcmp.ge.f32.partialorder %v3078, 0.0
      %vm3139 = vcmp.ge.f32.partialorder %v3081, 0.0
      %vm3140 = vcmp.ge.f32.partialorder %v3086, 0.0
      %vm3141 = vcmp.ge.f32.partialorder %v3089, 0.0
      %vm3142 = vcmp.ge.f32.partialorder %v3094, 0.0
      %vm3143 = vcmp.ge.f32.partialorder %v3097, 0.0
      %vm3144 = vcmp.ge.f32.partialorder %v3102, 0.0
      %vm3145 = vcmp.ge.f32.partialorder %v3105, 0.0
      %vm3146 = vcmp.ge.f32.partialorder %v3110, 0.0
      %vm3147 = vcmp.ge.f32.partialorder %v3113, 0.0
      %v3148 = vmul.f32 %v2990, 0.01
      %v3149 = vmul.f32 %v2993, 0.01
      %v3150 = vmul.f32 %v2998, 0.01
      %v3151 = vmul.f32 %v3001, 0.01
      %v3152 = vmul.f32 %v3006, 0.01
      %v3153 = vmul.f32 %v3009, 0.01
      %v3154 = vmul.f32 %v3014, 0.01
      %v3155 = vmul.f32 %v3017, 0.01
      %v3156 = vmul.f32 %v3022, 0.01
      %v3157 = vmul.f32 %v3025, 0.01
      %v3158 = vmul.f32 %v3030, 0.01
      %v3159 = vmul.f32 %v3033, 0.01
      %v3160 = vmul.f32 %v3038, 0.01
      %v3161 = vmul.f32 %v3041, 0.01
      %v3162 = vmul.f32 %v3046, 0.01
      %v3163 = vmul.f32 %v3049, 0.01
      %v3164 = vmul.f32 %v3054, 0.01
      %v3165 = vmul.f32 %v3057, 0.01
      %v3166 = vmul.f32 %v3062, 0.01
      %v3167 = vmul.f32 %v3065, 0.01
      %v3168 = vmul.f32 %v3070, 0.01
      %v3169 = vmul.f32 %v3073, 0.01
      %v3170 = vmul.f32 %v3078, 0.01
      %v3171 = vmul.f32 %v3081, 0.01
      %v3172 = vmul.f32 %v3086, 0.01
      %v3173 = vmul.f32 %v3089, 0.01
      %v3174 = vmul.f32 %v3094, 0.01
      %v3175 = vmul.f32 %v3097, 0.01
      %v3176 = vmul.f32 %v3102, 0.01
      %v3177 = vmul.f32 %v3105, 0.01
      %v3178 = vmul.f32 %v3110, 0.01
      %v3179 = vmul.f32 %v3113, 0.01
      %v3180 = vsel %vm3116, %v2990, %v3148
      %v3181 = vsel %vm3117, %v2993, %v3149
      %v3182 = vsel %vm3118, %v2998, %v3150
      %v3183 = vsel %vm3119, %v3001, %v3151
      %v3184 = vsel %vm3120, %v3006, %v3152
      %v3185 = vsel %vm3121, %v3009, %v3153
      %v3186 = vsel %vm3122, %v3014, %v3154
      %v3187 = vsel %vm3123, %v3017, %v3155
      %v3188 = vsel %vm3124, %v3022, %v3156
      %v3189 = vsel %vm3125, %v3025, %v3157
      %v3190 = vsel %vm3126, %v3030, %v3158
      %v3191 = vsel %vm3127, %v3033, %v3159
      %v3192 = vsel %vm3128, %v3038, %v3160
      %v3193 = vsel %vm3129, %v3041, %v3161
      %v3194 = vsel %vm3130, %v3046, %v3162
      %v3195 = vsel %vm3131, %v3049, %v3163
      %v3196 = vsel %vm3132, %v3054, %v3164
      %v3197 = vsel %vm3133, %v3057, %v3165
      %v3198 = vsel %vm3134, %v3062, %v3166
      %v3199 = vsel %vm3135, %v3065, %v3167
      %v3200 = vsel %vm3136, %v3070, %v3168
      %v3201 = vsel %vm3137, %v3073, %v3169
      %v3202 = vsel %vm3138, %v3078, %v3170
      %v3203 = vsel %vm3139, %v3081, %v3171
      %v3204 = vsel %vm3140, %v3086, %v3172
      %v3205 = vsel %vm3141, %v3089, %v3173
      %v3206 = vsel %vm3142, %v3094, %v3174
      %v3207 = vsel %vm3143, %v3097, %v3175
      %v3208 = vsel %vm3144, %v3102, %v3176
      %v3209 = vsel %vm3145, %v3105, %v3177
      %v3210 = vsel %vm3146, %v3110, %v3178
      %v3211 = vsel %vm3147, %v3113, %v3179
      %v3212 = vpack.c.bf16 %v3181, %v3180
      %v3213 = vpack.c.bf16 %v3183, %v3182
      %v3214 = vpack.c.bf16 %v3185, %v3184
      %v3215 = vpack.c.bf16 %v3187, %v3186
      %v3216 = vpack.c.bf16 %v3189, %v3188
      %v3217 = vpack.c.bf16 %v3191, %v3190
      %v3218 = vpack.c.bf16 %v3193, %v3192
      %v3219 = vpack.c.bf16 %v3195, %v3194
      %v3220 = vpack.c.bf16 %v3197, %v3196
      %v3221 = vpack.c.bf16 %v3199, %v3198
      %v3222 = vpack.c.bf16 %v3201, %v3200
      %v3223 = vpack.c.bf16 %v3203, %v3202
      %v3224 = vpack.c.bf16 %v3205, %v3204
      %v3225 = vpack.c.bf16 %v3207, %v3206
      %v3226 = vpack.c.bf16 %v3209, %v3208
      %v3227 = vpack.c.bf16 %v3211, %v3210
      %v3229 = vshrl.u32 %v3212, 16
      %v3231 = vrot.slane %v3229, 7
      %v3232 = vshll.u32 %v3212, 16
      %v3234 = vor.u32 %v3231, %v3232
      %v3236 = vshrl.u32 %v3213, 16
      %v3238 = vrot.slane %v3236, 7
      %v3239 = vshll.u32 %v3213, 16
      %v3241 = vor.u32 %v3238, %v3239
      %v3243 = vshrl.u32 %v3214, 16
      %v3245 = vrot.slane %v3243, 7
      %v3246 = vshll.u32 %v3214, 16
      %v3248 = vor.u32 %v3245, %v3246
      %v3250 = vshrl.u32 %v3215, 16
      %v3252 = vrot.slane %v3250, 7
      %v3253 = vshll.u32 %v3215, 16
      %v3255 = vor.u32 %v3252, %v3253
      %v3257 = vshrl.u32 %v3216, 16
      %v3259 = vrot.slane %v3257, 7
      %v3260 = vshll.u32 %v3216, 16
      %v3262 = vor.u32 %v3259, %v3260
      %v3264 = vshrl.u32 %v3217, 16
      %v3266 = vrot.slane %v3264, 7
      %v3267 = vshll.u32 %v3217, 16
      %v3269 = vor.u32 %v3266, %v3267
      %v3271 = vshrl.u32 %v3218, 16
      %v3273 = vrot.slane %v3271, 7
      %v3274 = vshll.u32 %v3218, 16
      %v3276 = vor.u32 %v3273, %v3274
      %v3278 = vshrl.u32 %v3219, 16
      %v3280 = vrot.slane %v3278, 7
      %v3281 = vshll.u32 %v3219, 16
      %v3283 = vor.u32 %v3280, %v3281
      %v3285 = vshrl.u32 %v3220, 16
      %v3287 = vrot.slane %v3285, 7
      %v3288 = vshll.u32 %v3220, 16
      %v3290 = vor.u32 %v3287, %v3288
      %v3292 = vshrl.u32 %v3221, 16
      %v3294 = vrot.slane %v3292, 7
      %v3295 = vshll.u32 %v3221, 16
      %v3297 = vor.u32 %v3294, %v3295
      %v3299 = vshrl.u32 %v3222, 16
      %v3301 = vrot.slane %v3299, 7
      %v3302 = vshll.u32 %v3222, 16
      %v3304 = vor.u32 %v3301, %v3302
      %v3306 = vshrl.u32 %v3223, 16
      %v3308 = vrot.slane %v3306, 7
      %v3309 = vshll.u32 %v3223, 16
      %v3311 = vor.u32 %v3308, %v3309
      %v3313 = vshrl.u32 %v3224, 16
      %v3315 = vrot.slane %v3313, 7
      %v3316 = vshll.u32 %v3224, 16
      %v3318 = vor.u32 %v3315, %v3316
      %v3320 = vshrl.u32 %v3225, 16
      %v3322 = vrot.slane %v3320, 7
      %v3323 = vshll.u32 %v3225, 16
      %v3325 = vor.u32 %v3322, %v3323
      %v3327 = vshrl.u32 %v3226, 16
      %v3329 = vrot.slane %v3327, 7
      %v3330 = vshll.u32 %v3226, 16
      %v3332 = vor.u32 %v3329, %v3330
      %v3334 = vshrl.u32 %v3227, 16
      %v3336 = vrot.slane %v3334, 7
      %v3337 = vshll.u32 %v3227, 16
      %v3339 = vor.u32 %v3336, %v3337
      %v3372 = vsel %vm538, 0, %v3234
      %v3373 = vsel %vm538, 0, %v3241
      %v3374 = vsel %vm538, 0, %v3248
      %v3375 = vsel %vm538, 0, %v3255
      %v3376 = vsel %vm538, 0, %v3262
      %v3377 = vsel %vm538, 0, %v3269
      %v3378 = vsel %vm538, 0, %v3276
      %v3379 = vsel %vm538, 0, %v3283
      %v3380 = vsel %vm538, 0, %v3290
      %v3381 = vsel %vm538, 0, %v3297
      %v3382 = vsel %vm538, 0, %v3304
      %v3383 = vsel %vm538, 0, %v3311
      %v3384 = vsel %vm538, 0, %v3318
      %v3385 = vsel %vm538, 0, %v3325
      %v3386 = vsel %vm538, 0, %v3332
      %v3387 = vsel %vm538, 0, %v3339
      %v3388 = vsel %vm538, %v3231, 0
      %v3389 = vsel %vm538, %v3238, 0
      %v3390 = vsel %vm538, %v3245, 0
      %v3391 = vsel %vm538, %v3252, 0
      %v3392 = vsel %vm538, %v3259, 0
      %v3393 = vsel %vm538, %v3266, 0
      %v3394 = vsel %vm538, %v3273, 0
      %v3395 = vsel %vm538, %v3280, 0
      %v3396 = vsel %vm538, %v3287, 0
      %v3397 = vsel %vm538, %v3294, 0
      %v3398 = vsel %vm538, %v3301, 0
      %v3399 = vsel %vm538, %v3308, 0
      %v3400 = vsel %vm538, %v3315, 0
      %v3401 = vsel %vm538, %v3322, 0
      %v3402 = vsel %vm538, %v3329, 0
      %v3403 = vsel %vm538, %v3336, 0
      %v3405 = vshrl.u32 %v3372, 16
      %v3407 = vshll.u32 %v3372, 16
      %v3409 = vrot.slane %v3407, 1
      %v3410 = vor.u32 %v3405, %v3409
      %v3412 = vshll.u32 %v3388, 16
      %v3414 = vrot.slane %v3412, 1
      %v3415 = vsel %vm571, %v3410, %v3414
      %v3417 = vshrl.u32 %v3373, 16
      %v3419 = vshll.u32 %v3373, 16
      %v3421 = vrot.slane %v3419, 1
      %v3422 = vor.u32 %v3417, %v3421
      %v3424 = vshll.u32 %v3389, 16
      %v3426 = vrot.slane %v3424, 1
      %v3427 = vsel %vm571, %v3422, %v3426
      %v3429 = vshrl.u32 %v3374, 16
      %v3431 = vshll.u32 %v3374, 16
      %v3433 = vrot.slane %v3431, 1
      %v3434 = vor.u32 %v3429, %v3433
      %v3436 = vshll.u32 %v3390, 16
      %v3438 = vrot.slane %v3436, 1
      %v3439 = vsel %vm571, %v3434, %v3438
      %v3441 = vshrl.u32 %v3375, 16
      %v3443 = vshll.u32 %v3375, 16
      %v3445 = vrot.slane %v3443, 1
      %v3446 = vor.u32 %v3441, %v3445
      %v3448 = vshll.u32 %v3391, 16
      %v3450 = vrot.slane %v3448, 1
      %v3451 = vsel %vm571, %v3446, %v3450
      %v3453 = vshrl.u32 %v3376, 16
      %v3455 = vshll.u32 %v3376, 16
      %v3457 = vrot.slane %v3455, 1
      %v3458 = vor.u32 %v3453, %v3457
      %v3460 = vshll.u32 %v3392, 16
      %v3462 = vrot.slane %v3460, 1
      %v3463 = vsel %vm571, %v3458, %v3462
      %v3465 = vshrl.u32 %v3377, 16
      %v3467 = vshll.u32 %v3377, 16
      %v3469 = vrot.slane %v3467, 1
      %v3470 = vor.u32 %v3465, %v3469
      %v3472 = vshll.u32 %v3393, 16
      %v3474 = vrot.slane %v3472, 1
      %v3475 = vsel %vm571, %v3470, %v3474
      %v3477 = vshrl.u32 %v3378, 16
      %v3479 = vshll.u32 %v3378, 16
      %v3481 = vrot.slane %v3479, 1
      %v3482 = vor.u32 %v3477, %v3481
      %v3484 = vshll.u32 %v3394, 16
      %v3486 = vrot.slane %v3484, 1
      %v3487 = vsel %vm571, %v3482, %v3486
      %v3489 = vshrl.u32 %v3379, 16
      %v3491 = vshll.u32 %v3379, 16
      %v3493 = vrot.slane %v3491, 1
      %v3494 = vor.u32 %v3489, %v3493
      %v3496 = vshll.u32 %v3395, 16
      %v3498 = vrot.slane %v3496, 1
      %v3499 = vsel %vm571, %v3494, %v3498
      %v3501 = vshrl.u32 %v3380, 16
      %v3503 = vshll.u32 %v3380, 16
      %v3505 = vrot.slane %v3503, 1
      %v3506 = vor.u32 %v3501, %v3505
      %v3508 = vshll.u32 %v3396, 16
      %v3510 = vrot.slane %v3508, 1
      %v3511 = vsel %vm571, %v3506, %v3510
      %v3513 = vshrl.u32 %v3381, 16
      %v3515 = vshll.u32 %v3381, 16
      %v3517 = vrot.slane %v3515, 1
      %v3518 = vor.u32 %v3513, %v3517
      %v3520 = vshll.u32 %v3397, 16
      %v3522 = vrot.slane %v3520, 1
      %v3523 = vsel %vm571, %v3518, %v3522
      %v3525 = vshrl.u32 %v3382, 16
      %v3527 = vshll.u32 %v3382, 16
      %v3529 = vrot.slane %v3527, 1
      %v3530 = vor.u32 %v3525, %v3529
      %v3532 = vshll.u32 %v3398, 16
      %v3534 = vrot.slane %v3532, 1
      %v3535 = vsel %vm571, %v3530, %v3534
      %v3537 = vshrl.u32 %v3383, 16
      %v3539 = vshll.u32 %v3383, 16
      %v3541 = vrot.slane %v3539, 1
      %v3542 = vor.u32 %v3537, %v3541
      %v3544 = vshll.u32 %v3399, 16
      %v3546 = vrot.slane %v3544, 1
      %v3547 = vsel %vm571, %v3542, %v3546
      %v3549 = vshrl.u32 %v3384, 16
      %v3551 = vshll.u32 %v3384, 16
      %v3553 = vrot.slane %v3551, 1
      %v3554 = vor.u32 %v3549, %v3553
      %v3556 = vshll.u32 %v3400, 16
      %v3558 = vrot.slane %v3556, 1
      %v3559 = vsel %vm571, %v3554, %v3558
      %v3561 = vshrl.u32 %v3385, 16
      %v3563 = vshll.u32 %v3385, 16
      %v3565 = vrot.slane %v3563, 1
      %v3566 = vor.u32 %v3561, %v3565
      %v3568 = vshll.u32 %v3401, 16
      %v3570 = vrot.slane %v3568, 1
      %v3571 = vsel %vm571, %v3566, %v3570
      %v3573 = vshrl.u32 %v3386, 16
      %v3575 = vshll.u32 %v3386, 16
      %v3577 = vrot.slane %v3575, 1
      %v3578 = vor.u32 %v3573, %v3577
      %v3580 = vshll.u32 %v3402, 16
      %v3582 = vrot.slane %v3580, 1
      %v3583 = vsel %vm571, %v3578, %v3582
      %3584 = vrot.lane.b32.xlu0 %v3415, 32
      %v3585 = vpop.permute.xlu0 %3584
      %3586 = vrot.lane.b32.xlu0 %v3427, 32
      %v3587 = vpop.permute.xlu0 %3586
      %3588 = vrot.lane.b32.xlu0 %v3439, 32
      %v3589 = vpop.permute.xlu0 %3588
      %3590 = vrot.lane.b32.xlu0 %v3451, 32
      %v3591 = vpop.permute.xlu0 %3590
      %3592 = vrot.lane.b32.xlu0 %v3463, 32
      %v3593 = vpop.permute.xlu0 %3592
      %3594 = vrot.lane.b32.xlu0 %v3475, 32
      %v3595 = vpop.permute.xlu0 %3594
      %3596 = vrot.lane.b32.xlu0 %v3487, 32
      %v3597 = vpop.permute.xlu0 %3596
      %3598 = vrot.lane.b32.xlu0 %v3499, 32
      %v3599 = vpop.permute.xlu0 %3598
      %3600 = vrot.lane.b32.xlu0 %v3511, 32
      %v3601 = vpop.permute.xlu0 %3600
      %3602 = vrot.lane.b32.xlu0 %v3523, 32
      %v3603 = vpop.permute.xlu0 %3602
      %3604 = vrot.lane.b32.xlu0 %v3535, 32
      %v3605 = vpop.permute.xlu0 %3604
      %3606 = vrot.lane.b32.xlu0 %v3547, 32
      %v3607 = vpop.permute.xlu0 %3606
      %3608 = vrot.lane.b32.xlu0 %v3559, 32
      %v3609 = vpop.permute.xlu0 %3608
      %3610 = vrot.lane.b32.xlu0 %v3571, 32
      %v3611 = vpop.permute.xlu0 %3610
      %3612 = vrot.lane.b32.xlu0 %v3583, 32
      %v3613 = vpop.permute.xlu0 %3612
      %v3644 = vrot.slane %v3372, 1
      %v3645 = vrot.slane %v3388, 1
      %v3646 = vsel %vm823, %v3644, %v3645
      %v3647 = vrot.slane %v3373, 1
      %v3648 = vrot.slane %v3389, 1
      %v3649 = vsel %vm823, %v3647, %v3648
      %v3650 = vrot.slane %v3374, 1
      %v3651 = vrot.slane %v3390, 1
      %v3652 = vsel %vm823, %v3650, %v3651
      %v3653 = vrot.slane %v3375, 1
      %v3654 = vrot.slane %v3391, 1
      %v3655 = vsel %vm823, %v3653, %v3654
      %v3656 = vrot.slane %v3376, 1
      %v3657 = vrot.slane %v3392, 1
      %v3658 = vsel %vm823, %v3656, %v3657
      %v3659 = vrot.slane %v3377, 1
      %v3660 = vrot.slane %v3393, 1
      %v3661 = vsel %vm823, %v3659, %v3660
      %v3662 = vrot.slane %v3378, 1
      %v3663 = vrot.slane %v3394, 1
      %v3664 = vsel %vm823, %v3662, %v3663
      %v3665 = vrot.slane %v3379, 1
      %v3666 = vrot.slane %v3395, 1
      %v3667 = vsel %vm823, %v3665, %v3666
      %v3668 = vrot.slane %v3380, 1
      %v3669 = vrot.slane %v3396, 1
      %v3670 = vsel %vm823, %v3668, %v3669
      %v3671 = vrot.slane %v3381, 1
      %v3672 = vrot.slane %v3397, 1
      %v3673 = vsel %vm823, %v3671, %v3672
      %v3674 = vrot.slane %v3382, 1
      %v3675 = vrot.slane %v3398, 1
      %v3676 = vsel %vm823, %v3674, %v3675
      %v3677 = vrot.slane %v3383, 1
      %v3678 = vrot.slane %v3399, 1
      %v3679 = vsel %vm823, %v3677, %v3678
      %v3680 = vrot.slane %v3384, 1
      %v3681 = vrot.slane %v3400, 1
      %v3682 = vsel %vm823, %v3680, %v3681
      %v3683 = vrot.slane %v3385, 1
      %v3684 = vrot.slane %v3401, 1
      %v3685 = vsel %vm823, %v3683, %v3684
      %v3686 = vrot.slane %v3386, 1
      %v3687 = vrot.slane %v3402, 1
      %v3688 = vsel %vm823, %v3686, %v3687
      %3689 = vrot.lane.b32.xlu0 %v3646, 64
      %v3690 = vpop.permute.xlu0 %3689
      %3691 = vrot.lane.b32.xlu0 %v3649, 64
      %v3692 = vpop.permute.xlu0 %3691
      %3693 = vrot.lane.b32.xlu0 %v3652, 64
      %v3694 = vpop.permute.xlu0 %3693
      %3695 = vrot.lane.b32.xlu0 %v3655, 64
      %v3696 = vpop.permute.xlu0 %3695
      %3697 = vrot.lane.b32.xlu0 %v3658, 64
      %v3698 = vpop.permute.xlu0 %3697
      %3699 = vrot.lane.b32.xlu0 %v3661, 64
      %v3700 = vpop.permute.xlu0 %3699
      %3701 = vrot.lane.b32.xlu0 %v3664, 64
      %v3702 = vpop.permute.xlu0 %3701
      %3703 = vrot.lane.b32.xlu0 %v3667, 64
      %v3704 = vpop.permute.xlu0 %3703
      %3705 = vrot.lane.b32.xlu0 %v3670, 64
      %v3706 = vpop.permute.xlu0 %3705
      %3707 = vrot.lane.b32.xlu0 %v3673, 64
      %v3708 = vpop.permute.xlu0 %3707
      %3709 = vrot.lane.b32.xlu0 %v3676, 64
      %v3710 = vpop.permute.xlu0 %3709
      %3711 = vrot.lane.b32.xlu0 %v3679, 64
      %v3712 = vpop.permute.xlu0 %3711
      %3713 = vrot.lane.b32.xlu0 %v3682, 64
      %v3714 = vpop.permute.xlu0 %3713
      %3715 = vrot.lane.b32.xlu0 %v3685, 64
      %v3716 = vpop.permute.xlu0 %3715
      %3717 = vrot.lane.b32.xlu0 %v3688, 64
      %v3718 = vpop.permute.xlu0 %3717
      %3720 = vrot.lane.b32.xlu0 %v3372, 96
      %v3721 = vpop.permute.xlu0 %3720
      %3722 = vrot.lane.b32.xlu0 %v3373, 96
      %v3723 = vpop.permute.xlu0 %3722
      %3724 = vrot.lane.b32.xlu0 %v3374, 96
      %v3725 = vpop.permute.xlu0 %3724
      %3726 = vrot.lane.b32.xlu0 %v3375, 96
      %v3727 = vpop.permute.xlu0 %3726
      %3728 = vrot.lane.b32.xlu0 %v3376, 96
      %v3729 = vpop.permute.xlu0 %3728
      %3730 = vrot.lane.b32.xlu0 %v3377, 96
      %v3731 = vpop.permute.xlu0 %3730
      %3732 = vrot.lane.b32.xlu0 %v3378, 96
      %v3733 = vpop.permute.xlu0 %3732
      %3734 = vrot.lane.b32.xlu0 %v3379, 96
      %v3735 = vpop.permute.xlu0 %3734
      %3736 = vrot.lane.b32.xlu0 %v3380, 96
      %v3737 = vpop.permute.xlu0 %3736
      %3738 = vrot.lane.b32.xlu0 %v3381, 96
      %v3739 = vpop.permute.xlu0 %3738
      %3740 = vrot.lane.b32.xlu0 %v3382, 96
      %v3741 = vpop.permute.xlu0 %3740
      %3742 = vrot.lane.b32.xlu0 %v3383, 96
      %v3743 = vpop.permute.xlu0 %3742
      %3744 = vrot.lane.b32.xlu0 %v3384, 96
      %v3745 = vpop.permute.xlu0 %3744
      %3746 = vrot.lane.b32.xlu0 %v3385, 96
      %v3747 = vpop.permute.xlu0 %3746
      %3748 = vrot.lane.b32.xlu0 %v3386, 96
      %v3749 = vpop.permute.xlu0 %3748
      %3750 = vrot.lane.b32.xlu0 %v3387, 96
      %v3751 = vpop.permute.xlu0 %3750
      %v3753 = vshrl.u32 %v3387, 16
      %v3755 = vshll.u32 %v3387, 16
      %v3757 = vrot.slane %v3755, 1
      %v3758 = vor.u32 %v3753, %v3757
      %v3760 = vshll.u32 %v3403, 16
      %v3762 = vrot.slane %v3760, 1
      %v3763 = vsel %vm571, %v3758, %v3762
      %v3765 = vrot.slane %v3387, 1
      %v3766 = vrot.slane %v3403, 1
      %v3767 = vsel %vm823, %v3765, %v3766
      %3768 = vrot.lane.b32.xlu0 %v3646, 32
      %v3769 = vpop.permute.xlu0 %3768
      %3770 = vrot.lane.b32.xlu0 %v3649, 32
      %v3771 = vpop.permute.xlu0 %3770
      %3772 = vrot.lane.b32.xlu0 %v3652, 32
      %v3773 = vpop.permute.xlu0 %3772
      %3774 = vrot.lane.b32.xlu0 %v3655, 32
      %v3775 = vpop.permute.xlu0 %3774
      %3776 = vrot.lane.b32.xlu0 %v3658, 32
      %v3777 = vpop.permute.xlu0 %3776
      %3778 = vrot.lane.b32.xlu0 %v3661, 32
      %v3779 = vpop.permute.xlu0 %3778
      %3780 = vrot.lane.b32.xlu0 %v3664, 32
      %v3781 = vpop.permute.xlu0 %3780
      %3782 = vrot.lane.b32.xlu0 %v3667, 32
      %v3783 = vpop.permute.xlu0 %3782
      %3784 = vrot.lane.b32.xlu0 %v3670, 32
      %v3785 = vpop.permute.xlu0 %3784
      %3786 = vrot.lane.b32.xlu0 %v3673, 32
      %v3787 = vpop.permute.xlu0 %3786
      %3788 = vrot.lane.b32.xlu0 %v3676, 32
      %v3789 = vpop.permute.xlu0 %3788
      %3790 = vrot.lane.b32.xlu0 %v3679, 32
      %v3791 = vpop.permute.xlu0 %3790
      %3792 = vrot.lane.b32.xlu0 %v3682, 32
      %v3793 = vpop.permute.xlu0 %3792
      %3794 = vrot.lane.b32.xlu0 %v3685, 32
      %v3795 = vpop.permute.xlu0 %3794
      %3796 = vrot.lane.b32.xlu0 %v3688, 32
      %v3797 = vpop.permute.xlu0 %3796
      %3798 = vrot.lane.b32.xlu0 %v3767, 32
      %v3799 = vpop.permute.xlu0 %3798
      %3800 = vrot.lane.b32.xlu0 %v3373, 64
      %v3801 = vpop.permute.xlu0 %3800
      %3802 = vrot.lane.b32.xlu0 %v3374, 64
      %v3803 = vpop.permute.xlu0 %3802
      %3804 = vrot.lane.b32.xlu0 %v3375, 64
      %v3805 = vpop.permute.xlu0 %3804
      %3806 = vrot.lane.b32.xlu0 %v3376, 64
      %v3807 = vpop.permute.xlu0 %3806
      %3808 = vrot.lane.b32.xlu0 %v3377, 64
      %v3809 = vpop.permute.xlu0 %3808
      %3810 = vrot.lane.b32.xlu0 %v3378, 64
      %v3811 = vpop.permute.xlu0 %3810
      %3812 = vrot.lane.b32.xlu0 %v3379, 64
      %v3813 = vpop.permute.xlu0 %3812
      %3814 = vrot.lane.b32.xlu0 %v3380, 64
      %v3815 = vpop.permute.xlu0 %3814
      %3816 = vrot.lane.b32.xlu0 %v3381, 64
      %v3817 = vpop.permute.xlu0 %3816
      %3818 = vrot.lane.b32.xlu0 %v3382, 64
      %v3819 = vpop.permute.xlu0 %3818
      %3820 = vrot.lane.b32.xlu0 %v3383, 64
      %v3821 = vpop.permute.xlu0 %3820
      %3822 = vrot.lane.b32.xlu0 %v3384, 64
      %v3823 = vpop.permute.xlu0 %3822
      %3824 = vrot.lane.b32.xlu0 %v3385, 64
      %v3825 = vpop.permute.xlu0 %3824
      %3826 = vrot.lane.b32.xlu0 %v3386, 64
      %v3827 = vpop.permute.xlu0 %3826
      %3828 = vrot.lane.b32.xlu0 %v3387, 64
      %v3829 = vpop.permute.xlu0 %3828
      %3830 = vrot.lane.b32.xlu0 %v3427, 96
      %v3831 = vpop.permute.xlu0 %3830
      %3832 = vrot.lane.b32.xlu0 %v3439, 96
      %v3833 = vpop.permute.xlu0 %3832
      %3834 = vrot.lane.b32.xlu0 %v3451, 96
      %v3835 = vpop.permute.xlu0 %3834
      %3836 = vrot.lane.b32.xlu0 %v3463, 96
      %v3837 = vpop.permute.xlu0 %3836
      %3838 = vrot.lane.b32.xlu0 %v3475, 96
      %v3839 = vpop.permute.xlu0 %3838
      %3840 = vrot.lane.b32.xlu0 %v3487, 96
      %v3841 = vpop.permute.xlu0 %3840
      %3842 = vrot.lane.b32.xlu0 %v3499, 96
      %v3843 = vpop.permute.xlu0 %3842
      %3844 = vrot.lane.b32.xlu0 %v3511, 96
      %v3845 = vpop.permute.xlu0 %3844
      %3846 = vrot.lane.b32.xlu0 %v3523, 96
      %v3847 = vpop.permute.xlu0 %3846
      %3848 = vrot.lane.b32.xlu0 %v3535, 96
      %v3849 = vpop.permute.xlu0 %3848
      %3850 = vrot.lane.b32.xlu0 %v3547, 96
      %v3851 = vpop.permute.xlu0 %3850
      %3852 = vrot.lane.b32.xlu0 %v3559, 96
      %v3853 = vpop.permute.xlu0 %3852
      %3854 = vrot.lane.b32.xlu0 %v3571, 96
      %v3855 = vpop.permute.xlu0 %3854
      %3856 = vrot.lane.b32.xlu0 %v3583, 96
      %v3857 = vpop.permute.xlu0 %3856
      %3858 = vrot.lane.b32.xlu0 %v3763, 96
      %v3859 = vpop.permute.xlu0 %3858
      %v3861 = vsel %vm1343, %v3372, %v3585
      %v3863 = vsel %vm1343, %v3373, %v3587
      %v3865 = vsel %vm1343, %v3374, %v3589
      %v3867 = vsel %vm1343, %v3375, %v3591
      %v3869 = vsel %vm1343, %v3376, %v3593
      %v3871 = vsel %vm1343, %v3377, %v3595
      %v3873 = vsel %vm1343, %v3378, %v3597
      %v3875 = vsel %vm1343, %v3379, %v3599
      %v3877 = vsel %vm1343, %v3380, %v3601
      %v3879 = vsel %vm1343, %v3381, %v3603
      %v3881 = vsel %vm1343, %v3382, %v3605
      %v3883 = vsel %vm1343, %v3383, %v3607
      %v3885 = vsel %vm1343, %v3384, %v3609
      %v3887 = vsel %vm1343, %v3385, %v3611
      %v3889 = vsel %vm1343, %v3386, %v3613
      %v3891 = vsel %vm2385, %v3861, %v3690
      %v3893 = vsel %vm2385, %v3863, %v3692
      %v3895 = vsel %vm2385, %v3865, %v3694
      %v3897 = vsel %vm2385, %v3867, %v3696
      %v3899 = vsel %vm2385, %v3869, %v3698
      %v3901 = vsel %vm2385, %v3871, %v3700
      %v3903 = vsel %vm2385, %v3873, %v3702
      %v3905 = vsel %vm2385, %v3875, %v3704
      %v3907 = vsel %vm2385, %v3877, %v3706
      %v3909 = vsel %vm2385, %v3879, %v3708
      %v3911 = vsel %vm2385, %v3881, %v3710
      %v3913 = vsel %vm2385, %v3883, %v3712
      %v3915 = vsel %vm2385, %v3885, %v3714
      %v3917 = vsel %vm2385, %v3887, %v3716
      %v3919 = vsel %vm2385, %v3889, %v3718
      %v3921 = vsel %vm2418, %v2387, %v3721
      %v3924 = vsel %vm2418, %v3891, %v3723
      %v3927 = vsel %vm2418, %v3893, %v3725
      %v3930 = vsel %vm2418, %v3895, %v3727
      %v3933 = vsel %vm2418, %v3897, %v3729
      %v3936 = vsel %vm2418, %v3899, %v3731
      %v3939 = vsel %vm2418, %v3901, %v3733
      %v3942 = vsel %vm2418, %v3903, %v3735
      %v3945 = vsel %vm2418, %v3905, %v3737
      %v3948 = vsel %vm2418, %v3907, %v3739
      %v3951 = vsel %vm2418, %v3909, %v3741
      %v3954 = vsel %vm2418, %v3911, %v3743
      %v3957 = vsel %vm2418, %v3913, %v3745
      %v3960 = vsel %vm2418, %v3915, %v3747
      %v3963 = vsel %vm2418, %v3917, %v3749
      %v3966 = vsel %vm2418, %v3919, %v3751
      %v3970 = vsel %vm1343, %v3415, %v3769
      %v3973 = vsel %vm1343, %v3427, %v3771
      %v3976 = vsel %vm1343, %v3439, %v3773
      %v3979 = vsel %vm1343, %v3451, %v3775
      %v3982 = vsel %vm1343, %v3463, %v3777
      %v3985 = vsel %vm1343, %v3475, %v3779
      %v3988 = vsel %vm1343, %v3487, %v3781
      %v3991 = vsel %vm1343, %v3499, %v3783
      %v3994 = vsel %vm1343, %v3511, %v3785
      %v3997 = vsel %vm1343, %v3523, %v3787
      %v4000 = vsel %vm1343, %v3535, %v3789
      %v4003 = vsel %vm1343, %v3547, %v3791
      %v4006 = vsel %vm1343, %v3559, %v3793
      %v4009 = vsel %vm1343, %v3571, %v3795
      %v4012 = vsel %vm1343, %v3583, %v3797
      %v4015 = vsel %vm1343, %v3763, %v3799
      %v4017 = vsel %vm2385, %v3970, %v3801
      %v4019 = vsel %vm2385, %v3973, %v3803
      %v4021 = vsel %vm2385, %v3976, %v3805
      %v4023 = vsel %vm2385, %v3979, %v3807
      %v4025 = vsel %vm2385, %v3982, %v3809
      %v4027 = vsel %vm2385, %v3985, %v3811
      %v4029 = vsel %vm2385, %v3988, %v3813
      %v4031 = vsel %vm2385, %v3991, %v3815
      %v4033 = vsel %vm2385, %v3994, %v3817
      %v4035 = vsel %vm2385, %v3997, %v3819
      %v4037 = vsel %vm2385, %v4000, %v3821
      %v4039 = vsel %vm2385, %v4003, %v3823
      %v4041 = vsel %vm2385, %v4006, %v3825
      %v4043 = vsel %vm2385, %v4009, %v3827
      %v4045 = vsel %vm2385, %v4012, %v3829
      %v4046 = vsel %vm2385, %v4015, %v2320
      %v4048 = vsel %vm2418, %v4017, %v3831
      %v4051 = vsel %vm2418, %v4019, %v3833
      %v4054 = vsel %vm2418, %v4021, %v3835
      %v4057 = vsel %vm2418, %v4023, %v3837
      %v4060 = vsel %vm2418, %v4025, %v3839
      %v4063 = vsel %vm2418, %v4027, %v3841
      %v4066 = vsel %vm2418, %v4029, %v3843
      %v4069 = vsel %vm2418, %v4031, %v3845
      %v4072 = vsel %vm2418, %v4033, %v3847
      %v4075 = vsel %vm2418, %v4035, %v3849
      %v4078 = vsel %vm2418, %v4037, %v3851
      %v4081 = vsel %vm2418, %v4039, %v3853
      %v4084 = vsel %vm2418, %v4041, %v3855
      %v4087 = vsel %vm2418, %v4043, %v3857
      %v4090 = vsel %vm2418, %v4045, %v3859
      %v4092 = vsel %vm2418, %v4046, %v2352
      %v4094 = vld [vmem:[%s5] sm:$0xf]
      %v4095 = vld [vmem:[%s5 + $0x4] sm:$0xf]
      %v4096 = vld [vmem:[%s5 + $0x8] sm:$0xf]
      %v4097 = vld [vmem:[%s5 + $0xc] sm:$0xf]
      %v4098 = vld [vmem:[%s5 + $0x10] sm:$0xf]
      %v4099 = vld [vmem:[%s5 + $0x14] sm:$0xf]
      %v4100 = vld [vmem:[%s5 + $0x18] sm:$0xf]
      %v4101 = vld [vmem:[%s5 + $0x1c] sm:$0xf]
      %v4102 = vld [vmem:[%s5 + $0x20] sm:$0xf]
      %v4103 = vld [vmem:[%s5 + $0x24] sm:$0xf]
      %v4104 = vld [vmem:[%s5 + $0x28] sm:$0xf]
      %v4105 = vld [vmem:[%s5 + $0x2c] sm:$0xf]
      %v4106 = vld [vmem:[%s5 + $0x30] sm:$0xf]
      %v4107 = vld [vmem:[%s5 + $0x34] sm:$0xf]
      %v4108 = vld [vmem:[%s5 + $0x38] sm:$0xf]
      %v4109 = vld [vmem:[%s5 + $0x3c] sm:$0xf]
      %v4110 = vld [vmem:[%s5 + $0x40] sm:$0xf]
      %v4111 = vld [vmem:[%s5 + $0x44] sm:$0xf]
      %v4112 = vld [vmem:[%s5 + $0x48] sm:$0xf]
      %v4113 = vld [vmem:[%s5 + $0x4c] sm:$0xf]
      %v4114 = vld [vmem:[%s5 + $0x50] sm:$0xf]
      %v4115 = vld [vmem:[%s5 + $0x54] sm:$0xf]
      %v4116 = vld [vmem:[%s5 + $0x58] sm:$0xf]
      %v4117 = vld [vmem:[%s5 + $0x5c] sm:$0xf]
      %v4118 = vld [vmem:[%s5 + $0x60] sm:$0xf]
      %v4119 = vld [vmem:[%s5 + $0x64] sm:$0xf]
      %v4120 = vld [vmem:[%s5 + $0x68] sm:$0xf]
      %v4121 = vld [vmem:[%s5 + $0x6c] sm:$0xf]
      %v4122 = vld [vmem:[%s5 + $0x70] sm:$0xf]
      %v4123 = vld [vmem:[%s5 + $0x74] sm:$0xf]
      %v4124 = vld [vmem:[%s5 + $0x78] sm:$0xf]
      %v4125 = vld [vmem:[%s5 + $0x7c] sm:$0xf]
      %v4126 = vld [vmem:[%s5 + $0x80] sm:$0xf]
      %v4127 = vld [vmem:[%s5 + $0x84] sm:$0xf]
      %v4128 = vld [vmem:[%s5 + $0x88] sm:$0xf]
      %v4129 = vld [vmem:[%s5 + $0x8c] sm:$0xf]
      %v4130 = vld [vmem:[%s6] sm:$0x1]
      %v4132 = vlaneseq
      %v4133 = vshrl.u32 %v4132, 7
      %v4134 = vsub.s32 0, %v4133
      %v4135 = vrot.slane %v4130, %v4134
      %v4173 = vunpack.c.l.b16 %v4094
      %v4174 = vunpack.c.l.b16 %v4095
      %v4175 = vunpack.c.l.b16 %v4096
      %v4176 = vunpack.c.l.b16 %v4097
      %v4177 = vunpack.c.l.b16 %v4098
      %v4178 = vunpack.c.l.b16 %v4099
      %v4179 = vunpack.c.l.b16 %v4100
      %v4180 = vunpack.c.l.b16 %v4101
      %v4181 = vunpack.c.l.b16 %v4102
      %v4182 = vunpack.c.l.b16 %v4103
      %v4183 = vunpack.c.l.b16 %v4104
      %v4184 = vunpack.c.l.b16 %v4105
      %v4185 = vunpack.c.l.b16 %v4106
      %v4186 = vunpack.c.l.b16 %v4107
      %v4187 = vunpack.c.l.b16 %v4108
      %v4188 = vunpack.c.l.b16 %v4109
      %v4189 = vunpack.c.l.b16 %v4110
      %v4190 = vunpack.c.l.b16 %v4111
      %v4191 = vunpack.c.l.b16 %v4112
      %v4192 = vunpack.c.l.b16 %v4113
      %v4193 = vunpack.c.l.b16 %v4114
      %v4194 = vunpack.c.l.b16 %v4115
      %v4195 = vunpack.c.l.b16 %v4116
      %v4196 = vunpack.c.l.b16 %v4117
      %v4197 = vunpack.c.l.b16 %v4118
      %v4198 = vunpack.c.l.b16 %v4119
      %v4199 = vunpack.c.l.b16 %v4120
      %v4200 = vunpack.c.l.b16 %v4121
      %v4201 = vunpack.c.l.b16 %v4122
      %v4202 = vunpack.c.l.b16 %v4123
      %v4203 = vunpack.c.l.b16 %v4124
      %v4204 = vunpack.c.l.b16 %v4125
      %v4205 = vunpack.c.l.b16 %v4126
      %v4206 = vunpack.c.l.b16 %v4127
      %v4207 = vunpack.c.l.b16 %v4128
      %v4208 = vunpack.c.l.b16 %v4129
      %v4209 = vpack.c.b16 %v4174, %v4173
      %v4210 = vpack.c.b16 %v4176, %v4175
      %v4211 = vpack.c.b16 %v4178, %v4177
      %v4212 = vpack.c.b16 %v4180, %v4179
      %v4213 = vpack.c.b16 %v4182, %v4181
      %v4214 = vpack.c.b16 %v4184, %v4183
      %v4215 = vpack.c.b16 %v4186, %v4185
      %v4216 = vpack.c.b16 %v4188, %v4187
      %v4217 = vpack.c.b16 %v4190, %v4189
      %v4218 = vpack.c.b16 %v4192, %v4191
      %v4219 = vpack.c.b16 %v4194, %v4193
      %v4220 = vpack.c.b16 %v4196, %v4195
      %v4221 = vpack.c.b16 %v4198, %v4197
      %v4222 = vpack.c.b16 %v4200, %v4199
      %v4223 = vpack.c.b16 %v4202, %v4201
      %v4224 = vpack.c.b16 %v4204, %v4203
      %v4225 = vpack.c.b16 %v4206, %v4205
      %v4226 = vpack.c.b16 %v4208, %v4207
      %v4246 = vsel %vm1343, %v3649, 0
      %v4249 = vsel %vm1343, %v3652, 0
      %v4252 = vsel %vm1343, %v3655, 0
      %v4255 = vsel %vm1343, %v3658, 0
      %v4258 = vsel %vm1343, %v3661, 0
      %v4261 = vsel %vm1343, %v3664, 0
      %v4264 = vsel %vm1343, %v3667, 0
      %v4267 = vsel %vm1343, %v3670, 0
      %v4270 = vsel %vm1343, %v3673, 0
      %v4273 = vsel %vm1343, %v3676, 0
      %v4276 = vsel %vm1343, %v3679, 0
      %v4279 = vsel %vm1343, %v3682, 0
      %v4282 = vsel %vm1343, %v3685, 0
      %v4285 = vsel %vm1343, %v3688, 0
      %v4288 = vsel %vm1343, %v3767, 0
      %4290 = vmatprep.subr.bf16.mxu0 0
      %4291 = vmatpush1.bf16.msra.mxu0 %v4209
      %4292 = vmatprep.subr.bf16.mxu0 0
      %4293 = vmatpush1.bf16.msra.mxu0 %v4210
      %4294 = vmatprep.subr.bf16.mxu0 0
      %4295 = vmatpush1.bf16.msra.mxu0 %v4211
      %4296 = vmatprep.subr.bf16.mxu0 0
      %4297 = vmatpush1.bf16.msra.mxu0 %v4212
      %4298 = vmatprep.subr.bf16.mxu0 0
      %4299 = vmatpush1.bf16.msra.mxu0 %v4213
      %4300 = vmatprep.subr.bf16.mxu0 0
      %4301 = vmatpush1.bf16.msra.mxu0 %v4214
      %4302 = vmatprep.subr.bf16.mxu0 0
      %4303 = vmatpush1.bf16.msra.mxu0 %v4215
      %4304 = vmatprep.subr.bf16.mxu0 0
      %4305 = vmatpush1.bf16.msra.mxu0 %v4216
      %4306 = vmatprep.subr.bf16.mxu0 0
      %4307 = vmatpush1.bf16.msra.mxu0 %v4217
      %4308 = vmatprep.subr.bf16.mxu0 0
      %4309 = vmatpush1.bf16.msra.mxu0 %v4218
      %4310 = vmatprep.subr.bf16.mxu0 0
      %4311 = vmatpush1.bf16.msra.mxu0 %v4219
      %4312 = vmatprep.subr.bf16.mxu0 0
      %4313 = vmatpush1.bf16.msra.mxu0 %v4220
      %4314 = vmatprep.subr.bf16.mxu0 0
      %4315 = vmatpush1.bf16.msra.mxu0 %v4221
      %4316 = vmatprep.subr.bf16.mxu0 0
      %4317 = vmatpush1.bf16.msra.mxu0 %v4222
      %4318 = vmatprep.subr.bf16.mxu0 0
      %4319 = vmatpush1.bf16.msra.mxu0 %v4223
      %4320 = vmatprep.subr.bf16.mxu0 0
      %4321 = vmatpush1.bf16.msra.mxu0 %v4224
      %4322 = vmatprep.mubr.bf16.mxu0 %v4048
      %4323 = vmatmul.mubr.bf16.gmra.mrb[0].mxu0 %v3921
      %v4324 = vpop.f32.mrb[0].mxu0
      %v4325 = vadd.f32 %v4135, %v4324
      %v4326 = vpop.f32.mrb[0].mxu0
      %v4327 = vpop.f32.mrb[0].mxu0
      %v4328 = vadd.f32 %v4135, %v4327
      %v4329 = vpop.f32.mrb[0].mxu0
      %4330 = vmatprep.mubr.bf16.mxu0 %v4051
      %4331 = vmatmul.mubr.bf16.gmra.mrb[0].mxu0 %v3924
      %v4332 = vpop.f32.mrb[0].mxu0
      %v4333 = vadd.f32 %v4135, %v4332
      %v4334 = vpop.f32.mrb[0].mxu0
      %v4335 = vpop.f32.mrb[0].mxu0
      %v4336 = vadd.f32 %v4135, %v4335
      %v4337 = vpop.f32.mrb[0].mxu0
      %4338 = vmatprep.mubr.bf16.mxu0 %v4054
      %4339 = vmatmul.mubr.bf16.gmra.mrb[0].mxu0 %v3927
      %v4340 = vpop.f32.mrb[0].mxu0
      %v4341 = vadd.f32 %v4135, %v4340
      %v4342 = vpop.f32.mrb[0].mxu0
      %v4343 = vpop.f32.mrb[0].mxu0
      %v4344 = vadd.f32 %v4135, %v4343
      %v4345 = vpop.f32.mrb[0].mxu0
      %4346 = vmatprep.mubr.bf16.mxu0 %v4057
      %4347 = vmatmul.mubr.bf16.gmra.mrb[0].mxu0 %v3930
      %v4348 = vpop.f32.mrb[0].mxu0
      %v4349 = vadd.f32 %v4135, %v4348
      %v4350 = vpop.f32.mrb[0].mxu0
      %v4351 = vpop.f32.mrb[0].mxu0
      %v4352 = vadd.f32 %v4135, %v4351
      %v4353 = vpop.f32.mrb[0].mxu0
      %4354 = vmatprep.mubr.bf16.mxu0 %v4060
      %4355 = vmatmul.mubr.bf16.gmra.mrb[0].mxu0 %v3933
      %v4356 = vpop.f32.mrb[0].mxu0
      %v4357 = vadd.f32 %v4135, %v4356
      %v4358 = vpop.f32.mrb[0].mxu0
      %v4359 = vpop.f32.mrb[0].mxu0
      %v4360 = vadd.f32 %v4135, %v4359
      %v4361 = vpop.f32.mrb[0].mxu0
      %4362 = vmatprep.mubr.bf16.mxu0 %v4063
      %4363 = vmatmul.mubr.bf16.gmra.mrb[0].mxu0 %v3936
      %v4364 = vpop.f32.mrb[0].mxu0
      %v4365 = vadd.f32 %v4135, %v4364
      %v4366 = vpop.f32.mrb[0].mxu0
      %v4367 = vpop.f32.mrb[0].mxu0
      %v4368 = vadd.f32 %v4135, %v4367
      %v4369 = vpop.f32.mrb[0].mxu0
      %4370 = vmatprep.mubr.bf16.mxu0 %v4066
      %4371 = vmatmul.mubr.bf16.gmra.mrb[0].mxu0 %v3939
      %v4372 = vpop.f32.mrb[0].mxu0
      %v4373 = vadd.f32 %v4135, %v4372
      %v4374 = vpop.f32.mrb[0].mxu0
      %v4375 = vpop.f32.mrb[0].mxu0
      %v4376 = vadd.f32 %v4135, %v4375
      %v4377 = vpop.f32.mrb[0].mxu0
      %4378 = vmatprep.mubr.bf16.mxu0 %v4069
      %4379 = vmatmul.mubr.bf16.gmra.mrb[0].mxu0 %v3942
      %v4380 = vpop.f32.mrb[0].mxu0
      %v4381 = vadd.f32 %v4135, %v4380
      %v4382 = vpop.f32.mrb[0].mxu0
      %v4383 = vpop.f32.mrb[0].mxu0
      %v4384 = vadd.f32 %v4135, %v4383
      %v4385 = vpop.f32.mrb[0].mxu0
      %4386 = vmatprep.mubr.bf16.mxu0 %v4072
      %4387 = vmatmul.mubr.bf16.gmra.mrb[0].mxu0 %v3945
      %v4388 = vpop.f32.mrb[0].mxu0
      %v4389 = vadd.f32 %v4135, %v4388
      %v4390 = vpop.f32.mrb[0].mxu0
      %v4391 = vpop.f32.mrb[0].mxu0
      %v4392 = vadd.f32 %v4135, %v4391
      %v4393 = vpop.f32.mrb[0].mxu0
      %4394 = vmatprep.mubr.bf16.mxu0 %v4075
      %4395 = vmatmul.mubr.bf16.gmra.mrb[0].mxu0 %v3948
      %v4396 = vpop.f32.mrb[0].mxu0
      %v4397 = vadd.f32 %v4135, %v4396
      %v4398 = vpop.f32.mrb[0].mxu0
      %v4399 = vpop.f32.mrb[0].mxu0
      %v4400 = vadd.f32 %v4135, %v4399
      %v4401 = vpop.f32.mrb[0].mxu0
      %4402 = vmatprep.mubr.bf16.mxu0 %v4078
      %4403 = vmatmul.mubr.bf16.gmra.mrb[0].mxu0 %v3951
      %v4404 = vpop.f32.mrb[0].mxu0
      %v4405 = vadd.f32 %v4135, %v4404
      %v4406 = vpop.f32.mrb[0].mxu0
      %v4407 = vpop.f32.mrb[0].mxu0
      %v4408 = vadd.f32 %v4135, %v4407
      %v4409 = vpop.f32.mrb[0].mxu0
      %4410 = vmatprep.mubr.bf16.mxu0 %v4081
      %4411 = vmatmul.mubr.bf16.gmra.mrb[0].mxu0 %v3954
      %v4412 = vpop.f32.mrb[0].mxu0
      %v4413 = vadd.f32 %v4135, %v4412
      %v4414 = vpop.f32.mrb[0].mxu0
      %v4415 = vpop.f32.mrb[0].mxu0
      %v4416 = vadd.f32 %v4135, %v4415
      %v4417 = vpop.f32.mrb[0].mxu0
      %4418 = vmatprep.mubr.bf16.mxu0 %v4084
      %4419 = vmatmul.mubr.bf16.gmra.mrb[0].mxu0 %v3957
      %v4420 = vpop.f32.mrb[0].mxu0
      %v4421 = vadd.f32 %v4135, %v4420
      %v4422 = vpop.f32.mrb[0].mxu0
      %v4423 = vpop.f32.mrb[0].mxu0
      %v4424 = vadd.f32 %v4135, %v4423
      %v4425 = vpop.f32.mrb[0].mxu0
      %4426 = vmatprep.mubr.bf16.mxu0 %v4087
      %4427 = vmatmul.mubr.bf16.gmra.mrb[0].mxu0 %v3960
      %v4428 = vpop.f32.mrb[0].mxu0
      %v4429 = vadd.f32 %v4135, %v4428
      %v4430 = vpop.f32.mrb[0].mxu0
      %v4431 = vpop.f32.mrb[0].mxu0
      %v4432 = vadd.f32 %v4135, %v4431
      %v4433 = vpop.f32.mrb[0].mxu0
      %4434 = vmatprep.mubr.bf16.mxu0 %v4090
      %4435 = vmatmul.mubr.bf16.gmra.mrb[0].mxu0 %v3963
      %v4436 = vpop.f32.mrb[0].mxu0
      %v4437 = vadd.f32 %v4135, %v4436
      %v4438 = vpop.f32.mrb[0].mxu0
      %v4439 = vpop.f32.mrb[0].mxu0
      %v4440 = vadd.f32 %v4135, %v4439
      %v4441 = vpop.f32.mrb[0].mxu0
      %4442 = vmatprep.mubr.bf16.mxu0 %v4092
      %4443 = vmatmul.mubr.bf16.gmra.mrb[0].mxu0 %v3966
      %v4444 = vpop.f32.mrb[0].mxu0
      %v4445 = vadd.f32 %v4135, %v4444
      %v4446 = vpop.f32.mrb[0].mxu0
      %v4447 = vpop.f32.mrb[0].mxu0
      %v4448 = vadd.f32 %v4135, %v4447
      %v4449 = vpop.f32.mrb[0].mxu0
      %4450 = vdwg.mxu0
      %4451 = vmatprep.subr.bf16.mxu0 0
      %4452 = vmatpush1.bf16.msra.mxu0 %v4225
      %4453 = vmatprep.subr.bf16.mxu0 0
      %4454 = vmatpush1.bf16.msra.mxu0 %v4226
      %4455 = vmatprep.subr.bf16.mxu0 0
      %4456 = vmatpush1.bf16.msra.mxu0 0
      %4457 = vmatprep.subr.bf16.mxu0 0
      %4458 = vmatpush1.bf16.msra.mxu0 0
      %4459 = vmatprep.subr.bf16.mxu0 0
      %4460 = vmatpush1.bf16.msra.mxu0 0
      %4461 = vmatprep.subr.bf16.mxu0 0
      %4462 = vmatpush1.bf16.msra.mxu0 0
      %4463 = vmatprep.subr.bf16.mxu0 0
      %4464 = vmatpush1.bf16.msra.mxu0 0
      %4465 = vmatprep.subr.bf16.mxu0 0
      %4466 = vmatpush1.bf16.msra.mxu0 0
      %4467 = vmatprep.subr.bf16.mxu0 0
      %4468 = vmatpush1.bf16.msra.mxu0 0
      %4469 = vmatprep.subr.bf16.mxu0 0
      %4470 = vmatpush1.bf16.msra.mxu0 0
      %4471 = vmatprep.subr.bf16.mxu0 0
      %4472 = vmatpush1.bf16.msra.mxu0 0
      %4473 = vmatprep.subr.bf16.mxu0 0
      %4474 = vmatpush1.bf16.msra.mxu0 0
      %4475 = vmatprep.subr.bf16.mxu0 0
      %4476 = vmatpush1.bf16.msra.mxu0 0
      %4477 = vmatprep.subr.bf16.mxu0 0
      %4478 = vmatpush1.bf16.msra.mxu0 0
      %4479 = vmatprep.subr.bf16.mxu0 0
      %4480 = vmatpush1.bf16.msra.mxu0 0
      %4481 = vmatprep.subr.bf16.mxu0 0
      %4482 = vmatpush1.bf16.msra.mxu0 0
      %4483 = vmatprep.mubr.bf16.mxu0 0
      %4484 = vmatmul.mubr.bf16.gmra.mrb[0].mxu0 %v4246
      %v4485 = vpop.f32.mrb[0].mxu0
      %v4486 = vadd.f32 %v4325, %v4485
      %v4487 = vpop.f32.mrb[0].mxu0
      %v4488 = vpop.f32.mrb[0].mxu0
      %v4489 = vadd.f32 %v4328, %v4488
      %v4490 = vpop.f32.mrb[0].mxu0
      %4491 = vmatprep.mubr.bf16.mxu0 0
      %4492 = vmatmul.mubr.bf16.gmra.mrb[0].mxu0 %v4249
      %v4493 = vpop.f32.mrb[0].mxu0
      %v4494 = vadd.f32 %v4333, %v4493
      %v4495 = vpop.f32.mrb[0].mxu0
      %v4496 = vpop.f32.mrb[0].mxu0
      %v4497 = vadd.f32 %v4336, %v4496
      %v4498 = vpop.f32.mrb[0].mxu0
      %4499 = vmatprep.mubr.bf16.mxu0 0
      %4500 = vmatmul.mubr.bf16.gmra.mrb[0].mxu0 %v4252
      %v4501 = vpop.f32.mrb[0].mxu0
      %v4502 = vadd.f32 %v4341, %v4501
      %v4503 = vpop.f32.mrb[0].mxu0
      %v4504 = vpop.f32.mrb[0].mxu0
      %v4505 = vadd.f32 %v4344, %v4504
      %v4506 = vpop.f32.mrb[0].mxu0
      %4507 = vmatprep.mubr.bf16.mxu0 0
      %4508 = vmatmul.mubr.bf16.gmra.mrb[0].mxu0 %v4255
      %v4509 = vpop.f32.mrb[0].mxu0
      %v4510 = vadd.f32 %v4349, %v4509
      %v4511 = vpop.f32.mrb[0].mxu0
      %v4512 = vpop.f32.mrb[0].mxu0
      %v4513 = vadd.f32 %v4352, %v4512
      %v4514 = vpop.f32.mrb[0].mxu0
      %4515 = vmatprep.mubr.bf16.mxu0 0
      %4516 = vmatmul.mubr.bf16.gmra.mrb[0].mxu0 %v4258
      %v4517 = vpop.f32.mrb[0].mxu0
      %v4518 = vadd.f32 %v4357, %v4517
      %v4519 = vpop.f32.mrb[0].mxu0
      %v4520 = vpop.f32.mrb[0].mxu0
      %v4521 = vadd.f32 %v4360, %v4520
      %v4522 = vpop.f32.mrb[0].mxu0
      %4523 = vmatprep.mubr.bf16.mxu0 0
      %4524 = vmatmul.mubr.bf16.gmra.mrb[0].mxu0 %v4261
      %v4525 = vpop.f32.mrb[0].mxu0
      %v4526 = vadd.f32 %v4365, %v4525
      %v4527 = vpop.f32.mrb[0].mxu0
      %v4528 = vpop.f32.mrb[0].mxu0
      %v4529 = vadd.f32 %v4368, %v4528
      %v4530 = vpop.f32.mrb[0].mxu0
      %4531 = vmatprep.mubr.bf16.mxu0 0
      %4532 = vmatmul.mubr.bf16.gmra.mrb[0].mxu0 %v4264
      %v4533 = vpop.f32.mrb[0].mxu0
      %v4534 = vadd.f32 %v4373, %v4533
      %v4535 = vpop.f32.mrb[0].mxu0
      %v4536 = vpop.f32.mrb[0].mxu0
      %v4537 = vadd.f32 %v4376, %v4536
      %v4538 = vpop.f32.mrb[0].mxu0
      %4539 = vmatprep.mubr.bf16.mxu0 0
      %4540 = vmatmul.mubr.bf16.gmra.mrb[0].mxu0 %v4267
      %v4541 = vpop.f32.mrb[0].mxu0
      %v4542 = vadd.f32 %v4381, %v4541
      %v4543 = vpop.f32.mrb[0].mxu0
      %v4544 = vpop.f32.mrb[0].mxu0
      %v4545 = vadd.f32 %v4384, %v4544
      %v4546 = vpop.f32.mrb[0].mxu0
      %4547 = vmatprep.mubr.bf16.mxu0 0
      %4548 = vmatmul.mubr.bf16.gmra.mrb[0].mxu0 %v4270
      %v4549 = vpop.f32.mrb[0].mxu0
      %v4550 = vadd.f32 %v4389, %v4549
      %v4551 = vpop.f32.mrb[0].mxu0
      %v4552 = vpop.f32.mrb[0].mxu0
      %v4553 = vadd.f32 %v4392, %v4552
      %v4554 = vpop.f32.mrb[0].mxu0
      %4555 = vmatprep.mubr.bf16.mxu0 0
      %4556 = vmatmul.mubr.bf16.gmra.mrb[0].mxu0 %v4273
      %v4557 = vpop.f32.mrb[0].mxu0
      %v4558 = vadd.f32 %v4397, %v4557
      %v4559 = vpop.f32.mrb[0].mxu0
      %v4560 = vpop.f32.mrb[0].mxu0
      %v4561 = vadd.f32 %v4400, %v4560
      %v4562 = vpop.f32.mrb[0].mxu0
      %4563 = vmatprep.mubr.bf16.mxu0 0
      %4564 = vmatmul.mubr.bf16.gmra.mrb[0].mxu0 %v4276
      %v4565 = vpop.f32.mrb[0].mxu0
      %v4566 = vadd.f32 %v4405, %v4565
      %v4567 = vpop.f32.mrb[0].mxu0
      %v4568 = vpop.f32.mrb[0].mxu0
      %v4569 = vadd.f32 %v4408, %v4568
      %v4570 = vpop.f32.mrb[0].mxu0
      %4571 = vmatprep.mubr.bf16.mxu0 0
      %4572 = vmatmul.mubr.bf16.gmra.mrb[0].mxu0 %v4279
      %v4573 = vpop.f32.mrb[0].mxu0
      %v4574 = vadd.f32 %v4413, %v4573
      %v4575 = vpop.f32.mrb[0].mxu0
      %v4576 = vpop.f32.mrb[0].mxu0
      %v4577 = vadd.f32 %v4416, %v4576
      %v4578 = vpop.f32.mrb[0].mxu0
      %4579 = vmatprep.mubr.bf16.mxu0 0
      %4580 = vmatmul.mubr.bf16.gmra.mrb[0].mxu0 %v4282
      %v4581 = vpop.f32.mrb[0].mxu0
      %v4582 = vadd.f32 %v4421, %v4581
      %v4583 = vpop.f32.mrb[0].mxu0
      %v4584 = vpop.f32.mrb[0].mxu0
      %v4585 = vadd.f32 %v4424, %v4584
      %v4586 = vpop.f32.mrb[0].mxu0
      %4587 = vmatprep.mubr.bf16.mxu0 0
      %4588 = vmatmul.mubr.bf16.gmra.mrb[0].mxu0 %v4285
      %v4589 = vpop.f32.mrb[0].mxu0
      %v4590 = vadd.f32 %v4429, %v4589
      %v4591 = vpop.f32.mrb[0].mxu0
      %v4592 = vpop.f32.mrb[0].mxu0
      %v4593 = vadd.f32 %v4432, %v4592
      %v4594 = vpop.f32.mrb[0].mxu0
      %4595 = vmatprep.mubr.bf16.mxu0 0
      %4596 = vmatmul.mubr.bf16.gmra.mrb[0].mxu0 %v4288
      %v4597 = vpop.f32.mrb[0].mxu0
      %v4598 = vadd.f32 %v4437, %v4597
      %v4599 = vpop.f32.mrb[0].mxu0
      %v4600 = vpop.f32.mrb[0].mxu0
      %v4601 = vadd.f32 %v4440, %v4600
      %v4602 = vpop.f32.mrb[0].mxu0
      %4603 = vmatprep.mubr.bf16.mxu0 0
      %4604 = vmatmul.mubr.bf16.gmra.mrb[0].mxu0 %v2792
      %v4605 = vpop.f32.mrb[0].mxu0
      %v4606 = vadd.f32 %v4445, %v4605
      %v4607 = vpop.f32.mrb[0].mxu0
      %v4608 = vpop.f32.mrb[0].mxu0
      %v4609 = vadd.f32 %v4448, %v4608
      %v4610 = vpop.f32.mrb[0].mxu0
      %4611 = vdwg.mxu0
      %4612 = vxpose.xlu0.b32.start [1/16] %v4486, 128
      %4613 = vxpose.xlu0.b32.cont [2/16] %v4489, 128
      %4614 = vxpose.xlu0.b32.cont [3/16] %v4494, 128
      %4615 = vxpose.xlu0.b32.cont [4/16] %v4497, 128
      %4616 = vxpose.xlu0.b32.cont [5/16] %v4502, 128
      %4617 = vxpose.xlu0.b32.cont [6/16] %v4505, 128
      %4618 = vxpose.xlu0.b32.cont [7/16] %v4510, 128
      %4619 = vxpose.xlu0.b32.cont [8/16] %v4513, 128
      %4620 = vxpose.xlu0.b32.cont [9/16] %v4518, 128
      %4621 = vxpose.xlu0.b32.cont [10/16] %v4521, 128
      %4622 = vxpose.xlu0.b32.cont [11/16] %v4526, 128
      %4623 = vxpose.xlu0.b32.cont [12/16] %v4529, 128
      %4624 = vxpose.xlu0.b32.cont [13/16] %v4534, 128
      %4625 = vxpose.xlu0.b32.cont [14/16] %v4537, 128
      %4626 = vxpose.xlu0.b32.cont [15/16] %v4542, 128
      %4627 = vxpose.xlu0.b32.end [16/16] %v4545, 128
      %v4628 = vpop.trf.xlu0
      %v4629 = vpop.trf.xlu0
      %v4630 = vpop.trf.xlu0
      %v4631 = vpop.trf.xlu0
      %v4632 = vpop.trf.xlu0
      %v4633 = vpop.trf.xlu0
      %v4634 = vpop.trf.xlu0
      %v4635 = vpop.trf.xlu0
      %v4636 = vpop.trf.xlu0
      %v4637 = vpop.trf.xlu0
      %v4638 = vpop.trf.xlu0
      %v4639 = vpop.trf.xlu0
      %v4640 = vpop.trf.xlu0
      %v4641 = vpop.trf.xlu0
      %v4642 = vpop.trf.xlu0
      %v4643 = vpop.trf.xlu0
      %4644 = vxpose.xlu0.b32.start [1/16] %v4550, 128
      %4645 = vxpose.xlu0.b32.cont [2/16] %v4553, 128
      %4646 = vxpose.xlu0.b32.cont [3/16] %v4558, 128
      %4647 = vxpose.xlu0.b32.cont [4/16] %v4561, 128
      %4648 = vxpose.xlu0.b32.cont [5/16] %v4566, 128
      %4649 = vxpose.xlu0.b32.cont [6/16] %v4569, 128
      %4650 = vxpose.xlu0.b32.cont [7/16] %v4574, 128
      %4651 = vxpose.xlu0.b32.cont [8/16] %v4577, 128
      %4652 = vxpose.xlu0.b32.cont [9/16] %v4582, 128
      %4653 = vxpose.xlu0.b32.cont [10/16] %v4585, 128
      %4654 = vxpose.xlu0.b32.cont [11/16] %v4590, 128
      %4655 = vxpose.xlu0.b32.cont [12/16] %v4593, 128
      %4656 = vxpose.xlu0.b32.cont [13/16] %v4598, 128
      %4657 = vxpose.xlu0.b32.cont [14/16] %v4601, 128
      %4658 = vxpose.xlu0.b32.cont [15/16] %v4606, 128
      %4659 = vxpose.xlu0.b32.end [16/16] %v4609, 128
      %v4660 = vpop.trf.xlu0
      %v4661 = vpop.trf.xlu0
      %v4662 = vpop.trf.xlu0
      %v4663 = vpop.trf.xlu0
      %v4664 = vpop.trf.xlu0
      %v4665 = vpop.trf.xlu0
      %v4666 = vpop.trf.xlu0
      %v4667 = vpop.trf.xlu0
      %v4668 = vpop.trf.xlu0
      %v4669 = vpop.trf.xlu0
      %v4670 = vpop.trf.xlu0
      %v4671 = vpop.trf.xlu0
      %v4672 = vpop.trf.xlu0
      %v4673 = vpop.trf.xlu0
      %v4674 = vpop.trf.xlu0
      %v4675 = vpop.trf.xlu0
      %v4676 = vmax.f32 %v4628, -1.0
      %v4677 = vmax.f32 %v4660, -1.0
      %v4678 = vmin.f32 %v4676, 1.0
      %v4679 = vmin.f32 %v4677, 1.0
      %v4682 = vcombine.low %v4678, %v4679
      %4684 = vst [vmem:[%s278] sm:$0xff] %v4682
      %p4685 = scmp.lt.s32.totalorder %s18, 1
      %s4686 = scalar_select %p4685, %s18, 1
      %s4687 = smul.addr %s4686, 2
      %s4688 = smul.addr %s4687, 4
      %s4689 = scalar_lea.vmem %s7, %s4688
      // Predicated region
      $region49: #{_filter_forward.1} parent=47 // pred_check
        %p4690 = pneg %p188
      $region50: #{_filter_forward.1} parent=47 // pred_check_branch
        %4692 = sbr.rel (%p4690) target = $region52
      $region51: #{_filter_forward.1} parent=47 // pred_region
        _
      $region52: #{_filter_forward.1} parent=47 // pred_fallthru
        _
    $region48: #{_filter_forward.1} parent=5 // pred_fallthru
      _
    %p4693 = scmp.le.s32.totalorder 2, %s13
    // Predicated region
    $region53: #{_filter_forward.1} parent=5 // pred_check
      %p4694 = pneg %p4693
    $region54: #{_filter_forward.1} parent=5 // pred_check_branch
      %4696 = sbr.rel (%p4694) target = $region56
    $region55: #{_filter_forward.1} parent=5 // pred_region
      %s4697 = ssub.s32 %s13, 2
      // Predicated region
      $region57: #{_filter_forward.1} parent=55 // pred_check
        %p4698 = pneg %p194
      $region58: #{_filter_forward.1} parent=55 // pred_check_branch
        %4700 = sbr.rel (%p4698) target = $region60
      $region59: #{_filter_forward.1} parent=55 // pred_region
        %p4701 = scmp.lt.s32.totalorder %s19, 1
        %s4702 = scalar_select %p4701, %s19, 1
        %s4703 = smul.addr %s4702, 2
        %s4704 = smul.addr %s4703, 4
        %s4705 = scalar_lea.vmem %s7, %s4704
      $region60: #{_filter_forward.1} parent=55 // pred_fallthru
        _
    $region56: #{_filter_forward.1} parent=5 // pred_fallthru
      _
  $region6: #{_filter_forward.1} parent=0 // loop_footer
    %s17 = sadd.s32 1, %s13
  $region7: #{_filter_forward.1} parent=0 // loop_footer_branch
    %12 = sbr.rel target = $region3
  $region8: #{_filter_forward.1} parent=0 // loop_exit
    _

</llo_original>
